<compile_context>
chip_gen: v7x
topology: tpu7x:2x2x1
jax: 0.10.0
libtpu: 0.0.40
codegen_flags: <defaults>
</compile_context>

<pallas_src>
import functools

import jax
import jax.numpy as jnp
from jax.experimental import pallas as pl
from jax.experimental.pallas import tpu as pltpu

LRELU_SLOPE = 0.2
BN_EPS = 1e-5

_COMPILER_PARAMS = pltpu.CompilerParams(
    dimension_semantics=("parallel",),        # shard the batch across TCs
    vmem_limit_bytes=32 * 1024 * 1024,        # explicit, safe on v5e/v6e/v7x
)


# ----------------------------- kernel helpers -------------------------------

def _leaky_relu(y):
    return jnp.where(y >= 0, y, LRELU_SLOPE * y)


def _conv_rows_s2(xf_ref, w4_ref, *, oh_n, ow_n):
    """Stride-2 3x3 conv of one space-to-depth(2)-folded image.

    xf_ref : (1, Hr, Wc, 4*cin) bf16 ref; channel wi*2cin + hi*cin + c at
             (hr, wc) holds padded pixel (2*hr+hi, 2*wc+wi, c).
    w4_ref : (4, 4*cin, cout) bf16 ref; one K-concatenated weight matrix per
             2x2 source-block shift (dh, dw) in order (0,0),(0,1),(1,0),(1,1),
             with zero rows for taps that belong to a different block.
    Returns oh_n f32 arrays of shape (ow_n, cout): one MXU dot per (row, shift).
    """
    rows = []
    for oh in range(oh_n):
        acc = None
        k = 0
        for dh in (0, 1):
            for dw in (0, 1):
                a = xf_ref[0, oh + dh, dw:dw + ow_n, :].astype(jnp.bfloat16)
                d = jnp.dot(a, w4_ref[k], preferred_element_type=jnp.float32)
                acc = d if acc is None else acc + d
                k += 1
        rows.append(acc)
    return rows


def _store_padded_rows(pad_ref, rows_f32, *, ow_n, cout):
    """Scatter post-activation rows into the zero-padded, row-pair-folded f32
    scratch: output row oh -> padded row oh+1 -> (hr=(oh+1)//2, hi=(oh+1)%2),
    columns 1..ow_n, channel half hi*cout:(hi+1)*cout.  Borders stay zero."""
    for oh, a in enumerate(rows_f32):
        ph = oh + 1
        hr, hi = ph // 2, ph % 2
        pad_ref[0, hr, 1:1 + ow_n, hi * cout:(hi + 1) * cout] = a


# ------------------------------- kernels -------------------------------------

def _initial_kernel(xf_ref, w4_ref, o_ref, pad_ref, *, oh_n, ow_n, cout):
    # initial conv (3,2,1) + LeakyReLU(0.2); one image per (parallel) grid step.
    pad_ref[...] = jnp.zeros_like(pad_ref)
    rows = _conv_rows_s2(xf_ref, w4_ref, oh_n=oh_n, ow_n=ow_n)
    _store_padded_rows(pad_ref, [_leaky_relu(y) for y in rows],
                       ow_n=ow_n, cout=cout)
    o_ref[...] = pad_ref[...].astype(o_ref.dtype)   # one aligned bf16 store


def _pyramid_conv_stats_kernel(xf_ref, w4_ref, y_ref, st_ref, *, oh_n, ow_n):
    # conv (3,2,1); writes the pre-BN activation y (f32) once plus per-image
    # per-channel sum / sum-of-squares (VPU reductions, no M=1 stats matmuls).
    rows = _conv_rows_s2(xf_ref, w4_ref, oh_n=oh_n, ow_n=ow_n)
    tot = None
    tot_sq = None
    for oh, y in enumerate(rows):
        y_ref[0, oh, :, :] = y
        tot = y if tot is None else tot + y
        tot_sq = y * y if tot_sq is None else tot_sq + y * y
    st_ref[0, 0:1, :] = jnp.sum(tot, axis=0, keepdims=True)
    st_ref[0, 1:2, :] = jnp.sum(tot_sq, axis=0, keepdims=True)


def _bn_lrelu_pad_kernel(y_ref, sc_ref, sh_ref, o_ref, pad_ref, *,
                         oh_n, ow_n, cout):
    # BatchNorm affine (precomputed scale/shift) + LeakyReLU; emits the next
    # layer's zero-padded, row-pair-folded bf16 input (free reshape outside).
    pad_ref[...] = jnp.zeros_like(pad_ref)
    scale = sc_ref[...]
    shift = sh_ref[...]
    rows = [_leaky_relu(y_ref[0, oh, :, :] * scale + shift)
            for oh in range(oh_n)]
    _store_padded_rows(pad_ref, rows, ow_n=ow_n, cout=cout)
    o_ref[...] = pad_ref[...].astype(o_ref.dtype)


def _bn_lrelu_final_kernel(y_ref, sc_ref, sh_ref, wf_ref, o_ref):
    # BatchNorm affine + LeakyReLU fused with the final Conv2d(cndf,1,3,2,0).
    # The last pyramid map is always 4x4, so the final conv is one 3x3 window
    # -> one scalar per image, computed as a VPU multiply + reduce (no MXU).
    scale = sc_ref[...]
    shift = sh_ref[...]
    acc = jnp.zeros((1, y_ref.shape[-1]), jnp.float32)
    for i in range(3):
        a = _leaky_relu(y_ref[0, i, 0:3, :] * scale + shift)   # (3, cout) f32
        acc = acc + jnp.sum(a * wf_ref[i], axis=0, keepdims=True)
    o_ref[0, 0, :, :] = jnp.sum(acc, axis=1, keepdims=True)


# ----------------------------- JAX-side glue ---------------------------------

def _full_spec(shape):
    nd = len(shape)
    return pl.BlockSpec(shape, lambda *_: (0,) * nd)


def _fold_input(x_nhwc):
    """Zero-pad spatially by 1 and space-to-depth(2)-fold into the canonical
    conv-input layout (B, H/2+1, W/2+1, 4C), channel order (wi, hi, c).
    Boundary prep on the (small) network input only."""
    B, H, W, C = x_nhwc.shape
    xp = jnp.pad(x_nhwc, ((0, 0), (1, 1), (1, 1), (0, 0)))
    Hr, Wc = (H + 2) // 2, (W + 2) // 2
    x6 = xp.reshape(B, Hr, 2, Wc, 2, C)                 # (b, hr, hi, wc, wi, c)
    x6 = jnp.transpose(x6, (0, 1, 3, 4, 2, 5))           # (b, hr, wc, wi, hi, c)
    return x6.reshape(B, Hr, Wc, 4 * C)


def _fold_cols(o_padded):
    """Kernel activations are already zero-padded with padded-row pairs folded
    into channels ((hi, c) order); folding the padded-column pairs too is a
    FREE row-major reshape giving the canonical (wi, hi, c) conv-input layout."""
    B, Hr, Wp, C2 = o_padded.shape
    return o_padded.reshape(B, Hr, Wp // 2, 2 * C2)


def _prep_conv_weights(w):
    """PyTorch (Cout, Cin, 3, 3) -> (4, 4*Cin, Cout) bf16: one K-concatenated
    matrix per 2x2 source-block shift (dh, dw); rows ordered (wi, hi, cin) to
    match the folded input, zeroed where the tap belongs to another block."""
    cout, cin = w.shape[0], w.shape[1]
    wt = jnp.transpose(w, (2, 3, 1, 0))                  # (i, j, cin, cout)
    blocks = []
    for dh in (0, 1):
        for dw in (0, 1):
            wm = jnp.zeros((2, 2, cin, cout), w.dtype)   # (wi, hi, cin, cout)
            for wi in (0, 1):
                for hi in (0, 1):
                    i, j = 2 * dh + hi, 2 * dw + wi
                    if i <= 2 and j <= 2:
                        wm = wm.at[wi, hi].set(wt[i, j])
            blocks.append(wm.reshape(4 * cin, cout))
    return jnp.stack(blocks, axis=0).astype(jnp.bfloat16)


def initial_conv_lrelu(xf, w):
    """Canonical folded input (B, Hr, Wc, 4*cin) bf16 ->
    zero-padded, row-pair-folded activation (B, OH/2+1, OW+2, 2*cout) bf16."""
    B, Hr, Wc, c4 = xf.shape
    cout = w.shape[0]
    OH, OW = Hr - 1, Wc - 1
    OHr, OWp = (OH + 2) // 2, OW + 2
    w4 = _prep_conv_weights(w)
    kernel = functools.partial(_initial_kernel, oh_n=OH, ow_n=OW, cout=cout)
    return pl.pallas_call(
        kernel,
        out_shape=jax.ShapeDtypeStruct((B, OHr, OWp, 2 * cout), jnp.bfloat16),
        grid=(B,),
        in_specs=[pl.BlockSpec((1, Hr, Wc, c4), lambda b: (b, 0, 0, 0)),
                  _full_spec(w4.shape)],
        out_specs=pl.BlockSpec((1, OHr, OWp, 2 * cout), lambda b: (b, 0, 0, 0)),
        scratch_shapes=[pltpu.VMEM((1, OHr, OWp, 2 * cout), jnp.float32)],
        compiler_params=_COMPILER_PARAMS,
    )(xf, w4)


def pyramid_conv_stats(xf, w):
    """Conv(3,2,1) on folded input; returns (pre-BN y f32 (B,OH,OW,cout),
    per-image stats (B,2,cout) = [channel sum, channel sum of squares])."""
    B, Hr, Wc, c4 = xf.shape
    cout = w.shape[0]
    OH, OW = Hr - 1, Wc - 1
    w4 = _prep_conv_weights(w)
    kernel = functools.partial(_pyramid_conv_stats_kernel, oh_n=OH, ow_n=OW)
    return pl.pallas_call(
        kernel,
        out_shape=(jax.ShapeDtypeStruct((B, OH, OW, cout), jnp.float32),
                   jax.ShapeDtypeStruct((B, 2, cout), jnp.float32)),
        grid=(B,),
        in_specs=[pl.BlockSpec((1, Hr, Wc, c4), lambda b: (b, 0, 0, 0)),
                  _full_spec(w4.shape)],
        out_specs=(pl.BlockSpec((1, OH, OW, cout), lambda b: (b, 0, 0, 0)),
                   pl.BlockSpec((1, 2, cout), lambda b: (b, 0, 0))),
        compiler_params=_COMPILER_PARAMS,
    )(xf, w4)


def _bn_scale_shift(stats, gamma, beta, count):
    """Combine per-image partials into BatchNorm training-mode
    scale = gamma*rsqrt(var+eps), shift = beta - mean*scale (tiny XLA ops)."""
    s = jnp.sum(stats[:, 0, :], axis=0)
    q = jnp.sum(stats[:, 1, :], axis=0)
    inv_n = 1.0 / float(count)
    mean = s * inv_n
    var = jnp.maximum(q * inv_n - mean * mean, 0.0)      # biased training var
    scale = gamma.reshape(-1) * jax.lax.rsqrt(var + BN_EPS)
    shift = beta.reshape(-1) - mean * scale
    return scale.reshape(1, -1), shift.reshape(1, -1)


def bn_lrelu_pad(y, scale, shift):
    """Elementwise BN affine + LeakyReLU epilogue; emits the next layer's
    zero-padded, row-pair-folded bf16 input."""
    B, OH, OW, cout = y.shape
    OHr, OWp = (OH + 2) // 2, OW + 2
    kernel = functools.partial(_bn_lrelu_pad_kernel, oh_n=OH, ow_n=OW,
                               cout=cout)
    return pl.pallas_call(
        kernel,
        out_shape=jax.ShapeDtypeStruct((B, OHr, OWp, 2 * cout), jnp.bfloat16),
        grid=(B,),
        in_specs=[pl.BlockSpec((1, OH, OW, cout), lambda b: (b, 0, 0, 0)),
                  _full_spec(scale.shape), _full_spec(shift.shape)],
        out_specs=pl.BlockSpec((1, OHr, OWp, 2 * cout), lambda b: (b, 0, 0, 0)),
        scratch_shapes=[pltpu.VMEM((1, OHr, OWp, 2 * cout), jnp.float32)],
        compiler_params=_COMPILER_PARAMS,
    )(y, scale, shift)


def bn_lrelu_final_conv(y, scale, shift, w_final):
    """Last epilogue: BN affine + LeakyReLU fused with Conv2d(cndf,1,3,2,0);
    returns (B, 1, 1, 1) f32."""
    B, OH, OW, cout = y.shape
    wf = jnp.transpose(w_final, (2, 3, 1, 0)).reshape(3, 3, cout)
    wf = wf.astype(jnp.float32)
    return pl.pallas_call(
        _bn_lrelu_final_kernel,
        out_shape=jax.ShapeDtypeStruct((B, 1, 1, 1), jnp.float32),
        grid=(B,),
        in_specs=[pl.BlockSpec((1, OH, OW, cout), lambda b: (b, 0, 0, 0)),
                  _full_spec(scale.shape), _full_spec(shift.shape),
                  _full_spec(wf.shape)],
        out_specs=pl.BlockSpec((1, 1, 1, 1), lambda b: (b, 0, 0, 0)),
        compiler_params=_COMPILER_PARAMS,
    )(y, scale, shift, wf)


# ------------------------------ DCGAN_D model --------------------------------

def init_dcgan_d_params(key, isize, nc, ndf):
    assert isize % 16 == 0, "isize has to be a multiple of 16"
    params = {}
    key, sub = jax.random.split(key)
    params["w_initial"] = 0.02 * jax.random.normal(sub, (ndf, nc, 3, 3),
                                                   jnp.float32)
    csize, cndf = isize // 2, ndf
    pyramid = []
    while csize > 4:
        in_feat, out_feat = cndf, cndf * 2
        key, sub = jax.random.split(key)
        w = 0.02 * jax.random.normal(sub, (out_feat, in_feat, 3, 3),
                                     jnp.float32)
        gamma = jnp.ones((1, out_feat), jnp.float32)    # BatchNorm2d defaults
        beta = jnp.zeros((1, out_feat), jnp.float32)
        pyramid.append((w, gamma, beta))
        cndf *= 2
        csize //= 2
    params["pyramid"] = pyramid
    key, sub = jax.random.split(key)
    params["w_final"] = 0.02 * jax.random.normal(sub, (1, cndf, 3, 3),
                                                 jnp.float32)
    return params


def dcgan_d_forward(params, x):
    """x: (B, nc, isize, isize) NCHW (PyTorch contract) -> flat (B,) output."""
    B = x.shape[0]
    h = jnp.transpose(x, (0, 2, 3, 1)).astype(jnp.bfloat16)   # NHWC, once
    hf = _fold_input(h)                                       # boundary prep
    hp = initial_conv_lrelu(hf, params["w_initial"])
    pyramid = params["pyramid"]
    out = None
    for li, (w, gamma, beta) in enumerate(pyramid):
        xf = _fold_cols(hp)                    # free row-major reshape
        y, stats = pyramid_conv_stats(xf, w)
        _, OH, OW, _ = y.shape
        scale, shift = _bn_scale_shift(stats, gamma, beta, B * OH * OW)
        if li == len(pyramid) - 1:
            out = bn_lrelu_final_conv(y, scale, shift, params["w_final"])
        else:
            hp = bn_lrelu_pad(y, scale, shift)
    return out.reshape(-1)        # matches PyTorch output.view(-1)


# --------------------------- pure-JAX reference -------------------------------

def _ref_forward(params, x):
    # Same precision choices (bf16 MXU inputs, f32 accumulation/epilogue).
    def conv(h, w, stride, pad):
        return jax.lax.conv_general_dilated(
            h.astype(jnp.bfloat16),
            jnp.transpose(w, (2, 3, 1, 0)).astype(jnp.bfloat16),
            (stride, stride), [(pad, pad), (pad, pad)],
            dimension_numbers=("NHWC", "HWIO", "NHWC"),
            preferred_element_type=jnp.float32)

    h = jnp.transpose(x, (0, 2, 3, 1))
    y = conv(h, params["w_initial"], 2, 1)
    y = jnp.where(y >= 0, y, LRELU_SLOPE * y)
    for w, gamma, beta in params["pyramid"]:
        y = conv(y, w, 2, 1)
        mean = jnp.mean(y, axis=(0, 1, 2), keepdims=True)
        var = jnp.mean(jnp.square(y - mean), axis=(0, 1, 2), keepdims=True)
        y = (y - mean) * jax.lax.rsqrt(var + BN_EPS)
        y = y * gamma.reshape(1, 1, 1, -1) + beta.reshape(1, 1, 1, -1)
        y = jnp.where(y >= 0, y, LRELU_SLOPE * y)
    y = conv(y, params["w_final"], 2, 0)
    return y.reshape(-1)


# ---------------------------------- main --------------------------------------

if __name__ == "__main__":
    # Small config: isize=16 (multiple of 16), nc=4, ndf=8, batch=2.
    isize, nc, ndf, batch = 16, 4, 8, 2
    key = jax.random.PRNGKey(0)
    kp, kx = jax.random.split(key)

    params = init_dcgan_d_params(kp, isize, nc, ndf)
    x = jax.random.normal(kx, (batch, nc, isize, isize), jnp.float32)

    fwd = jax.jit(functools.partial(dcgan_d_forward, params))
    out = fwd(x)
    jax.block_until_ready(out)
    assert out.shape == (batch,), out.shape

    ref = jax.jit(functools.partial(_ref_forward, params))(x)
    assert bool(jnp.all(jnp.isfinite(out)))
    assert bool(jnp.allclose(out, ref, atol=2e-2, rtol=2e-2)), (out, ref)
    print("KERNEL_OK")
</pallas_src>

<mosaic_0001>
module attributes {stable_mosaic.version = 11 : i64} {
  func.func @_initial_kernel(%arg0: i32, %arg1: memref<1x9x9x16xbf16, #tpu.memory_space<vmem>>, %arg2: memref<4x16x8xbf16, #tpu.memory_space<vmem>>, %arg3: memref<1x5x10x16xbf16, #tpu.memory_space<vmem>>, %arg4: memref<1x5x10x16xf32, #tpu.memory_space<vmem>>) attributes {dimension_semantics = [#tpu.dimension_semantics<parallel>], iteration_bounds = array<i64: 2>, scalar_prefetch = 0 : i64, scratch_operands = 1 : i64, tpu.core_type = #tpu.core_type<tc>, window_params = [{transform_indices = @transform_0, window_bounds = array<i64: 1, 9, 9, 16>}, {pipeline_mode = #tpu.pipeline_mode<synchronous>, transform_indices = @transform_1, window_bounds = array<i64: 4, 16, 8>}, {transform_indices = @transform_2, window_bounds = array<i64: 1, 5, 10, 16>}]} {
    %cst = arith.constant 0.000000e+00 : f32
    %0 = vector.broadcast %cst : f32 to vector<1x5x10x16xf32>
    %c0 = arith.constant 0 : index
    %c0_0 = arith.constant 0 : index
    %c0_1 = arith.constant 0 : index
    %c0_2 = arith.constant 0 : index
    %1 = vector.load %arg4[%c0, %c0_0, %c0_1, %c0_2] : memref<1x5x10x16xf32, #tpu.memory_space<vmem>>, vector<1x5x10x16xf32>
    tpu.vector_store %arg4[%c0, %c0_0, %c0_1, %c0_2], %0 {strides = array<i32>} : memref<1x5x10x16xf32, #tpu.memory_space<vmem>>, vector<1x5x10x16xf32>,
    %c0_3 = arith.constant 0 : index
    %c0_4 = arith.constant 0 : index
    %c0_5 = arith.constant 0 : index
    %c0_6 = arith.constant 0 : index
    %2 = vector.load %arg1[%c0_3, %c0_4, %c0_5, %c0_6] : memref<1x9x9x16xbf16, #tpu.memory_space<vmem>>, vector<1x1x8x16xbf16>
    %3 = vector.shape_cast %2 : vector<1x1x8x16xbf16> to vector<8x16xbf16>
    %c0_7 = arith.constant 0 : index
    %c0_8 = arith.constant 0 : index
    %c0_9 = arith.constant 0 : index
    %4 = vector.load %arg2[%c0_7, %c0_8, %c0_9] : memref<4x16x8xbf16, #tpu.memory_space<vmem>>, vector<1x16x8xbf16>
    %5 = vector.shape_cast %4 : vector<1x16x8xbf16> to vector<16x8xbf16>
    %cst_10 = arith.constant dense<0.000000e+00> : vector<8x8xf32>
    %6 = tpu.matmul %3, %5, %cst_10 {dimension_numbers = #tpu.dot_dimension_numbers<[1], [0], [0], [1], [0, 0, 1, 1], [], []>} : vector<8x16xbf16>, vector<16x8xbf16>, vector<8x8xf32> -> vector<8x8xf32>
    %c0_11 = arith.constant 0 : index
    %c0_12 = arith.constant 0 : index
    %c1 = arith.constant 1 : index
    %c0_13 = arith.constant 0 : index
    %7 = vector.load %arg1[%c0_11, %c0_12, %c1, %c0_13] : memref<1x9x9x16xbf16, #tpu.memory_space<vmem>>, vector<1x1x8x16xbf16>
    %8 = vector.shape_cast %7 : vector<1x1x8x16xbf16> to vector<8x16xbf16>
    %c1_14 = arith.constant 1 : index
    %c0_15 = arith.constant 0 : index
    %c0_16 = arith.constant 0 : index
    %9 = vector.load %arg2[%c1_14, %c0_15, %c0_16] : memref<4x16x8xbf16, #tpu.memory_space<vmem>>, vector<1x16x8xbf16>
    %10 = vector.shape_cast %9 : vector<1x16x8xbf16> to vector<16x8xbf16>
    %cst_17 = arith.constant dense<0.000000e+00> : vector<8x8xf32>
    %11 = tpu.matmul %8, %10, %cst_17 {dimension_numbers = #tpu.dot_dimension_numbers<[1], [0], [0], [1], [0, 0, 1, 1], [], []>} : vector<8x16xbf16>, vector<16x8xbf16>, vector<8x8xf32> -> vector<8x8xf32>
    %12 = arith.addf %6, %11 : vector<8x8xf32>
    %c0_18 = arith.constant 0 : index
    %c1_19 = arith.constant 1 : index
    %c0_20 = arith.constant 0 : index
    %c0_21 = arith.constant 0 : index
    %13 = vector.load %arg1[%c0_18, %c1_19, %c0_20, %c0_21] : memref<1x9x9x16xbf16, #tpu.memory_space<vmem>>, vector<1x1x8x16xbf16>
    %14 = vector.shape_cast %13 : vector<1x1x8x16xbf16> to vector<8x16xbf16>
    %c2 = arith.constant 2 : index
    %c0_22 = arith.constant 0 : index
    %c0_23 = arith.constant 0 : index
    %15 = vector.load %arg2[%c2, %c0_22, %c0_23] : memref<4x16x8xbf16, #tpu.memory_space<vmem>>, vector<1x16x8xbf16>
    %16 = vector.shape_cast %15 : vector<1x16x8xbf16> to vector<16x8xbf16>
    %cst_24 = arith.constant dense<0.000000e+00> : vector<8x8xf32>
    %17 = tpu.matmul %14, %16, %cst_24 {dimension_numbers = #tpu.dot_dimension_numbers<[1], [0], [0], [1], [0, 0, 1, 1], [], []>} : vector<8x16xbf16>, vector<16x8xbf16>, vector<8x8xf32> -> vector<8x8xf32>
    %18 = arith.addf %12, %17 : vector<8x8xf32>
    %c0_25 = arith.constant 0 : index
    %c1_26 = arith.constant 1 : index
    %c1_27 = arith.constant 1 : index
    %c0_28 = arith.constant 0 : index
    %19 = vector.load %arg1[%c0_25, %c1_26, %c1_27, %c0_28] : memref<1x9x9x16xbf16, #tpu.memory_space<vmem>>, vector<1x1x8x16xbf16>
    %20 = vector.shape_cast %19 : vector<1x1x8x16xbf16> to vector<8x16xbf16>
    %c3 = arith.constant 3 : index
    %c0_29 = arith.constant 0 : index
    %c0_30 = arith.constant 0 : index
    %21 = vector.load %arg2[%c3, %c0_29, %c0_30] : memref<4x16x8xbf16, #tpu.memory_space<vmem>>, vector<1x16x8xbf16>
    %22 = vector.shape_cast %21 : vector<1x16x8xbf16> to vector<16x8xbf16>
    %cst_31 = arith.constant dense<0.000000e+00> : vector<8x8xf32>
    %23 = tpu.matmul %20, %22, %cst_31 {dimension_numbers = #tpu.dot_dimension_numbers<[1], [0], [0], [1], [0, 0, 1, 1], [], []>} : vector<8x16xbf16>, vector<16x8xbf16>, vector<8x8xf32> -> vector<8x8xf32>
    %24 = arith.addf %18, %23 : vector<8x8xf32>
    %c0_32 = arith.constant 0 : index
    %c1_33 = arith.constant 1 : index
    %c0_34 = arith.constant 0 : index
    %c0_35 = arith.constant 0 : index
    %25 = vector.load %arg1[%c0_32, %c1_33, %c0_34, %c0_35] : memref<1x9x9x16xbf16, #tpu.memory_space<vmem>>, vector<1x1x8x16xbf16>
    %26 = vector.shape_cast %25 : vector<1x1x8x16xbf16> to vector<8x16xbf16>
    %c0_36 = arith.constant 0 : index
    %c0_37 = arith.constant 0 : index
    %c0_38 = arith.constant 0 : index
    %27 = vector.load %arg2[%c0_36, %c0_37, %c0_38] : memref<4x16x8xbf16, #tpu.memory_space<vmem>>, vector<1x16x8xbf16>
    %28 = vector.shape_cast %27 : vector<1x16x8xbf16> to vector<16x8xbf16>
    %cst_39 = arith.constant dense<0.000000e+00> : vector<8x8xf32>
    %29 = tpu.matmul %26, %28, %cst_39 {dimension_numbers = #tpu.dot_dimension_numbers<[1], [0], [0], [1], [0, 0, 1, 1], [], []>} : vector<8x16xbf16>, vector<16x8xbf16>, vector<8x8xf32> -> vector<8x8xf32>
    %c0_40 = arith.constant 0 : index
    %c1_41 = arith.constant 1 : index
    %c1_42 = arith.constant 1 : index
    %c0_43 = arith.constant 0 : index
    %30 = vector.load %arg1[%c0_40, %c1_41, %c1_42, %c0_43] : memref<1x9x9x16xbf16, #tpu.memory_space<vmem>>, vector<1x1x8x16xbf16>
    %31 = vector.shape_cast %30 : vector<1x1x8x16xbf16> to vector<8x16xbf16>
    %c1_44 = arith.constant 1 : index
    %c0_45 = arith.constant 0 : index
    %c0_46 = arith.constant 0 : index
    %32 = vector.load %arg2[%c1_44, %c0_45, %c0_46] : memref<4x16x8xbf16, #tpu.memory_space<vmem>>, vector<1x16x8xbf16>
    %33 = vector.shape_cast %32 : vector<1x16x8xbf16> to vector<16x8xbf16>
    %cst_47 = arith.constant dense<0.000000e+00> : vector<8x8xf32>
    %34 = tpu.matmul %31, %33, %cst_47 {dimension_numbers = #tpu.dot_dimension_numbers<[1], [0], [0], [1], [0, 0, 1, 1], [], []>} : vector<8x16xbf16>, vector<16x8xbf16>, vector<8x8xf32> -> vector<8x8xf32>
    %35 = arith.addf %29, %34 : vector<8x8xf32>
    %c0_48 = arith.constant 0 : index
    %c2_49 = arith.constant 2 : index
    %c0_50 = arith.constant 0 : index
    %c0_51 = arith.constant 0 : index
    %36 = vector.load %arg1[%c0_48, %c2_49, %c0_50, %c0_51] : memref<1x9x9x16xbf16, #tpu.memory_space<vmem>>, vector<1x1x8x16xbf16>
    %37 = vector.shape_cast %36 : vector<1x1x8x16xbf16> to vector<8x16xbf16>
    %c2_52 = arith.constant 2 : index
    %c0_53 = arith.constant 0 : index
    %c0_54 = arith.constant 0 : index
    %38 = vector.load %arg2[%c2_52, %c0_53, %c0_54] : memref<4x16x8xbf16, #tpu.memory_space<vmem>>, vector<1x16x8xbf16>
    %39 = vector.shape_cast %38 : vector<1x16x8xbf16> to vector<16x8xbf16>
    %cst_55 = arith.constant dense<0.000000e+00> : vector<8x8xf32>
    %40 = tpu.matmul %37, %39, %cst_55 {dimension_numbers = #tpu.dot_dimension_numbers<[1], [0], [0], [1], [0, 0, 1, 1], [], []>} : vector<8x16xbf16>, vector<16x8xbf16>, vector<8x8xf32> -> vector<8x8xf32>
    %41 = arith.addf %35, %40 : vector<8x8xf32>
    %c0_56 = arith.constant 0 : index
    %c2_57 = arith.constant 2 : index
    %c1_58 = arith.constant 1 : index
    %c0_59 = arith.constant 0 : index
    %42 = vector.load %arg1[%c0_56, %c2_57, %c1_58, %c0_59] : memref<1x9x9x16xbf16, #tpu.memory_space<vmem>>, vector<1x1x8x16xbf16>
    %43 = vector.shape_cast %42 : vector<1x1x8x16xbf16> to vector<8x16xbf16>
    %c3_60 = arith.constant 3 : index
    %c0_61 = arith.constant 0 : index
    %c0_62 = arith.constant 0 : index
    %44 = vector.load %arg2[%c3_60, %c0_61, %c0_62] : memref<4x16x8xbf16, #tpu.memory_space<vmem>>, vector<1x16x8xbf16>
    %45 = vector.shape_cast %44 : vector<1x16x8xbf16> to vector<16x8xbf16>
    %cst_63 = arith.constant dense<0.000000e+00> : vector<8x8xf32>
    %46 = tpu.matmul %43, %45, %cst_63 {dimension_numbers = #tpu.dot_dimension_numbers<[1], [0], [0], [1], [0, 0, 1, 1], [], []>} : vector<8x16xbf16>, vector<16x8xbf16>, vector<8x8xf32> -> vector<8x8xf32>
    %47 = arith.addf %41, %46 : vector<8x8xf32>
    %c0_64 = arith.constant 0 : index
    %c2_65 = arith.constant 2 : index
    %c0_66 = arith.constant 0 : index
    %c0_67 = arith.constant 0 : index
    %48 = vector.load %arg1[%c0_64, %c2_65, %c0_66, %c0_67] : memref<1x9x9x16xbf16, #tpu.memory_space<vmem>>, vector<1x1x8x16xbf16>
    %49 = vector.shape_cast %48 : vector<1x1x8x16xbf16> to vector<8x16xbf16>
    %c0_68 = arith.constant 0 : index
    %c0_69 = arith.constant 0 : index
    %c0_70 = arith.constant 0 : index
    %50 = vector.load %arg2[%c0_68, %c0_69, %c0_70] : memref<4x16x8xbf16, #tpu.memory_space<vmem>>, vector<1x16x8xbf16>
    %51 = vector.shape_cast %50 : vector<1x16x8xbf16> to vector<16x8xbf16>
    %cst_71 = arith.constant dense<0.000000e+00> : vector<8x8xf32>
    %52 = tpu.matmul %49, %51, %cst_71 {dimension_numbers = #tpu.dot_dimension_numbers<[1], [0], [0], [1], [0, 0, 1, 1], [], []>} : vector<8x16xbf16>, vector<16x8xbf16>, vector<8x8xf32> -> vector<8x8xf32>
    %c0_72 = arith.constant 0 : index
    %c2_73 = arith.constant 2 : index
    %c1_74 = arith.constant 1 : index
    %c0_75 = arith.constant 0 : index
    %53 = vector.load %arg1[%c0_72, %c2_73, %c1_74, %c0_75] : memref<1x9x9x16xbf16, #tpu.memory_space<vmem>>, vector<1x1x8x16xbf16>
    %54 = vector.shape_cast %53 : vector<1x1x8x16xbf16> to vector<8x16xbf16>
    %c1_76 = arith.constant 1 : index
    %c0_77 = arith.constant 0 : index
    %c0_78 = arith.constant 0 : index
    %55 = vector.load %arg2[%c1_76, %c0_77, %c0_78] : memref<4x16x8xbf16, #tpu.memory_space<vmem>>, vector<1x16x8xbf16>
    %56 = vector.shape_cast %55 : vector<1x16x8xbf16> to vector<16x8xbf16>
    %cst_79 = arith.constant dense<0.000000e+00> : vector<8x8xf32>
    %57 = tpu.matmul %54, %56, %cst_79 {dimension_numbers = #tpu.dot_dimension_numbers<[1], [0], [0], [1], [0, 0, 1, 1], [], []>} : vector<8x16xbf16>, vector<16x8xbf16>, vector<8x8xf32> -> vector<8x8xf32>
    %58 = arith.addf %52, %57 : vector<8x8xf32>
    %c0_80 = arith.constant 0 : index
    %c3_81 = arith.constant 3 : index
    %c0_82 = arith.constant 0 : index
    %c0_83 = arith.constant 0 : index
    %59 = vector.load %arg1[%c0_80, %c3_81, %c0_82, %c0_83] : memref<1x9x9x16xbf16, #tpu.memory_space<vmem>>, vector<1x1x8x16xbf16>
    %60 = vector.shape_cast %59 : vector<1x1x8x16xbf16> to vector<8x16xbf16>
    %c2_84 = arith.constant 2 : index
    %c0_85 = arith.constant 0 : index
    %c0_86 = arith.constant 0 : index
    %61 = vector.load %arg2[%c2_84, %c0_85, %c0_86] : memref<4x16x8xbf16, #tpu.memory_space<vmem>>, vector<1x16x8xbf16>
    %62 = vector.shape_cast %61 : vector<1x16x8xbf16> to vector<16x8xbf16>
    %cst_87 = arith.constant dense<0.000000e+00> : vector<8x8xf32>
    %63 = tpu.matmul %60, %62, %cst_87 {dimension_numbers = #tpu.dot_dimension_numbers<[1], [0], [0], [1], [0, 0, 1, 1], [], []>} : vector<8x16xbf16>, vector<16x8xbf16>, vector<8x8xf32> -> vector<8x8xf32>
    %64 = arith.addf %58, %63 : vector<8x8xf32>
    %c0_88 = arith.constant 0 : index
    %c3_89 = arith.constant 3 : index
    %c1_90 = arith.constant 1 : index
    %c0_91 = arith.constant 0 : index
    %65 = vector.load %arg1[%c0_88, %c3_89, %c1_90, %c0_91] : memref<1x9x9x16xbf16, #tpu.memory_space<vmem>>, vector<1x1x8x16xbf16>
    %66 = vector.shape_cast %65 : vector<1x1x8x16xbf16> to vector<8x16xbf16>
    %c3_92 = arith.constant 3 : index
    %c0_93 = arith.constant 0 : index
    %c0_94 = arith.constant 0 : index
    %67 = vector.load %arg2[%c3_92, %c0_93, %c0_94] : memref<4x16x8xbf16, #tpu.memory_space<vmem>>, vector<1x16x8xbf16>
    %68 = vector.shape_cast %67 : vector<1x16x8xbf16> to vector<16x8xbf16>
    %cst_95 = arith.constant dense<0.000000e+00> : vector<8x8xf32>
    %69 = tpu.matmul %66, %68, %cst_95 {dimension_numbers = #tpu.dot_dimension_numbers<[1], [0], [0], [1], [0, 0, 1, 1], [], []>} : vector<8x16xbf16>, vector<16x8xbf16>, vector<8x8xf32> -> vector<8x8xf32>
    %70 = arith.addf %64, %69 : vector<8x8xf32>
    %c0_96 = arith.constant 0 : index
    %c3_97 = arith.constant 3 : index
    %c0_98 = arith.constant 0 : index
    %c0_99 = arith.constant 0 : index
    %71 = vector.load %arg1[%c0_96, %c3_97, %c0_98, %c0_99] : memref<1x9x9x16xbf16, #tpu.memory_space<vmem>>, vector<1x1x8x16xbf16>
    %72 = vector.shape_cast %71 : vector<1x1x8x16xbf16> to vector<8x16xbf16>
    %c0_100 = arith.constant 0 : index
    %c0_101 = arith.constant 0 : index
    %c0_102 = arith.constant 0 : index
    %73 = vector.load %arg2[%c0_100, %c0_101, %c0_102] : memref<4x16x8xbf16, #tpu.memory_space<vmem>>, vector<1x16x8xbf16>
    %74 = vector.shape_cast %73 : vector<1x16x8xbf16> to vector<16x8xbf16>
    %cst_103 = arith.constant dense<0.000000e+00> : vector<8x8xf32>
    %75 = tpu.matmul %72, %74, %cst_103 {dimension_numbers = #tpu.dot_dimension_numbers<[1], [0], [0], [1], [0, 0, 1, 1], [], []>} : vector<8x16xbf16>, vector<16x8xbf16>, vector<8x8xf32> -> vector<8x8xf32>
    %c0_104 = arith.constant 0 : index
    %c3_105 = arith.constant 3 : index
    %c1_106 = arith.constant 1 : index
    %c0_107 = arith.constant 0 : index
    %76 = vector.load %arg1[%c0_104, %c3_105, %c1_106, %c0_107] : memref<1x9x9x16xbf16, #tpu.memory_space<vmem>>, vector<1x1x8x16xbf16>
    %77 = vector.shape_cast %76 : vector<1x1x8x16xbf16> to vector<8x16xbf16>
    %c1_108 = arith.constant 1 : index
    %c0_109 = arith.constant 0 : index
    %c0_110 = arith.constant 0 : index
    %78 = vector.load %arg2[%c1_108, %c0_109, %c0_110] : memref<4x16x8xbf16, #tpu.memory_space<vmem>>, vector<1x16x8xbf16>
    %79 = vector.shape_cast %78 : vector<1x16x8xbf16> to vector<16x8xbf16>
    %cst_111 = arith.constant dense<0.000000e+00> : vector<8x8xf32>
    %80 = tpu.matmul %77, %79, %cst_111 {dimension_numbers = #tpu.dot_dimension_numbers<[1], [0], [0], [1], [0, 0, 1, 1], [], []>} : vector<8x16xbf16>, vector<16x8xbf16>, vector<8x8xf32> -> vector<8x8xf32>
    %81 = arith.addf %75, %80 : vector<8x8xf32>
    %c0_112 = arith.constant 0 : index
    %c4 = arith.constant 4 : index
    %c0_113 = arith.constant 0 : index
    %c0_114 = arith.constant 0 : index
    %82 = vector.load %arg1[%c0_112, %c4, %c0_113, %c0_114] : memref<1x9x9x16xbf16, #tpu.memory_space<vmem>>, vector<1x1x8x16xbf16>
    %83 = vector.shape_cast %82 : vector<1x1x8x16xbf16> to vector<8x16xbf16>
    %c2_115 = arith.constant 2 : index
    %c0_116 = arith.constant 0 : index
    %c0_117 = arith.constant 0 : index
    %84 = vector.load %arg2[%c2_115, %c0_116, %c0_117] : memref<4x16x8xbf16, #tpu.memory_space<vmem>>, vector<1x16x8xbf16>
    %85 = vector.shape_cast %84 : vector<1x16x8xbf16> to vector<16x8xbf16>
    %cst_118 = arith.constant dense<0.000000e+00> : vector<8x8xf32>
    %86 = tpu.matmul %83, %85, %cst_118 {dimension_numbers = #tpu.dot_dimension_numbers<[1], [0], [0], [1], [0, 0, 1, 1], [], []>} : vector<8x16xbf16>, vector<16x8xbf16>, vector<8x8xf32> -> vector<8x8xf32>
    %87 = arith.addf %81, %86 : vector<8x8xf32>
    %c0_119 = arith.constant 0 : index
    %c4_120 = arith.constant 4 : index
    %c1_121 = arith.constant 1 : index
    %c0_122 = arith.constant 0 : index
    %88 = vector.load %arg1[%c0_119, %c4_120, %c1_121, %c0_122] : memref<1x9x9x16xbf16, #tpu.memory_space<vmem>>, vector<1x1x8x16xbf16>
    %89 = vector.shape_cast %88 : vector<1x1x8x16xbf16> to vector<8x16xbf16>
    %c3_123 = arith.constant 3 : index
    %c0_124 = arith.constant 0 : index
    %c0_125 = arith.constant 0 : index
    %90 = vector.load %arg2[%c3_123, %c0_124, %c0_125] : memref<4x16x8xbf16, #tpu.memory_space<vmem>>, vector<1x16x8xbf16>
    %91 = vector.shape_cast %90 : vector<1x16x8xbf16> to vector<16x8xbf16>
    %cst_126 = arith.constant dense<0.000000e+00> : vector<8x8xf32>
    %92 = tpu.matmul %89, %91, %cst_126 {dimension_numbers = #tpu.dot_dimension_numbers<[1], [0], [0], [1], [0, 0, 1, 1], [], []>} : vector<8x16xbf16>, vector<16x8xbf16>, vector<8x8xf32> -> vector<8x8xf32>
    %93 = arith.addf %87, %92 : vector<8x8xf32>
    %c0_127 = arith.constant 0 : index
    %c4_128 = arith.constant 4 : index
    %c0_129 = arith.constant 0 : index
    %c0_130 = arith.constant 0 : index
    %94 = vector.load %arg1[%c0_127, %c4_128, %c0_129, %c0_130] : memref<1x9x9x16xbf16, #tpu.memory_space<vmem>>, vector<1x1x8x16xbf16>
    %95 = vector.shape_cast %94 : vector<1x1x8x16xbf16> to vector<8x16xbf16>
    %c0_131 = arith.constant 0 : index
    %c0_132 = arith.constant 0 : index
    %c0_133 = arith.constant 0 : index
    %96 = vector.load %arg2[%c0_131, %c0_132, %c0_133] : memref<4x16x8xbf16, #tpu.memory_space<vmem>>, vector<1x16x8xbf16>
    %97 = vector.shape_cast %96 : vector<1x16x8xbf16> to vector<16x8xbf16>
    %cst_134 = arith.constant dense<0.000000e+00> : vector<8x8xf32>
    %98 = tpu.matmul %95, %97, %cst_134 {dimension_numbers = #tpu.dot_dimension_numbers<[1], [0], [0], [1], [0, 0, 1, 1], [], []>} : vector<8x16xbf16>, vector<16x8xbf16>, vector<8x8xf32> -> vector<8x8xf32>
    %c0_135 = arith.constant 0 : index
    %c4_136 = arith.constant 4 : index
    %c1_137 = arith.constant 1 : index
    %c0_138 = arith.constant 0 : index
    %99 = vector.load %arg1[%c0_135, %c4_136, %c1_137, %c0_138] : memref<1x9x9x16xbf16, #tpu.memory_space<vmem>>, vector<1x1x8x16xbf16>
    %100 = vector.shape_cast %99 : vector<1x1x8x16xbf16> to vector<8x16xbf16>
    %c1_139 = arith.constant 1 : index
    %c0_140 = arith.constant 0 : index
    %c0_141 = arith.constant 0 : index
    %101 = vector.load %arg2[%c1_139, %c0_140, %c0_141] : memref<4x16x8xbf16, #tpu.memory_space<vmem>>, vector<1x16x8xbf16>
    %102 = vector.shape_cast %101 : vector<1x16x8xbf16> to vector<16x8xbf16>
    %cst_142 = arith.constant dense<0.000000e+00> : vector<8x8xf32>
    %103 = tpu.matmul %100, %102, %cst_142 {dimension_numbers = #tpu.dot_dimension_numbers<[1], [0], [0], [1], [0, 0, 1, 1], [], []>} : vector<8x16xbf16>, vector<16x8xbf16>, vector<8x8xf32> -> vector<8x8xf32>
    %104 = arith.addf %98, %103 : vector<8x8xf32>
    %c0_143 = arith.constant 0 : index
    %c5 = arith.constant 5 : index
    %c0_144 = arith.constant 0 : index
    %c0_145 = arith.constant 0 : index
    %105 = vector.load %arg1[%c0_143, %c5, %c0_144, %c0_145] : memref<1x9x9x16xbf16, #tpu.memory_space<vmem>>, vector<1x1x8x16xbf16>
    %106 = vector.shape_cast %105 : vector<1x1x8x16xbf16> to vector<8x16xbf16>
    %c2_146 = arith.constant 2 : index
    %c0_147 = arith.constant 0 : index
    %c0_148 = arith.constant 0 : index
    %107 = vector.load %arg2[%c2_146, %c0_147, %c0_148] : memref<4x16x8xbf16, #tpu.memory_space<vmem>>, vector<1x16x8xbf16>
    %108 = vector.shape_cast %107 : vector<1x16x8xbf16> to vector<16x8xbf16>
    %cst_149 = arith.constant dense<0.000000e+00> : vector<8x8xf32>
    %109 = tpu.matmul %106, %108, %cst_149 {dimension_numbers = #tpu.dot_dimension_numbers<[1], [0], [0], [1], [0, 0, 1, 1], [], []>} : vector<8x16xbf16>, vector<16x8xbf16>, vector<8x8xf32> -> vector<8x8xf32>
    %110 = arith.addf %104, %109 : vector<8x8xf32>
    %c0_150 = arith.constant 0 : index
    %c5_151 = arith.constant 5 : index
    %c1_152 = arith.constant 1 : index
    %c0_153 = arith.constant 0 : index
    %111 = vector.load %arg1[%c0_150, %c5_151, %c1_152, %c0_153] : memref<1x9x9x16xbf16, #tpu.memory_space<vmem>>, vector<1x1x8x16xbf16>
    %112 = vector.shape_cast %111 : vector<1x1x8x16xbf16> to vector<8x16xbf16>
    %c3_154 = arith.constant 3 : index
    %c0_155 = arith.constant 0 : index
    %c0_156 = arith.constant 0 : index
    %113 = vector.load %arg2[%c3_154, %c0_155, %c0_156] : memref<4x16x8xbf16, #tpu.memory_space<vmem>>, vector<1x16x8xbf16>
    %114 = vector.shape_cast %113 : vector<1x16x8xbf16> to vector<16x8xbf16>
    %cst_157 = arith.constant dense<0.000000e+00> : vector<8x8xf32>
    %115 = tpu.matmul %112, %114, %cst_157 {dimension_numbers = #tpu.dot_dimension_numbers<[1], [0], [0], [1], [0, 0, 1, 1], [], []>} : vector<8x16xbf16>, vector<16x8xbf16>, vector<8x8xf32> -> vector<8x8xf32>
    %116 = arith.addf %110, %115 : vector<8x8xf32>
    %c0_158 = arith.constant 0 : index
    %c5_159 = arith.constant 5 : index
    %c0_160 = arith.constant 0 : index
    %c0_161 = arith.constant 0 : index
    %117 = vector.load %arg1[%c0_158, %c5_159, %c0_160, %c0_161] : memref<1x9x9x16xbf16, #tpu.memory_space<vmem>>, vector<1x1x8x16xbf16>
    %118 = vector.shape_cast %117 : vector<1x1x8x16xbf16> to vector<8x16xbf16>
    %c0_162 = arith.constant 0 : index
    %c0_163 = arith.constant 0 : index
    %c0_164 = arith.constant 0 : index
    %119 = vector.load %arg2[%c0_162, %c0_163, %c0_164] : memref<4x16x8xbf16, #tpu.memory_space<vmem>>, vector<1x16x8xbf16>
    %120 = vector.shape_cast %119 : vector<1x16x8xbf16> to vector<16x8xbf16>
    %cst_165 = arith.constant dense<0.000000e+00> : vector<8x8xf32>
    %121 = tpu.matmul %118, %120, %cst_165 {dimension_numbers = #tpu.dot_dimension_numbers<[1], [0], [0], [1], [0, 0, 1, 1], [], []>} : vector<8x16xbf16>, vector<16x8xbf16>, vector<8x8xf32> -> vector<8x8xf32>
    %c0_166 = arith.constant 0 : index
    %c5_167 = arith.constant 5 : index
    %c1_168 = arith.constant 1 : index
    %c0_169 = arith.constant 0 : index
    %122 = vector.load %arg1[%c0_166, %c5_167, %c1_168, %c0_169] : memref<1x9x9x16xbf16, #tpu.memory_space<vmem>>, vector<1x1x8x16xbf16>
    %123 = vector.shape_cast %122 : vector<1x1x8x16xbf16> to vector<8x16xbf16>
    %c1_170 = arith.constant 1 : index
    %c0_171 = arith.constant 0 : index
    %c0_172 = arith.constant 0 : index
    %124 = vector.load %arg2[%c1_170, %c0_171, %c0_172] : memref<4x16x8xbf16, #tpu.memory_space<vmem>>, vector<1x16x8xbf16>
    %125 = vector.shape_cast %124 : vector<1x16x8xbf16> to vector<16x8xbf16>
    %cst_173 = arith.constant dense<0.000000e+00> : vector<8x8xf32>
    %126 = tpu.matmul %123, %125, %cst_173 {dimension_numbers = #tpu.dot_dimension_numbers<[1], [0], [0], [1], [0, 0, 1, 1], [], []>} : vector<8x16xbf16>, vector<16x8xbf16>, vector<8x8xf32> -> vector<8x8xf32>
    %127 = arith.addf %121, %126 : vector<8x8xf32>
    %c0_174 = arith.constant 0 : index
    %c6 = arith.constant 6 : index
    %c0_175 = arith.constant 0 : index
    %c0_176 = arith.constant 0 : index
    %128 = vector.load %arg1[%c0_174, %c6, %c0_175, %c0_176] : memref<1x9x9x16xbf16, #tpu.memory_space<vmem>>, vector<1x1x8x16xbf16>
    %129 = vector.shape_cast %128 : vector<1x1x8x16xbf16> to vector<8x16xbf16>
    %c2_177 = arith.constant 2 : index
    %c0_178 = arith.constant 0 : index
    %c0_179 = arith.constant 0 : index
    %130 = vector.load %arg2[%c2_177, %c0_178, %c0_179] : memref<4x16x8xbf16, #tpu.memory_space<vmem>>, vector<1x16x8xbf16>
    %131 = vector.shape_cast %130 : vector<1x16x8xbf16> to vector<16x8xbf16>
    %cst_180 = arith.constant dense<0.000000e+00> : vector<8x8xf32>
    %132 = tpu.matmul %129, %131, %cst_180 {dimension_numbers = #tpu.dot_dimension_numbers<[1], [0], [0], [1], [0, 0, 1, 1], [], []>} : vector<8x16xbf16>, vector<16x8xbf16>, vector<8x8xf32> -> vector<8x8xf32>
    %133 = arith.addf %127, %132 : vector<8x8xf32>
    %c0_181 = arith.constant 0 : index
    %c6_182 = arith.constant 6 : index
    %c1_183 = arith.constant 1 : index
    %c0_184 = arith.constant 0 : index
    %134 = vector.load %arg1[%c0_181, %c6_182, %c1_183, %c0_184] : memref<1x9x9x16xbf16, #tpu.memory_space<vmem>>, vector<1x1x8x16xbf16>
    %135 = vector.shape_cast %134 : vector<1x1x8x16xbf16> to vector<8x16xbf16>
    %c3_185 = arith.constant 3 : index
    %c0_186 = arith.constant 0 : index
    %c0_187 = arith.constant 0 : index
    %136 = vector.load %arg2[%c3_185, %c0_186, %c0_187] : memref<4x16x8xbf16, #tpu.memory_space<vmem>>, vector<1x16x8xbf16>
    %137 = vector.shape_cast %136 : vector<1x16x8xbf16> to vector<16x8xbf16>
    %cst_188 = arith.constant dense<0.000000e+00> : vector<8x8xf32>
    %138 = tpu.matmul %135, %137, %cst_188 {dimension_numbers = #tpu.dot_dimension_numbers<[1], [0], [0], [1], [0, 0, 1, 1], [], []>} : vector<8x16xbf16>, vector<16x8xbf16>, vector<8x8xf32> -> vector<8x8xf32>
    %139 = arith.addf %133, %138 : vector<8x8xf32>
    %c0_189 = arith.constant 0 : index
    %c6_190 = arith.constant 6 : index
    %c0_191 = arith.constant 0 : index
    %c0_192 = arith.constant 0 : index
    %140 = vector.load %arg1[%c0_189, %c6_190, %c0_191, %c0_192] : memref<1x9x9x16xbf16, #tpu.memory_space<vmem>>, vector<1x1x8x16xbf16>
    %141 = vector.shape_cast %140 : vector<1x1x8x16xbf16> to vector<8x16xbf16>
    %c0_193 = arith.constant 0 : index
    %c0_194 = arith.constant 0 : index
    %c0_195 = arith.constant 0 : index
    %142 = vector.load %arg2[%c0_193, %c0_194, %c0_195] : memref<4x16x8xbf16, #tpu.memory_space<vmem>>, vector<1x16x8xbf16>
    %143 = vector.shape_cast %142 : vector<1x16x8xbf16> to vector<16x8xbf16>
    %cst_196 = arith.constant dense<0.000000e+00> : vector<8x8xf32>
    %144 = tpu.matmul %141, %143, %cst_196 {dimension_numbers = #tpu.dot_dimension_numbers<[1], [0], [0], [1], [0, 0, 1, 1], [], []>} : vector<8x16xbf16>, vector<16x8xbf16>, vector<8x8xf32> -> vector<8x8xf32>
    %c0_197 = arith.constant 0 : index
    %c6_198 = arith.constant 6 : index
    %c1_199 = arith.constant 1 : index
    %c0_200 = arith.constant 0 : index
    %145 = vector.load %arg1[%c0_197, %c6_198, %c1_199, %c0_200] : memref<1x9x9x16xbf16, #tpu.memory_space<vmem>>, vector<1x1x8x16xbf16>
    %146 = vector.shape_cast %145 : vector<1x1x8x16xbf16> to vector<8x16xbf16>
    %c1_201 = arith.constant 1 : index
    %c0_202 = arith.constant 0 : index
    %c0_203 = arith.constant 0 : index
    %147 = vector.load %arg2[%c1_201, %c0_202, %c0_203] : memref<4x16x8xbf16, #tpu.memory_space<vmem>>, vector<1x16x8xbf16>
    %148 = vector.shape_cast %147 : vector<1x16x8xbf16> to vector<16x8xbf16>
    %cst_204 = arith.constant dense<0.000000e+00> : vector<8x8xf32>
    %149 = tpu.matmul %146, %148, %cst_204 {dimension_numbers = #tpu.dot_dimension_numbers<[1], [0], [0], [1], [0, 0, 1, 1], [], []>} : vector<8x16xbf16>, vector<16x8xbf16>, vector<8x8xf32> -> vector<8x8xf32>
    %150 = arith.addf %144, %149 : vector<8x8xf32>
    %c0_205 = arith.constant 0 : index
    %c7 = arith.constant 7 : index
    %c0_206 = arith.constant 0 : index
    %c0_207 = arith.constant 0 : index
    %151 = vector.load %arg1[%c0_205, %c7, %c0_206, %c0_207] : memref<1x9x9x16xbf16, #tpu.memory_space<vmem>>, vector<1x1x8x16xbf16>
    %152 = vector.shape_cast %151 : vector<1x1x8x16xbf16> to vector<8x16xbf16>
    %c2_208 = arith.constant 2 : index
    %c0_209 = arith.constant 0 : index
    %c0_210 = arith.constant 0 : index
    %153 = vector.load %arg2[%c2_208, %c0_209, %c0_210] : memref<4x16x8xbf16, #tpu.memory_space<vmem>>, vector<1x16x8xbf16>
    %154 = vector.shape_cast %153 : vector<1x16x8xbf16> to vector<16x8xbf16>
    %cst_211 = arith.constant dense<0.000000e+00> : vector<8x8xf32>
    %155 = tpu.matmul %152, %154, %cst_211 {dimension_numbers = #tpu.dot_dimension_numbers<[1], [0], [0], [1], [0, 0, 1, 1], [], []>} : vector<8x16xbf16>, vector<16x8xbf16>, vector<8x8xf32> -> vector<8x8xf32>
    %156 = arith.addf %150, %155 : vector<8x8xf32>
    %c0_212 = arith.constant 0 : index
    %c7_213 = arith.constant 7 : index
    %c1_214 = arith.constant 1 : index
    %c0_215 = arith.constant 0 : index
    %157 = vector.load %arg1[%c0_212, %c7_213, %c1_214, %c0_215] : memref<1x9x9x16xbf16, #tpu.memory_space<vmem>>, vector<1x1x8x16xbf16>
    %158 = vector.shape_cast %157 : vector<1x1x8x16xbf16> to vector<8x16xbf16>
    %c3_216 = arith.constant 3 : index
    %c0_217 = arith.constant 0 : index
    %c0_218 = arith.constant 0 : index
    %159 = vector.load %arg2[%c3_216, %c0_217, %c0_218] : memref<4x16x8xbf16, #tpu.memory_space<vmem>>, vector<1x16x8xbf16>
    %160 = vector.shape_cast %159 : vector<1x16x8xbf16> to vector<16x8xbf16>
    %cst_219 = arith.constant dense<0.000000e+00> : vector<8x8xf32>
    %161 = tpu.matmul %158, %160, %cst_219 {dimension_numbers = #tpu.dot_dimension_numbers<[1], [0], [0], [1], [0, 0, 1, 1], [], []>} : vector<8x16xbf16>, vector<16x8xbf16>, vector<8x8xf32> -> vector<8x8xf32>
    %162 = arith.addf %156, %161 : vector<8x8xf32>
    %c0_220 = arith.constant 0 : index
    %c7_221 = arith.constant 7 : index
    %c0_222 = arith.constant 0 : index
    %c0_223 = arith.constant 0 : index
    %163 = vector.load %arg1[%c0_220, %c7_221, %c0_222, %c0_223] : memref<1x9x9x16xbf16, #tpu.memory_space<vmem>>, vector<1x1x8x16xbf16>
    %164 = vector.shape_cast %163 : vector<1x1x8x16xbf16> to vector<8x16xbf16>
    %c0_224 = arith.constant 0 : index
    %c0_225 = arith.constant 0 : index
    %c0_226 = arith.constant 0 : index
    %165 = vector.load %arg2[%c0_224, %c0_225, %c0_226] : memref<4x16x8xbf16, #tpu.memory_space<vmem>>, vector<1x16x8xbf16>
    %166 = vector.shape_cast %165 : vector<1x16x8xbf16> to vector<16x8xbf16>
    %cst_227 = arith.constant dense<0.000000e+00> : vector<8x8xf32>
    %167 = tpu.matmul %164, %166, %cst_227 {dimension_numbers = #tpu.dot_dimension_numbers<[1], [0], [0], [1], [0, 0, 1, 1], [], []>} : vector<8x16xbf16>, vector<16x8xbf16>, vector<8x8xf32> -> vector<8x8xf32>
    %c0_228 = arith.constant 0 : index
    %c7_229 = arith.constant 7 : index
    %c1_230 = arith.constant 1 : index
    %c0_231 = arith.constant 0 : index
    %168 = vector.load %arg1[%c0_228, %c7_229, %c1_230, %c0_231] : memref<1x9x9x16xbf16, #tpu.memory_space<vmem>>, vector<1x1x8x16xbf16>
    %169 = vector.shape_cast %168 : vector<1x1x8x16xbf16> to vector<8x16xbf16>
    %c1_232 = arith.constant 1 : index
    %c0_233 = arith.constant 0 : index
    %c0_234 = arith.constant 0 : index
    %170 = vector.load %arg2[%c1_232, %c0_233, %c0_234] : memref<4x16x8xbf16, #tpu.memory_space<vmem>>, vector<1x16x8xbf16>
    %171 = vector.shape_cast %170 : vector<1x16x8xbf16> to vector<16x8xbf16>
    %cst_235 = arith.constant dense<0.000000e+00> : vector<8x8xf32>
    %172 = tpu.matmul %169, %171, %cst_235 {dimension_numbers = #tpu.dot_dimension_numbers<[1], [0], [0], [1], [0, 0, 1, 1], [], []>} : vector<8x16xbf16>, vector<16x8xbf16>, vector<8x8xf32> -> vector<8x8xf32>
    %173 = arith.addf %167, %172 : vector<8x8xf32>
    %c0_236 = arith.constant 0 : index
    %c8 = arith.constant 8 : index
    %c0_237 = arith.constant 0 : index
    %c0_238 = arith.constant 0 : index
    %174 = vector.load %arg1[%c0_236, %c8, %c0_237, %c0_238] : memref<1x9x9x16xbf16, #tpu.memory_space<vmem>>, vector<1x1x8x16xbf16>
    %175 = vector.shape_cast %174 : vector<1x1x8x16xbf16> to vector<8x16xbf16>
    %c2_239 = arith.constant 2 : index
    %c0_240 = arith.constant 0 : index
    %c0_241 = arith.constant 0 : index
    %176 = vector.load %arg2[%c2_239, %c0_240, %c0_241] : memref<4x16x8xbf16, #tpu.memory_space<vmem>>, vector<1x16x8xbf16>
    %177 = vector.shape_cast %176 : vector<1x16x8xbf16> to vector<16x8xbf16>
    %cst_242 = arith.constant dense<0.000000e+00> : vector<8x8xf32>
    %178 = tpu.matmul %175, %177, %cst_242 {dimension_numbers = #tpu.dot_dimension_numbers<[1], [0], [0], [1], [0, 0, 1, 1], [], []>} : vector<8x16xbf16>, vector<16x8xbf16>, vector<8x8xf32> -> vector<8x8xf32>
    %179 = arith.addf %173, %178 : vector<8x8xf32>
    %c0_243 = arith.constant 0 : index
    %c8_244 = arith.constant 8 : index
    %c1_245 = arith.constant 1 : index
    %c0_246 = arith.constant 0 : index
    %180 = vector.load %arg1[%c0_243, %c8_244, %c1_245, %c0_246] : memref<1x9x9x16xbf16, #tpu.memory_space<vmem>>, vector<1x1x8x16xbf16>
    %181 = vector.shape_cast %180 : vector<1x1x8x16xbf16> to vector<8x16xbf16>
    %c3_247 = arith.constant 3 : index
    %c0_248 = arith.constant 0 : index
    %c0_249 = arith.constant 0 : index
    %182 = vector.load %arg2[%c3_247, %c0_248, %c0_249] : memref<4x16x8xbf16, #tpu.memory_space<vmem>>, vector<1x16x8xbf16>
    %183 = vector.shape_cast %182 : vector<1x16x8xbf16> to vector<16x8xbf16>
    %cst_250 = arith.constant dense<0.000000e+00> : vector<8x8xf32>
    %184 = tpu.matmul %181, %183, %cst_250 {dimension_numbers = #tpu.dot_dimension_numbers<[1], [0], [0], [1], [0, 0, 1, 1], [], []>} : vector<8x16xbf16>, vector<16x8xbf16>, vector<8x8xf32> -> vector<8x8xf32>
    %185 = arith.addf %179, %184 : vector<8x8xf32>
    %cst_251 = arith.constant 0.000000e+00 : f32
    %186 = vector.broadcast %cst_251 : f32 to vector<8x8xf32>
    %187 = arith.cmpf oge, %24, %186 : vector<8x8xf32>
    %cst_252 = arith.constant 2.000000e-01 : f32
    %188 = vector.broadcast %cst_252 : f32 to vector<8x8xf32>
    %189 = arith.mulf %188, %24 : vector<8x8xf32>
    %190 = arith.select %187, %24, %189 : vector<8x8xi1>, vector<8x8xf32>
    %cst_253 = arith.constant 0.000000e+00 : f32
    %191 = vector.broadcast %cst_253 : f32 to vector<8x8xf32>
    %192 = arith.cmpf oge, %47, %191 : vector<8x8xf32>
    %cst_254 = arith.constant 2.000000e-01 : f32
    %193 = vector.broadcast %cst_254 : f32 to vector<8x8xf32>
    %194 = arith.mulf %193, %47 : vector<8x8xf32>
    %195 = arith.select %192, %47, %194 : vector<8x8xi1>, vector<8x8xf32>
    %cst_255 = arith.constant 0.000000e+00 : f32
    %196 = vector.broadcast %cst_255 : f32 to vector<8x8xf32>
    %197 = arith.cmpf oge, %70, %196 : vector<8x8xf32>
    %cst_256 = arith.constant 2.000000e-01 : f32
    %198 = vector.broadcast %cst_256 : f32 to vector<8x8xf32>
    %199 = arith.mulf %198, %70 : vector<8x8xf32>
    %200 = arith.select %197, %70, %199 : vector<8x8xi1>, vector<8x8xf32>
    %cst_257 = arith.constant 0.000000e+00 : f32
    %201 = vector.broadcast %cst_257 : f32 to vector<8x8xf32>
    %202 = arith.cmpf oge, %93, %201 : vector<8x8xf32>
    %cst_258 = arith.constant 2.000000e-01 : f32
    %203 = vector.broadcast %cst_258 : f32 to vector<8x8xf32>
    %204 = arith.mulf %203, %93 : vector<8x8xf32>
    %205 = arith.select %202, %93, %204 : vector<8x8xi1>, vector<8x8xf32>
    %cst_259 = arith.constant 0.000000e+00 : f32
    %206 = vector.broadcast %cst_259 : f32 to vector<8x8xf32>
    %207 = arith.cmpf oge, %116, %206 : vector<8x8xf32>
    %cst_260 = arith.constant 2.000000e-01 : f32
    %208 = vector.broadcast %cst_260 : f32 to vector<8x8xf32>
    %209 = arith.mulf %208, %116 : vector<8x8xf32>
    %210 = arith.select %207, %116, %209 : vector<8x8xi1>, vector<8x8xf32>
    %cst_261 = arith.constant 0.000000e+00 : f32
    %211 = vector.broadcast %cst_261 : f32 to vector<8x8xf32>
    %212 = arith.cmpf oge, %139, %211 : vector<8x8xf32>
    %cst_262 = arith.constant 2.000000e-01 : f32
    %213 = vector.broadcast %cst_262 : f32 to vector<8x8xf32>
    %214 = arith.mulf %213, %139 : vector<8x8xf32>
    %215 = arith.select %212, %139, %214 : vector<8x8xi1>, vector<8x8xf32>
    %cst_263 = arith.constant 0.000000e+00 : f32
    %216 = vector.broadcast %cst_263 : f32 to vector<8x8xf32>
    %217 = arith.cmpf oge, %162, %216 : vector<8x8xf32>
    %cst_264 = arith.constant 2.000000e-01 : f32
    %218 = vector.broadcast %cst_264 : f32 to vector<8x8xf32>
    %219 = arith.mulf %218, %162 : vector<8x8xf32>
    %220 = arith.select %217, %162, %219 : vector<8x8xi1>, vector<8x8xf32>
    %cst_265 = arith.constant 0.000000e+00 : f32
    %221 = vector.broadcast %cst_265 : f32 to vector<8x8xf32>
    %222 = arith.cmpf oge, %185, %221 : vector<8x8xf32>
    %cst_266 = arith.constant 2.000000e-01 : f32
    %223 = vector.broadcast %cst_266 : f32 to vector<8x8xf32>
    %224 = arith.mulf %223, %185 : vector<8x8xf32>
    %225 = arith.select %222, %185, %224 : vector<8x8xi1>, vector<8x8xf32>
    %c0_267 = arith.constant 0 : index
    %c0_268 = arith.constant 0 : index
    %c1_269 = arith.constant 1 : index
    %c8_270 = arith.constant 8 : index
    %226 = vector.load %arg4[%c0_267, %c0_268, %c1_269, %c8_270] : memref<1x5x10x16xf32, #tpu.memory_space<vmem>>, vector<1x1x8x8xf32>
    %227 = vector.shape_cast %226 : vector<1x1x8x8xf32> to vector<8x8xf32>
    %228 = vector.shape_cast %190 : vector<8x8xf32> to vector<1x1x8x8xf32>
    tpu.vector_store %arg4[%c0_267, %c0_268, %c1_269, %c8_270], %228 {strides = array<i32>} : memref<1x5x10x16xf32, #tpu.memory_space<vmem>>, vector<1x1x8x8xf32>,
    %c0_271 = arith.constant 0 : index
    %c1_272 = arith.constant 1 : index
    %c1_273 = arith.constant 1 : index
    %c0_274 = arith.constant 0 : index
    %229 = vector.load %arg4[%c0_271, %c1_272, %c1_273, %c0_274] : memref<1x5x10x16xf32, #tpu.memory_space<vmem>>, vector<1x1x8x8xf32>
    %230 = vector.shape_cast %229 : vector<1x1x8x8xf32> to vector<8x8xf32>
    %231 = vector.shape_cast %195 : vector<8x8xf32> to vector<1x1x8x8xf32>
    tpu.vector_store %arg4[%c0_271, %c1_272, %c1_273, %c0_274], %231 {strides = array<i32>} : memref<1x5x10x16xf32, #tpu.memory_space<vmem>>, vector<1x1x8x8xf32>,
    %c0_275 = arith.constant 0 : index
    %c1_276 = arith.constant 1 : index
    %c1_277 = arith.constant 1 : index
    %c8_278 = arith.constant 8 : index
    %232 = vector.load %arg4[%c0_275, %c1_276, %c1_277, %c8_278] : memref<1x5x10x16xf32, #tpu.memory_space<vmem>>, vector<1x1x8x8xf32>
    %233 = vector.shape_cast %232 : vector<1x1x8x8xf32> to vector<8x8xf32>
    %234 = vector.shape_cast %200 : vector<8x8xf32> to vector<1x1x8x8xf32>
    tpu.vector_store %arg4[%c0_275, %c1_276, %c1_277, %c8_278], %234 {strides = array<i32>} : memref<1x5x10x16xf32, #tpu.memory_space<vmem>>, vector<1x1x8x8xf32>,
    %c0_279 = arith.constant 0 : index
    %c2_280 = arith.constant 2 : index
    %c1_281 = arith.constant 1 : index
    %c0_282 = arith.constant 0 : index
    %235 = vector.load %arg4[%c0_279, %c2_280, %c1_281, %c0_282] : memref<1x5x10x16xf32, #tpu.memory_space<vmem>>, vector<1x1x8x8xf32>
    %236 = vector.shape_cast %235 : vector<1x1x8x8xf32> to vector<8x8xf32>
    %237 = vector.shape_cast %205 : vector<8x8xf32> to vector<1x1x8x8xf32>
    tpu.vector_store %arg4[%c0_279, %c2_280, %c1_281, %c0_282], %237 {strides = array<i32>} : memref<1x5x10x16xf32, #tpu.memory_space<vmem>>, vector<1x1x8x8xf32>,
    %c0_283 = arith.constant 0 : index
    %c2_284 = arith.constant 2 : index
    %c1_285 = arith.constant 1 : index
    %c8_286 = arith.constant 8 : index
    %238 = vector.load %arg4[%c0_283, %c2_284, %c1_285, %c8_286] : memref<1x5x10x16xf32, #tpu.memory_space<vmem>>, vector<1x1x8x8xf32>
    %239 = vector.shape_cast %238 : vector<1x1x8x8xf32> to vector<8x8xf32>
    %240 = vector.shape_cast %210 : vector<8x8xf32> to vector<1x1x8x8xf32>
    tpu.vector_store %arg4[%c0_283, %c2_284, %c1_285, %c8_286], %240 {strides = array<i32>} : memref<1x5x10x16xf32, #tpu.memory_space<vmem>>, vector<1x1x8x8xf32>,
    %c0_287 = arith.constant 0 : index
    %c3_288 = arith.constant 3 : index
    %c1_289 = arith.constant 1 : index
    %c0_290 = arith.constant 0 : index
    %241 = vector.load %arg4[%c0_287, %c3_288, %c1_289, %c0_290] : memref<1x5x10x16xf32, #tpu.memory_space<vmem>>, vector<1x1x8x8xf32>
    %242 = vector.shape_cast %241 : vector<1x1x8x8xf32> to vector<8x8xf32>
    %243 = vector.shape_cast %215 : vector<8x8xf32> to vector<1x1x8x8xf32>
    tpu.vector_store %arg4[%c0_287, %c3_288, %c1_289, %c0_290], %243 {strides = array<i32>} : memref<1x5x10x16xf32, #tpu.memory_space<vmem>>, vector<1x1x8x8xf32>,
    %c0_291 = arith.constant 0 : index
    %c3_292 = arith.constant 3 : index
    %c1_293 = arith.constant 1 : index
    %c8_294 = arith.constant 8 : index
    %244 = vector.load %arg4[%c0_291, %c3_292, %c1_293, %c8_294] : memref<1x5x10x16xf32, #tpu.memory_space<vmem>>, vector<1x1x8x8xf32>
    %245 = vector.shape_cast %244 : vector<1x1x8x8xf32> to vector<8x8xf32>
    %246 = vector.shape_cast %220 : vector<8x8xf32> to vector<1x1x8x8xf32>
    tpu.vector_store %arg4[%c0_291, %c3_292, %c1_293, %c8_294], %246 {strides = array<i32>} : memref<1x5x10x16xf32, #tpu.memory_space<vmem>>, vector<1x1x8x8xf32>,
    %c0_295 = arith.constant 0 : index
    %c4_296 = arith.constant 4 : index
    %c1_297 = arith.constant 1 : index
    %c0_298 = arith.constant 0 : index
    %247 = vector.load %arg4[%c0_295, %c4_296, %c1_297, %c0_298] : memref<1x5x10x16xf32, #tpu.memory_space<vmem>>, vector<1x1x8x8xf32>
    %248 = vector.shape_cast %247 : vector<1x1x8x8xf32> to vector<8x8xf32>
    %249 = vector.shape_cast %225 : vector<8x8xf32> to vector<1x1x8x8xf32>
    tpu.vector_store %arg4[%c0_295, %c4_296, %c1_297, %c0_298], %249 {strides = array<i32>} : memref<1x5x10x16xf32, #tpu.memory_space<vmem>>, vector<1x1x8x8xf32>,
    %c0_299 = arith.constant 0 : index
    %c0_300 = arith.constant 0 : index
    %c0_301 = arith.constant 0 : index
    %c0_302 = arith.constant 0 : index
    %250 = vector.load %arg4[%c0_299, %c0_300, %c0_301, %c0_302] : memref<1x5x10x16xf32, #tpu.memory_space<vmem>>, vector<1x5x10x16xf32>
    %251 = arith.truncf %250 : vector<1x5x10x16xf32> to vector<1x5x10x16xbf16>
    %c0_303 = arith.constant 0 : index
    %c0_304 = arith.constant 0 : index
    %c0_305 = arith.constant 0 : index
    %c0_306 = arith.constant 0 : index
    %252 = vector.load %arg3[%c0_303, %c0_304, %c0_305, %c0_306] : memref<1x5x10x16xbf16, #tpu.memory_space<vmem>>, vector<1x5x10x16xbf16>
    tpu.vector_store %arg3[%c0_303, %c0_304, %c0_305, %c0_306], %251 {strides = array<i32>} : memref<1x5x10x16xbf16, #tpu.memory_space<vmem>>, vector<1x5x10x16xbf16>,
    return
  }
  func.func @transform_0(%arg0: i32) -> (i32, i32, i32, i32) {
    %c0_i32 = arith.constant 0 : i32
    %c0_i32_0 = arith.constant 0 : i32
    %c0_i32_1 = arith.constant 0 : i32
    %c0_i32_2 = arith.constant 0 : i32
    return %arg0, %c0_i32, %c0_i32_0, %c0_i32_1 : i32, i32, i32, i32
  }
  func.func @transform_1(%arg0: i32) -> (i32, i32, i32) {
    %c0_i32 = arith.constant 0 : i32
    %c0_i32_0 = arith.constant 0 : i32
    %c0_i32_1 = arith.constant 0 : i32
    %c0_i32_2 = arith.constant 0 : i32
    return %c0_i32, %c0_i32_0, %c0_i32_1 : i32, i32, i32
  }
  func.func @transform_2(%arg0: i32) -> (i32, i32, i32, i32) {
    %c0_i32 = arith.constant 0 : i32
    %c0_i32_0 = arith.constant 0 : i32
    %c0_i32_1 = arith.constant 0 : i32
    %c0_i32_2 = arith.constant 0 : i32
    return %arg0, %c0_i32, %c0_i32_0, %c0_i32_1 : i32, i32, i32, i32
  }
}

module attributes {stable_mosaic.version = 11 : i64} {
  func.func @_pyramid_conv_stats_kernel(%arg0: i32, %arg1: memref<1x5x5x32xbf16, #tpu.memory_space<vmem>>, %arg2: memref<4x32x16xbf16, #tpu.memory_space<vmem>>, %arg3: memref<1x4x4x16xf32, #tpu.memory_space<vmem>>, %arg4: memref<1x2x16xf32, #tpu.memory_space<vmem>>) attributes {dimension_semantics = [#tpu.dimension_semantics<parallel>], iteration_bounds = array<i64: 2>, scalar_prefetch = 0 : i64, scratch_operands = 0 : i64, tpu.core_type = #tpu.core_type<tc>, window_params = [{transform_indices = @transform_0, window_bounds = array<i64: 1, 5, 5, 32>}, {pipeline_mode = #tpu.pipeline_mode<synchronous>, transform_indices = @transform_1, window_bounds = array<i64: 4, 32, 16>}, {transform_indices = @transform_2, window_bounds = array<i64: 1, 4, 4, 16>}, {transform_indices = @transform_3, window_bounds = array<i64: 1, 2, 16>}]} {
    %c0 = arith.constant 0 : index
    %c0_0 = arith.constant 0 : index
    %c0_1 = arith.constant 0 : index
    %c0_2 = arith.constant 0 : index
    %0 = vector.load %arg1[%c0, %c0_0, %c0_1, %c0_2] : memref<1x5x5x32xbf16, #tpu.memory_space<vmem>>, vector<1x1x4x32xbf16>
    %1 = vector.shape_cast %0 : vector<1x1x4x32xbf16> to vector<4x32xbf16>
    %c0_3 = arith.constant 0 : index
    %c0_4 = arith.constant 0 : index
    %c0_5 = arith.constant 0 : index
    %2 = vector.load %arg2[%c0_3, %c0_4, %c0_5] : memref<4x32x16xbf16, #tpu.memory_space<vmem>>, vector<1x32x16xbf16>
    %3 = vector.shape_cast %2 : vector<1x32x16xbf16> to vector<32x16xbf16>
    %cst = arith.constant dense<0.000000e+00> : vector<4x16xf32>
    %4 = tpu.matmul %1, %3, %cst {dimension_numbers = #tpu.dot_dimension_numbers<[1], [0], [0], [1], [0, 0, 1, 1], [], []>} : vector<4x32xbf16>, vector<32x16xbf16>, vector<4x16xf32> -> vector<4x16xf32>
    %c0_6 = arith.constant 0 : index
    %c0_7 = arith.constant 0 : index
    %c1 = arith.constant 1 : index
    %c0_8 = arith.constant 0 : index
    %5 = vector.load %arg1[%c0_6, %c0_7, %c1, %c0_8] : memref<1x5x5x32xbf16, #tpu.memory_space<vmem>>, vector<1x1x4x32xbf16>
    %6 = vector.shape_cast %5 : vector<1x1x4x32xbf16> to vector<4x32xbf16>
    %c1_9 = arith.constant 1 : index
    %c0_10 = arith.constant 0 : index
    %c0_11 = arith.constant 0 : index
    %7 = vector.load %arg2[%c1_9, %c0_10, %c0_11] : memref<4x32x16xbf16, #tpu.memory_space<vmem>>, vector<1x32x16xbf16>
    %8 = vector.shape_cast %7 : vector<1x32x16xbf16> to vector<32x16xbf16>
    %cst_12 = arith.constant dense<0.000000e+00> : vector<4x16xf32>
    %9 = tpu.matmul %6, %8, %cst_12 {dimension_numbers = #tpu.dot_dimension_numbers<[1], [0], [0], [1], [0, 0, 1, 1], [], []>} : vector<4x32xbf16>, vector<32x16xbf16>, vector<4x16xf32> -> vector<4x16xf32>
    %10 = arith.addf %4, %9 : vector<4x16xf32>
    %c0_13 = arith.constant 0 : index
    %c1_14 = arith.constant 1 : index
    %c0_15 = arith.constant 0 : index
    %c0_16 = arith.constant 0 : index
    %11 = vector.load %arg1[%c0_13, %c1_14, %c0_15, %c0_16] : memref<1x5x5x32xbf16, #tpu.memory_space<vmem>>, vector<1x1x4x32xbf16>
    %12 = vector.shape_cast %11 : vector<1x1x4x32xbf16> to vector<4x32xbf16>
    %c2 = arith.constant 2 : index
    %c0_17 = arith.constant 0 : index
    %c0_18 = arith.constant 0 : index
    %13 = vector.load %arg2[%c2, %c0_17, %c0_18] : memref<4x32x16xbf16, #tpu.memory_space<vmem>>, vector<1x32x16xbf16>
    %14 = vector.shape_cast %13 : vector<1x32x16xbf16> to vector<32x16xbf16>
    %cst_19 = arith.constant dense<0.000000e+00> : vector<4x16xf32>
    %15 = tpu.matmul %12, %14, %cst_19 {dimension_numbers = #tpu.dot_dimension_numbers<[1], [0], [0], [1], [0, 0, 1, 1], [], []>} : vector<4x32xbf16>, vector<32x16xbf16>, vector<4x16xf32> -> vector<4x16xf32>
    %16 = arith.addf %10, %15 : vector<4x16xf32>
    %c0_20 = arith.constant 0 : index
    %c1_21 = arith.constant 1 : index
    %c1_22 = arith.constant 1 : index
    %c0_23 = arith.constant 0 : index
    %17 = vector.load %arg1[%c0_20, %c1_21, %c1_22, %c0_23] : memref<1x5x5x32xbf16, #tpu.memory_space<vmem>>, vector<1x1x4x32xbf16>
    %18 = vector.shape_cast %17 : vector<1x1x4x32xbf16> to vector<4x32xbf16>
    %c3 = arith.constant 3 : index
    %c0_24 = arith.constant 0 : index
    %c0_25 = arith.constant 0 : index
    %19 = vector.load %arg2[%c3, %c0_24, %c0_25] : memref<4x32x16xbf16, #tpu.memory_space<vmem>>, vector<1x32x16xbf16>
    %20 = vector.shape_cast %19 : vector<1x32x16xbf16> to vector<32x16xbf16>
    %cst_26 = arith.constant dense<0.000000e+00> : vector<4x16xf32>
    %21 = tpu.matmul %18, %20, %cst_26 {dimension_numbers = #tpu.dot_dimension_numbers<[1], [0], [0], [1], [0, 0, 1, 1], [], []>} : vector<4x32xbf16>, vector<32x16xbf16>, vector<4x16xf32> -> vector<4x16xf32>
    %22 = arith.addf %16, %21 : vector<4x16xf32>
    %c0_27 = arith.constant 0 : index
    %c1_28 = arith.constant 1 : index
    %c0_29 = arith.constant 0 : index
    %c0_30 = arith.constant 0 : index
    %23 = vector.load %arg1[%c0_27, %c1_28, %c0_29, %c0_30] : memref<1x5x5x32xbf16, #tpu.memory_space<vmem>>, vector<1x1x4x32xbf16>
    %24 = vector.shape_cast %23 : vector<1x1x4x32xbf16> to vector<4x32xbf16>
    %c0_31 = arith.constant 0 : index
    %c0_32 = arith.constant 0 : index
    %c0_33 = arith.constant 0 : index
    %25 = vector.load %arg2[%c0_31, %c0_32, %c0_33] : memref<4x32x16xbf16, #tpu.memory_space<vmem>>, vector<1x32x16xbf16>
    %26 = vector.shape_cast %25 : vector<1x32x16xbf16> to vector<32x16xbf16>
    %cst_34 = arith.constant dense<0.000000e+00> : vector<4x16xf32>
    %27 = tpu.matmul %24, %26, %cst_34 {dimension_numbers = #tpu.dot_dimension_numbers<[1], [0], [0], [1], [0, 0, 1, 1], [], []>} : vector<4x32xbf16>, vector<32x16xbf16>, vector<4x16xf32> -> vector<4x16xf32>
    %c0_35 = arith.constant 0 : index
    %c1_36 = arith.constant 1 : index
    %c1_37 = arith.constant 1 : index
    %c0_38 = arith.constant 0 : index
    %28 = vector.load %arg1[%c0_35, %c1_36, %c1_37, %c0_38] : memref<1x5x5x32xbf16, #tpu.memory_space<vmem>>, vector<1x1x4x32xbf16>
    %29 = vector.shape_cast %28 : vector<1x1x4x32xbf16> to vector<4x32xbf16>
    %c1_39 = arith.constant 1 : index
    %c0_40 = arith.constant 0 : index
    %c0_41 = arith.constant 0 : index
    %30 = vector.load %arg2[%c1_39, %c0_40, %c0_41] : memref<4x32x16xbf16, #tpu.memory_space<vmem>>, vector<1x32x16xbf16>
    %31 = vector.shape_cast %30 : vector<1x32x16xbf16> to vector<32x16xbf16>
    %cst_42 = arith.constant dense<0.000000e+00> : vector<4x16xf32>
    %32 = tpu.matmul %29, %31, %cst_42 {dimension_numbers = #tpu.dot_dimension_numbers<[1], [0], [0], [1], [0, 0, 1, 1], [], []>} : vector<4x32xbf16>, vector<32x16xbf16>, vector<4x16xf32> -> vector<4x16xf32>
    %33 = arith.addf %27, %32 : vector<4x16xf32>
    %c0_43 = arith.constant 0 : index
    %c2_44 = arith.constant 2 : index
    %c0_45 = arith.constant 0 : index
    %c0_46 = arith.constant 0 : index
    %34 = vector.load %arg1[%c0_43, %c2_44, %c0_45, %c0_46] : memref<1x5x5x32xbf16, #tpu.memory_space<vmem>>, vector<1x1x4x32xbf16>
    %35 = vector.shape_cast %34 : vector<1x1x4x32xbf16> to vector<4x32xbf16>
    %c2_47 = arith.constant 2 : index
    %c0_48 = arith.constant 0 : index
    %c0_49 = arith.constant 0 : index
    %36 = vector.load %arg2[%c2_47, %c0_48, %c0_49] : memref<4x32x16xbf16, #tpu.memory_space<vmem>>, vector<1x32x16xbf16>
    %37 = vector.shape_cast %36 : vector<1x32x16xbf16> to vector<32x16xbf16>
    %cst_50 = arith.constant dense<0.000000e+00> : vector<4x16xf32>
    %38 = tpu.matmul %35, %37, %cst_50 {dimension_numbers = #tpu.dot_dimension_numbers<[1], [0], [0], [1], [0, 0, 1, 1], [], []>} : vector<4x32xbf16>, vector<32x16xbf16>, vector<4x16xf32> -> vector<4x16xf32>
    %39 = arith.addf %33, %38 : vector<4x16xf32>
    %c0_51 = arith.constant 0 : index
    %c2_52 = arith.constant 2 : index
    %c1_53 = arith.constant 1 : index
    %c0_54 = arith.constant 0 : index
    %40 = vector.load %arg1[%c0_51, %c2_52, %c1_53, %c0_54] : memref<1x5x5x32xbf16, #tpu.memory_space<vmem>>, vector<1x1x4x32xbf16>
    %41 = vector.shape_cast %40 : vector<1x1x4x32xbf16> to vector<4x32xbf16>
    %c3_55 = arith.constant 3 : index
    %c0_56 = arith.constant 0 : index
    %c0_57 = arith.constant 0 : index
    %42 = vector.load %arg2[%c3_55, %c0_56, %c0_57] : memref<4x32x16xbf16, #tpu.memory_space<vmem>>, vector<1x32x16xbf16>
    %43 = vector.shape_cast %42 : vector<1x32x16xbf16> to vector<32x16xbf16>
    %cst_58 = arith.constant dense<0.000000e+00> : vector<4x16xf32>
    %44 = tpu.matmul %41, %43, %cst_58 {dimension_numbers = #tpu.dot_dimension_numbers<[1], [0], [0], [1], [0, 0, 1, 1], [], []>} : vector<4x32xbf16>, vector<32x16xbf16>, vector<4x16xf32> -> vector<4x16xf32>
    %45 = arith.addf %39, %44 : vector<4x16xf32>
    %c0_59 = arith.constant 0 : index
    %c2_60 = arith.constant 2 : index
    %c0_61 = arith.constant 0 : index
    %c0_62 = arith.constant 0 : index
    %46 = vector.load %arg1[%c0_59, %c2_60, %c0_61, %c0_62] : memref<1x5x5x32xbf16, #tpu.memory_space<vmem>>, vector<1x1x4x32xbf16>
    %47 = vector.shape_cast %46 : vector<1x1x4x32xbf16> to vector<4x32xbf16>
    %c0_63 = arith.constant 0 : index
    %c0_64 = arith.constant 0 : index
    %c0_65 = arith.constant 0 : index
    %48 = vector.load %arg2[%c0_63, %c0_64, %c0_65] : memref<4x32x16xbf16, #tpu.memory_space<vmem>>, vector<1x32x16xbf16>
    %49 = vector.shape_cast %48 : vector<1x32x16xbf16> to vector<32x16xbf16>
    %cst_66 = arith.constant dense<0.000000e+00> : vector<4x16xf32>
    %50 = tpu.matmul %47, %49, %cst_66 {dimension_numbers = #tpu.dot_dimension_numbers<[1], [0], [0], [1], [0, 0, 1, 1], [], []>} : vector<4x32xbf16>, vector<32x16xbf16>, vector<4x16xf32> -> vector<4x16xf32>
    %c0_67 = arith.constant 0 : index
    %c2_68 = arith.constant 2 : index
    %c1_69 = arith.constant 1 : index
    %c0_70 = arith.constant 0 : index
    %51 = vector.load %arg1[%c0_67, %c2_68, %c1_69, %c0_70] : memref<1x5x5x32xbf16, #tpu.memory_space<vmem>>, vector<1x1x4x32xbf16>
    %52 = vector.shape_cast %51 : vector<1x1x4x32xbf16> to vector<4x32xbf16>
    %c1_71 = arith.constant 1 : index
    %c0_72 = arith.constant 0 : index
    %c0_73 = arith.constant 0 : index
    %53 = vector.load %arg2[%c1_71, %c0_72, %c0_73] : memref<4x32x16xbf16, #tpu.memory_space<vmem>>, vector<1x32x16xbf16>
    %54 = vector.shape_cast %53 : vector<1x32x16xbf16> to vector<32x16xbf16>
    %cst_74 = arith.constant dense<0.000000e+00> : vector<4x16xf32>
    %55 = tpu.matmul %52, %54, %cst_74 {dimension_numbers = #tpu.dot_dimension_numbers<[1], [0], [0], [1], [0, 0, 1, 1], [], []>} : vector<4x32xbf16>, vector<32x16xbf16>, vector<4x16xf32> -> vector<4x16xf32>
    %56 = arith.addf %50, %55 : vector<4x16xf32>
    %c0_75 = arith.constant 0 : index
    %c3_76 = arith.constant 3 : index
    %c0_77 = arith.constant 0 : index
    %c0_78 = arith.constant 0 : index
    %57 = vector.load %arg1[%c0_75, %c3_76, %c0_77, %c0_78] : memref<1x5x5x32xbf16, #tpu.memory_space<vmem>>, vector<1x1x4x32xbf16>
    %58 = vector.shape_cast %57 : vector<1x1x4x32xbf16> to vector<4x32xbf16>
    %c2_79 = arith.constant 2 : index
    %c0_80 = arith.constant 0 : index
    %c0_81 = arith.constant 0 : index
    %59 = vector.load %arg2[%c2_79, %c0_80, %c0_81] : memref<4x32x16xbf16, #tpu.memory_space<vmem>>, vector<1x32x16xbf16>
    %60 = vector.shape_cast %59 : vector<1x32x16xbf16> to vector<32x16xbf16>
    %cst_82 = arith.constant dense<0.000000e+00> : vector<4x16xf32>
    %61 = tpu.matmul %58, %60, %cst_82 {dimension_numbers = #tpu.dot_dimension_numbers<[1], [0], [0], [1], [0, 0, 1, 1], [], []>} : vector<4x32xbf16>, vector<32x16xbf16>, vector<4x16xf32> -> vector<4x16xf32>
    %62 = arith.addf %56, %61 : vector<4x16xf32>
    %c0_83 = arith.constant 0 : index
    %c3_84 = arith.constant 3 : index
    %c1_85 = arith.constant 1 : index
    %c0_86 = arith.constant 0 : index
    %63 = vector.load %arg1[%c0_83, %c3_84, %c1_85, %c0_86] : memref<1x5x5x32xbf16, #tpu.memory_space<vmem>>, vector<1x1x4x32xbf16>
    %64 = vector.shape_cast %63 : vector<1x1x4x32xbf16> to vector<4x32xbf16>
    %c3_87 = arith.constant 3 : index
    %c0_88 = arith.constant 0 : index
    %c0_89 = arith.constant 0 : index
    %65 = vector.load %arg2[%c3_87, %c0_88, %c0_89] : memref<4x32x16xbf16, #tpu.memory_space<vmem>>, vector<1x32x16xbf16>
    %66 = vector.shape_cast %65 : vector<1x32x16xbf16> to vector<32x16xbf16>
    %cst_90 = arith.constant dense<0.000000e+00> : vector<4x16xf32>
    %67 = tpu.matmul %64, %66, %cst_90 {dimension_numbers = #tpu.dot_dimension_numbers<[1], [0], [0], [1], [0, 0, 1, 1], [], []>} : vector<4x32xbf16>, vector<32x16xbf16>, vector<4x16xf32> -> vector<4x16xf32>
    %68 = arith.addf %62, %67 : vector<4x16xf32>
    %c0_91 = arith.constant 0 : index
    %c3_92 = arith.constant 3 : index
    %c0_93 = arith.constant 0 : index
    %c0_94 = arith.constant 0 : index
    %69 = vector.load %arg1[%c0_91, %c3_92, %c0_93, %c0_94] : memref<1x5x5x32xbf16, #tpu.memory_space<vmem>>, vector<1x1x4x32xbf16>
    %70 = vector.shape_cast %69 : vector<1x1x4x32xbf16> to vector<4x32xbf16>
    %c0_95 = arith.constant 0 : index
    %c0_96 = arith.constant 0 : index
    %c0_97 = arith.constant 0 : index
    %71 = vector.load %arg2[%c0_95, %c0_96, %c0_97] : memref<4x32x16xbf16, #tpu.memory_space<vmem>>, vector<1x32x16xbf16>
    %72 = vector.shape_cast %71 : vector<1x32x16xbf16> to vector<32x16xbf16>
    %cst_98 = arith.constant dense<0.000000e+00> : vector<4x16xf32>
    %73 = tpu.matmul %70, %72, %cst_98 {dimension_numbers = #tpu.dot_dimension_numbers<[1], [0], [0], [1], [0, 0, 1, 1], [], []>} : vector<4x32xbf16>, vector<32x16xbf16>, vector<4x16xf32> -> vector<4x16xf32>
    %c0_99 = arith.constant 0 : index
    %c3_100 = arith.constant 3 : index
    %c1_101 = arith.constant 1 : index
    %c0_102 = arith.constant 0 : index
    %74 = vector.load %arg1[%c0_99, %c3_100, %c1_101, %c0_102] : memref<1x5x5x32xbf16, #tpu.memory_space<vmem>>, vector<1x1x4x32xbf16>
    %75 = vector.shape_cast %74 : vector<1x1x4x32xbf16> to vector<4x32xbf16>
    %c1_103 = arith.constant 1 : index
    %c0_104 = arith.constant 0 : index
    %c0_105 = arith.constant 0 : index
    %76 = vector.load %arg2[%c1_103, %c0_104, %c0_105] : memref<4x32x16xbf16, #tpu.memory_space<vmem>>, vector<1x32x16xbf16>
    %77 = vector.shape_cast %76 : vector<1x32x16xbf16> to vector<32x16xbf16>
    %cst_106 = arith.constant dense<0.000000e+00> : vector<4x16xf32>
    %78 = tpu.matmul %75, %77, %cst_106 {dimension_numbers = #tpu.dot_dimension_numbers<[1], [0], [0], [1], [0, 0, 1, 1], [], []>} : vector<4x32xbf16>, vector<32x16xbf16>, vector<4x16xf32> -> vector<4x16xf32>
    %79 = arith.addf %73, %78 : vector<4x16xf32>
    %c0_107 = arith.constant 0 : index
    %c4 = arith.constant 4 : index
    %c0_108 = arith.constant 0 : index
    %c0_109 = arith.constant 0 : index
    %80 = vector.load %arg1[%c0_107, %c4, %c0_108, %c0_109] : memref<1x5x5x32xbf16, #tpu.memory_space<vmem>>, vector<1x1x4x32xbf16>
    %81 = vector.shape_cast %80 : vector<1x1x4x32xbf16> to vector<4x32xbf16>
    %c2_110 = arith.constant 2 : index
    %c0_111 = arith.constant 0 : index
    %c0_112 = arith.constant 0 : index
    %82 = vector.load %arg2[%c2_110, %c0_111, %c0_112] : memref<4x32x16xbf16, #tpu.memory_space<vmem>>, vector<1x32x16xbf16>
    %83 = vector.shape_cast %82 : vector<1x32x16xbf16> to vector<32x16xbf16>
    %cst_113 = arith.constant dense<0.000000e+00> : vector<4x16xf32>
    %84 = tpu.matmul %81, %83, %cst_113 {dimension_numbers = #tpu.dot_dimension_numbers<[1], [0], [0], [1], [0, 0, 1, 1], [], []>} : vector<4x32xbf16>, vector<32x16xbf16>, vector<4x16xf32> -> vector<4x16xf32>
    %85 = arith.addf %79, %84 : vector<4x16xf32>
    %c0_114 = arith.constant 0 : index
    %c4_115 = arith.constant 4 : index
    %c1_116 = arith.constant 1 : index
    %c0_117 = arith.constant 0 : index
    %86 = vector.load %arg1[%c0_114, %c4_115, %c1_116, %c0_117] : memref<1x5x5x32xbf16, #tpu.memory_space<vmem>>, vector<1x1x4x32xbf16>
    %87 = vector.shape_cast %86 : vector<1x1x4x32xbf16> to vector<4x32xbf16>
    %c3_118 = arith.constant 3 : index
    %c0_119 = arith.constant 0 : index
    %c0_120 = arith.constant 0 : index
    %88 = vector.load %arg2[%c3_118, %c0_119, %c0_120] : memref<4x32x16xbf16, #tpu.memory_space<vmem>>, vector<1x32x16xbf16>
    %89 = vector.shape_cast %88 : vector<1x32x16xbf16> to vector<32x16xbf16>
    %cst_121 = arith.constant dense<0.000000e+00> : vector<4x16xf32>
    %90 = tpu.matmul %87, %89, %cst_121 {dimension_numbers = #tpu.dot_dimension_numbers<[1], [0], [0], [1], [0, 0, 1, 1], [], []>} : vector<4x32xbf16>, vector<32x16xbf16>, vector<4x16xf32> -> vector<4x16xf32>
    %91 = arith.addf %85, %90 : vector<4x16xf32>
    %c0_122 = arith.constant 0 : index
    %c0_123 = arith.constant 0 : index
    %c0_124 = arith.constant 0 : index
    %c0_125 = arith.constant 0 : index
    %92 = vector.load %arg3[%c0_122, %c0_123, %c0_124, %c0_125] : memref<1x4x4x16xf32, #tpu.memory_space<vmem>>, vector<1x1x4x16xf32>
    %93 = vector.shape_cast %92 : vector<1x1x4x16xf32> to vector<4x16xf32>
    %94 = vector.shape_cast %22 : vector<4x16xf32> to vector<1x1x4x16xf32>
    tpu.vector_store %arg3[%c0_122, %c0_123, %c0_124, %c0_125], %94 {strides = array<i32>} : memref<1x4x4x16xf32, #tpu.memory_space<vmem>>, vector<1x1x4x16xf32>,
    %95 = arith.mulf %22, %22 : vector<4x16xf32>
    %c0_126 = arith.constant 0 : index
    %c1_127 = arith.constant 1 : index
    %c0_128 = arith.constant 0 : index
    %c0_129 = arith.constant 0 : index
    %96 = vector.load %arg3[%c0_126, %c1_127, %c0_128, %c0_129] : memref<1x4x4x16xf32, #tpu.memory_space<vmem>>, vector<1x1x4x16xf32>
    %97 = vector.shape_cast %96 : vector<1x1x4x16xf32> to vector<4x16xf32>
    %98 = vector.shape_cast %45 : vector<4x16xf32> to vector<1x1x4x16xf32>
    tpu.vector_store %arg3[%c0_126, %c1_127, %c0_128, %c0_129], %98 {strides = array<i32>} : memref<1x4x4x16xf32, #tpu.memory_space<vmem>>, vector<1x1x4x16xf32>,
    %99 = arith.addf %22, %45 : vector<4x16xf32>
    %100 = arith.mulf %45, %45 : vector<4x16xf32>
    %101 = arith.addf %95, %100 : vector<4x16xf32>
    %c0_130 = arith.constant 0 : index
    %c2_131 = arith.constant 2 : index
    %c0_132 = arith.constant 0 : index
    %c0_133 = arith.constant 0 : index
    %102 = vector.load %arg3[%c0_130, %c2_131, %c0_132, %c0_133] : memref<1x4x4x16xf32, #tpu.memory_space<vmem>>, vector<1x1x4x16xf32>
    %103 = vector.shape_cast %102 : vector<1x1x4x16xf32> to vector<4x16xf32>
    %104 = vector.shape_cast %68 : vector<4x16xf32> to vector<1x1x4x16xf32>
    tpu.vector_store %arg3[%c0_130, %c2_131, %c0_132, %c0_133], %104 {strides = array<i32>} : memref<1x4x4x16xf32, #tpu.memory_space<vmem>>, vector<1x1x4x16xf32>,
    %105 = arith.addf %99, %68 : vector<4x16xf32>
    %106 = arith.mulf %68, %68 : vector<4x16xf32>
    %107 = arith.addf %101, %106 : vector<4x16xf32>
    %c0_134 = arith.constant 0 : index
    %c3_135 = arith.constant 3 : index
    %c0_136 = arith.constant 0 : index
    %c0_137 = arith.constant 0 : index
    %108 = vector.load %arg3[%c0_134, %c3_135, %c0_136, %c0_137] : memref<1x4x4x16xf32, #tpu.memory_space<vmem>>, vector<1x1x4x16xf32>
    %109 = vector.shape_cast %108 : vector<1x1x4x16xf32> to vector<4x16xf32>
    %110 = vector.shape_cast %91 : vector<4x16xf32> to vector<1x1x4x16xf32>
    tpu.vector_store %arg3[%c0_134, %c3_135, %c0_136, %c0_137], %110 {strides = array<i32>} : memref<1x4x4x16xf32, #tpu.memory_space<vmem>>, vector<1x1x4x16xf32>,
    %111 = arith.addf %105, %91 : vector<4x16xf32>
    %112 = arith.mulf %91, %91 : vector<4x16xf32>
    %113 = arith.addf %107, %112 : vector<4x16xf32>
    %cst_138 = arith.constant dense<0.000000e+00> : vector<16xf32>
    %114 = vector.multi_reduction <add>, %111, %cst_138 [0] : vector<4x16xf32> to vector<16xf32>
    %115 = vector.shape_cast %114 : vector<16xf32> to vector<1x16xf32>
    %c0_139 = arith.constant 0 : index
    %c0_140 = arith.constant 0 : index
    %c0_141 = arith.constant 0 : index
    %116 = vector.load %arg4[%c0_139, %c0_140, %c0_141] : memref<1x2x16xf32, #tpu.memory_space<vmem>>, vector<1x1x16xf32>
    %117 = vector.shape_cast %116 : vector<1x1x16xf32> to vector<1x16xf32>
    %118 = vector.shape_cast %115 : vector<1x16xf32> to vector<1x1x16xf32>
    tpu.vector_store %arg4[%c0_139, %c0_140, %c0_141], %118 {strides = array<i32>} : memref<1x2x16xf32, #tpu.memory_space<vmem>>, vector<1x1x16xf32>,
    %cst_142 = arith.constant dense<0.000000e+00> : vector<16xf32>
    %119 = vector.multi_reduction <add>, %113, %cst_142 [0] : vector<4x16xf32> to vector<16xf32>
    %120 = vector.shape_cast %119 : vector<16xf32> to vector<1x16xf32>
    %c0_143 = arith.constant 0 : index
    %c1_144 = arith.constant 1 : index
    %c0_145 = arith.constant 0 : index
    %121 = vector.load %arg4[%c0_143, %c1_144, %c0_145] : memref<1x2x16xf32, #tpu.memory_space<vmem>>, vector<1x1x16xf32>
    %122 = vector.shape_cast %121 : vector<1x1x16xf32> to vector<1x16xf32>
    %123 = vector.shape_cast %120 : vector<1x16xf32> to vector<1x1x16xf32>
    tpu.vector_store %arg4[%c0_143, %c1_144, %c0_145], %123 {strides = array<i32>} : memref<1x2x16xf32, #tpu.memory_space<vmem>>, vector<1x1x16xf32>,
    return
  }
  func.func @transform_0(%arg0: i32) -> (i32, i32, i32, i32) {
    %c0_i32 = arith.constant 0 : i32
    %c0_i32_0 = arith.constant 0 : i32
    %c0_i32_1 = arith.constant 0 : i32
    %c0_i32_2 = arith.constant 0 : i32
    return %arg0, %c0_i32, %c0_i32_0, %c0_i32_1 : i32, i32, i32, i32
  }
  func.func @transform_1(%arg0: i32) -> (i32, i32, i32) {
    %c0_i32 = arith.constant 0 : i32
    %c0_i32_0 = arith.constant 0 : i32
    %c0_i32_1 = arith.constant 0 : i32
    %c0_i32_2 = arith.constant 0 : i32
    return %c0_i32, %c0_i32_0, %c0_i32_1 : i32, i32, i32
  }
  func.func @transform_2(%arg0: i32) -> (i32, i32, i32, i32) {
    %c0_i32 = arith.constant 0 : i32
    %c0_i32_0 = arith.constant 0 : i32
    %c0_i32_1 = arith.constant 0 : i32
    %c0_i32_2 = arith.constant 0 : i32
    return %arg0, %c0_i32, %c0_i32_0, %c0_i32_1 : i32, i32, i32, i32
  }
  func.func @transform_3(%arg0: i32) -> (i32, i32, i32) {
    %c0_i32 = arith.constant 0 : i32
    %c0_i32_0 = arith.constant 0 : i32
    %c0_i32_1 = arith.constant 0 : i32
    return %arg0, %c0_i32, %c0_i32_0 : i32, i32, i32
  }
}

module attributes {stable_mosaic.version = 11 : i64} {
  func.func @_bn_lrelu_final_kernel(%arg0: i32, %arg1: memref<1x4x4x16xf32, #tpu.memory_space<vmem>>, %arg2: memref<1x16xf32, #tpu.memory_space<vmem>>, %arg3: memref<1x16xf32, #tpu.memory_space<vmem>>, %arg4: memref<3x3x16xf32, #tpu.memory_space<vmem>>, %arg5: memref<1x1x1x1xf32, #tpu.memory_space<vmem>>) attributes {dimension_semantics = [#tpu.dimension_semantics<parallel>], iteration_bounds = array<i64: 2>, scalar_prefetch = 0 : i64, scratch_operands = 0 : i64, tpu.core_type = #tpu.core_type<tc>, window_params = [{transform_indices = @transform_0, window_bounds = array<i64: 1, 4, 4, 16>}, {pipeline_mode = #tpu.pipeline_mode<synchronous>, transform_indices = @transform_1, window_bounds = array<i64: 1, 16>}, {pipeline_mode = #tpu.pipeline_mode<synchronous>, transform_indices = @transform_2, window_bounds = array<i64: 1, 16>}, {pipeline_mode = #tpu.pipeline_mode<synchronous>, transform_indices = @transform_3, window_bounds = array<i64: 3, 3, 16>}, {transform_indices = @transform_4, window_bounds = array<i64: 1, 1, 1, 1>}]} {
    %c0 = arith.constant 0 : index
    %c0_0 = arith.constant 0 : index
    %0 = vector.load %arg2[%c0, %c0_0] : memref<1x16xf32, #tpu.memory_space<vmem>>, vector<1x16xf32>
    %c0_1 = arith.constant 0 : index
    %c0_2 = arith.constant 0 : index
    %1 = vector.load %arg3[%c0_1, %c0_2] : memref<1x16xf32, #tpu.memory_space<vmem>>, vector<1x16xf32>
    %cst = arith.constant 0.000000e+00 : f32
    %2 = vector.broadcast %cst : f32 to vector<1x16xf32>
    %c0_3 = arith.constant 0 : index
    %c0_4 = arith.constant 0 : index
    %c0_5 = arith.constant 0 : index
    %c0_6 = arith.constant 0 : index
    %3 = vector.load %arg1[%c0_3, %c0_4, %c0_5, %c0_6] : memref<1x4x4x16xf32, #tpu.memory_space<vmem>>, vector<1x1x3x16xf32>
    %4 = vector.shape_cast %3 : vector<1x1x3x16xf32> to vector<3x16xf32>
    %5 = vector.broadcast %0 : vector<1x16xf32> to vector<3x16xf32>
    %6 = arith.mulf %4, %5 : vector<3x16xf32>
    %7 = vector.broadcast %1 : vector<1x16xf32> to vector<3x16xf32>
    %8 = arith.addf %6, %7 : vector<3x16xf32>
    %cst_7 = arith.constant 0.000000e+00 : f32
    %9 = vector.broadcast %cst_7 : f32 to vector<3x16xf32>
    %10 = arith.cmpf oge, %8, %9 : vector<3x16xf32>
    %cst_8 = arith.constant 2.000000e-01 : f32
    %11 = vector.broadcast %cst_8 : f32 to vector<3x16xf32>
    %12 = arith.mulf %11, %8 : vector<3x16xf32>
    %13 = arith.select %10, %8, %12 : vector<3x16xi1>, vector<3x16xf32>
    %c0_9 = arith.constant 0 : index
    %c0_10 = arith.constant 0 : index
    %c0_11 = arith.constant 0 : index
    %14 = vector.load %arg4[%c0_9, %c0_10, %c0_11] : memref<3x3x16xf32, #tpu.memory_space<vmem>>, vector<1x3x16xf32>
    %15 = vector.shape_cast %14 : vector<1x3x16xf32> to vector<3x16xf32>
    %16 = arith.mulf %13, %15 : vector<3x16xf32>
    %cst_12 = arith.constant dense<0.000000e+00> : vector<16xf32>
    %17 = vector.multi_reduction <add>, %16, %cst_12 [0] : vector<3x16xf32> to vector<16xf32>
    %18 = vector.shape_cast %17 : vector<16xf32> to vector<1x16xf32>
    %19 = arith.addf %2, %18 : vector<1x16xf32>
    %c0_13 = arith.constant 0 : index
    %c1 = arith.constant 1 : index
    %c0_14 = arith.constant 0 : index
    %c0_15 = arith.constant 0 : index
    %20 = vector.load %arg1[%c0_13, %c1, %c0_14, %c0_15] : memref<1x4x4x16xf32, #tpu.memory_space<vmem>>, vector<1x1x3x16xf32>
    %21 = vector.shape_cast %20 : vector<1x1x3x16xf32> to vector<3x16xf32>
    %22 = vector.broadcast %0 : vector<1x16xf32> to vector<3x16xf32>
    %23 = arith.mulf %21, %22 : vector<3x16xf32>
    %24 = vector.broadcast %1 : vector<1x16xf32> to vector<3x16xf32>
    %25 = arith.addf %23, %24 : vector<3x16xf32>
    %cst_16 = arith.constant 0.000000e+00 : f32
    %26 = vector.broadcast %cst_16 : f32 to vector<3x16xf32>
    %27 = arith.cmpf oge, %25, %26 : vector<3x16xf32>
    %cst_17 = arith.constant 2.000000e-01 : f32
    %28 = vector.broadcast %cst_17 : f32 to vector<3x16xf32>
    %29 = arith.mulf %28, %25 : vector<3x16xf32>
    %30 = arith.select %27, %25, %29 : vector<3x16xi1>, vector<3x16xf32>
    %c1_18 = arith.constant 1 : index
    %c0_19 = arith.constant 0 : index
    %c0_20 = arith.constant 0 : index
    %31 = vector.load %arg4[%c1_18, %c0_19, %c0_20] : memref<3x3x16xf32, #tpu.memory_space<vmem>>, vector<1x3x16xf32>
    %32 = vector.shape_cast %31 : vector<1x3x16xf32> to vector<3x16xf32>
    %33 = arith.mulf %30, %32 : vector<3x16xf32>
    %cst_21 = arith.constant dense<0.000000e+00> : vector<16xf32>
    %34 = vector.multi_reduction <add>, %33, %cst_21 [0] : vector<3x16xf32> to vector<16xf32>
    %35 = vector.shape_cast %34 : vector<16xf32> to vector<1x16xf32>
    %36 = arith.addf %19, %35 : vector<1x16xf32>
    %c0_22 = arith.constant 0 : index
    %c2 = arith.constant 2 : index
    %c0_23 = arith.constant 0 : index
    %c0_24 = arith.constant 0 : index
    %37 = vector.load %arg1[%c0_22, %c2, %c0_23, %c0_24] : memref<1x4x4x16xf32, #tpu.memory_space<vmem>>, vector<1x1x3x16xf32>
    %38 = vector.shape_cast %37 : vector<1x1x3x16xf32> to vector<3x16xf32>
    %39 = vector.broadcast %0 : vector<1x16xf32> to vector<3x16xf32>
    %40 = arith.mulf %38, %39 : vector<3x16xf32>
    %41 = vector.broadcast %1 : vector<1x16xf32> to vector<3x16xf32>
    %42 = arith.addf %40, %41 : vector<3x16xf32>
    %cst_25 = arith.constant 0.000000e+00 : f32
    %43 = vector.broadcast %cst_25 : f32 to vector<3x16xf32>
    %44 = arith.cmpf oge, %42, %43 : vector<3x16xf32>
    %cst_26 = arith.constant 2.000000e-01 : f32
    %45 = vector.broadcast %cst_26 : f32 to vector<3x16xf32>
    %46 = arith.mulf %45, %42 : vector<3x16xf32>
    %47 = arith.select %44, %42, %46 : vector<3x16xi1>, vector<3x16xf32>
    %c2_27 = arith.constant 2 : index
    %c0_28 = arith.constant 0 : index
    %c0_29 = arith.constant 0 : index
    %48 = vector.load %arg4[%c2_27, %c0_28, %c0_29] : memref<3x3x16xf32, #tpu.memory_space<vmem>>, vector<1x3x16xf32>
    %49 = vector.shape_cast %48 : vector<1x3x16xf32> to vector<3x16xf32>
    %50 = arith.mulf %47, %49 : vector<3x16xf32>
    %cst_30 = arith.constant dense<0.000000e+00> : vector<16xf32>
    %51 = vector.multi_reduction <add>, %50, %cst_30 [0] : vector<3x16xf32> to vector<16xf32>
    %52 = vector.shape_cast %51 : vector<16xf32> to vector<1x16xf32>
    %53 = arith.addf %36, %52 : vector<1x16xf32>
    %cst_31 = arith.constant dense<0.000000e+00> : vector<1xf32>
    %54 = vector.multi_reduction <add>, %53, %cst_31 [1] : vector<1x16xf32> to vector<1xf32>
    %55 = vector.shape_cast %54 : vector<1xf32> to vector<1x1xf32>
    %c0_32 = arith.constant 0 : index
    %c0_33 = arith.constant 0 : index
    %c0_34 = arith.constant 0 : index
    %c0_35 = arith.constant 0 : index
    %56 = vector.load %arg5[%c0_32, %c0_33, %c0_34, %c0_35] : memref<1x1x1x1xf32, #tpu.memory_space<vmem>>, vector<1x1x1x1xf32>
    %57 = vector.shape_cast %56 : vector<1x1x1x1xf32> to vector<1x1xf32>
    %58 = vector.shape_cast %55 : vector<1x1xf32> to vector<1x1x1x1xf32>
    tpu.vector_store %arg5[%c0_32, %c0_33, %c0_34, %c0_35], %58 {strides = array<i32>} : memref<1x1x1x1xf32, #tpu.memory_space<vmem>>, vector<1x1x1x1xf32>,
    return
  }
  func.func @transform_0(%arg0: i32) -> (i32, i32, i32, i32) {
    %c0_i32 = arith.constant 0 : i32
    %c0_i32_0 = arith.constant 0 : i32
    %c0_i32_1 = arith.constant 0 : i32
    %c0_i32_2 = arith.constant 0 : i32
    return %arg0, %c0_i32, %c0_i32_0, %c0_i32_1 : i32, i32, i32, i32
  }
  func.func @transform_1(%arg0: i32) -> (i32, i32) {
    %c0_i32 = arith.constant 0 : i32
    %c0_i32_0 = arith.constant 0 : i32
    %c0_i32_1 = arith.constant 0 : i32
    return %c0_i32, %c0_i32_0 : i32, i32
  }
  func.func @transform_2(%arg0: i32) -> (i32, i32) {
    %c0_i32 = arith.constant 0 : i32
    %c0_i32_0 = arith.constant 0 : i32
    %c0_i32_1 = arith.constant 0 : i32
    return %c0_i32, %c0_i32_0 : i32, i32
  }
  func.func @transform_3(%arg0: i32) -> (i32, i32, i32) {
    %c0_i32 = arith.constant 0 : i32
    %c0_i32_0 = arith.constant 0 : i32
    %c0_i32_1 = arith.constant 0 : i32
    %c0_i32_2 = arith.constant 0 : i32
    return %c0_i32, %c0_i32_0, %c0_i32_1 : i32, i32, i32
  }
  func.func @transform_4(%arg0: i32) -> (i32, i32, i32, i32) {
    %c0_i32 = arith.constant 0 : i32
    %c0_i32_0 = arith.constant 0 : i32
    %c0_i32_1 = arith.constant 0 : i32
    %c0_i32_2 = arith.constant 0 : i32
    return %arg0, %c0_i32, %c0_i32_0, %c0_i32_1 : i32, i32, i32, i32
  }
}

</mosaic_0001>

<llo_original>
// kernel: dcgan_d_forward.5
$region0: #{dcgan_d_forward.5}
  #allocation0 [shape = 'u32[]', space=smem, size = 0x4, offset = 0x4, fixed_abs, tag = 'smem constant byte address 0x4 - core index']
  #allocation1 [shape = 'u32[144,128]{1,0:T(1,128)}', space=vmem, size = 0x12000, scoped, tag = 'internal scratch']
  %s0 = inlined_call_operand.vmem [shape: f32[2,4,4,16], index: 0, kind: input, shape index: {}]
  %s1 = inlined_call_operand.vmem [shape: f32[1,16], index: 1, kind: input, shape index: {}]
  %s2 = inlined_call_operand.vmem [shape: f32[1,16], index: 2, kind: input, shape index: {}]
  %s3 = inlined_call_operand.vmem [shape: f32[3,3,16], index: 3, kind: input, shape index: {}]
  %s4 = inlined_call_operand.vmem [shape: f32[2,1,1,1], index: 4, kind: output, shape index: {}]
  %s5 = sld [smem:[#allocation0]]
  $region49: #{dcgan_d_forward.5} parent=0
    _
  %s7 = ssub.s32 1, %s5
  %s8 = scalar_select 0, %s7, %s5
  loop: start=0, step=1, limit=4
  $region2: #{dcgan_d_forward.5} parent=0 // loop_pre_header
    _
  $region3: #{dcgan_d_forward.5} parent=0 // loop_header
    %s10 = sphi 0, %s14
    %p11 = scmp.ge.s32.totalorder %s10, 4
    %s20 = sphi 0, %s22
    %s23 = sphi 0, %s20
    %s24 = sphi 0, %s23
    %s40 = sphi 0, %s24
    %s44 = sphi 0, %s44
    %s46 = sphi 0, %s44
    %s47 = sphi 0, %s46
    %s61 = sphi 0, %s47
    %s65 = sphi 0, %s65
    %s67 = sphi 0, %s65
    %s68 = sphi 0, %s67
    %s82 = sphi 0, %s68
    %s86 = sphi 0, %s86
    %s88 = sphi 0, %s86
    %s89 = sphi 0, %s88
    %s103 = sphi 0, %s89
    %s109 = sphi 0, %s111
    %s112 = sphi 0, %s109
    %s113 = sphi 0, %s112
    %s129 = sphi 0, %s113
  $region4: #{dcgan_d_forward.5} parent=0 // loop_header_branch
    %13 = sbr.rel (%p11) target = $region8
  $region5: #{dcgan_d_forward.5} parent=0 // loop_body
    %s15 = ssub.s32 %s10, 1
    %s16 = ssub.s32 %s10, 2
    %s17 = sadd.s32 %s10, 1
    %s18 = ssub.s32 %s10, %s17
    %p19 = scmp.eq.s32.totalorder %s18, 0
    %s21 = sadd.s32 %s20, 1
    %s22 = scalar_select %p19, %s20, %s21
    %p25 = pneg %p19
    %p26 = scmp.eq.s32.totalorder %s10, 1
    %p27 = por %p25, %p26
    %p28 = scmp.ne.s32.totalorder %s20, %s23
    %p29 = scmp.eq.s32.totalorder %s10, 0
    %p30 = por %p28, %p29
    %p31 = scmp.ne.s32.totalorder %s20, %s23
    %p32 = scmp.eq.s32.totalorder %s15, 1
    %p33 = por %p31, %p32
    %p34 = scmp.ne.s32.totalorder %s23, %s24
    %p35 = scmp.eq.s32.totalorder %s15, 0
    %p36 = por %p34, %p35
    %p37 = scmp.ne.s32.totalorder %s23, %s24
    %p38 = scmp.eq.s32.totalorder %s16, 1
    %p39 = por %p37, %p38
    %p41 = scmp.ne.s32.totalorder %s24, %s40
    %p42 = scmp.eq.s32.totalorder %s16, 0
    %p43 = por %p41, %p42
    %s45 = sadd.s32 %s44, 1
    %p48 = scmp.eq.s32.totalorder %s10, 1
    %p49 = scmp.ne.s32.totalorder %s44, %s46
    %p50 = scmp.eq.s32.totalorder %s10, 0
    %p51 = por %p49, %p50
    %p52 = scmp.ne.s32.totalorder %s44, %s46
    %p53 = scmp.eq.s32.totalorder %s15, 1
    %p54 = por %p52, %p53
    %p55 = scmp.ne.s32.totalorder %s46, %s47
    %p56 = scmp.eq.s32.totalorder %s15, 0
    %p57 = por %p55, %p56
    %p58 = scmp.ne.s32.totalorder %s46, %s47
    %p59 = scmp.eq.s32.totalorder %s16, 1
    %p60 = por %p58, %p59
    %p62 = scmp.ne.s32.totalorder %s47, %s61
    %p63 = scmp.eq.s32.totalorder %s16, 0
    %p64 = por %p62, %p63
    %s66 = sadd.s32 %s65, 1
    %p69 = scmp.eq.s32.totalorder %s10, 1
    %p70 = scmp.ne.s32.totalorder %s65, %s67
    %p71 = scmp.eq.s32.totalorder %s10, 0
    %p72 = por %p70, %p71
    %p73 = scmp.ne.s32.totalorder %s65, %s67
    %p74 = scmp.eq.s32.totalorder %s15, 1
    %p75 = por %p73, %p74
    %p76 = scmp.ne.s32.totalorder %s67, %s68
    %p77 = scmp.eq.s32.totalorder %s15, 0
    %p78 = por %p76, %p77
    %p79 = scmp.ne.s32.totalorder %s67, %s68
    %p80 = scmp.eq.s32.totalorder %s16, 1
    %p81 = por %p79, %p80
    %p83 = scmp.ne.s32.totalorder %s68, %s82
    %p84 = scmp.eq.s32.totalorder %s16, 0
    %p85 = por %p83, %p84
    %s87 = sadd.s32 %s86, 1
    %p90 = scmp.eq.s32.totalorder %s10, 1
    %p91 = scmp.ne.s32.totalorder %s86, %s88
    %p92 = scmp.eq.s32.totalorder %s10, 0
    %p93 = por %p91, %p92
    %p94 = scmp.ne.s32.totalorder %s86, %s88
    %p95 = scmp.eq.s32.totalorder %s15, 1
    %p96 = por %p94, %p95
    %p97 = scmp.ne.s32.totalorder %s88, %s89
    %p98 = scmp.eq.s32.totalorder %s15, 0
    %p99 = por %p97, %p98
    %p100 = scmp.ne.s32.totalorder %s88, %s89
    %p101 = scmp.eq.s32.totalorder %s16, 1
    %p102 = por %p100, %p101
    %p104 = scmp.ne.s32.totalorder %s89, %s103
    %p105 = scmp.eq.s32.totalorder %s16, 0
    %p106 = por %p104, %p105
    %s107 = ssub.s32 %s10, %s17
    %p108 = scmp.eq.s32.totalorder %s107, 0
    %s110 = sadd.s32 %s109, 1
    %s111 = scalar_select %p108, %s109, %s110
    %p114 = pneg %p108
    %p115 = scmp.eq.s32.totalorder %s10, 1
    %p116 = por %p114, %p115
    %p117 = scmp.ne.s32.totalorder %s109, %s112
    %p118 = scmp.eq.s32.totalorder %s10, 0
    %p119 = por %p117, %p118
    %p120 = scmp.ne.s32.totalorder %s109, %s112
    %p121 = scmp.eq.s32.totalorder %s15, 1
    %p122 = por %p120, %p121
    %p123 = scmp.ne.s32.totalorder %s112, %s113
    %p124 = scmp.eq.s32.totalorder %s15, 0
    %p125 = por %p123, %p124
    %p126 = scmp.ne.s32.totalorder %s112, %s113
    %p127 = scmp.eq.s32.totalorder %s16, 1
    %p128 = por %p126, %p127
    %p130 = scmp.ne.s32.totalorder %s113, %s129
    %p131 = scmp.eq.s32.totalorder %s16, 0
    %p132 = por %p130, %p131
    %p133 = scmp.le.s32.totalorder 1, %s10
    %p134 = scmp.lt.s32.totalorder %s10, 3
    %p135 = pnand %p133, %p134
    %p136 = pneg %p135
    // Predicated region
    $region9: #{dcgan_d_forward.5} parent=5 // pred_check
      _
    $region10: #{dcgan_d_forward.5} parent=5 // pred_check_branch
      %138 = sbr.rel (%p135) target = $region12
    $region11: #{dcgan_d_forward.5} parent=5 // pred_region
      %s139 = ssub.s32 %s10, 1
      // Predicated region
      $region13: #{dcgan_d_forward.5} parent=11 // pred_check
        %p140 = pneg %p57
      $region14: #{dcgan_d_forward.5} parent=11 // pred_check_branch
        %142 = sbr.rel (%p140) target = $region16
      $region15: #{dcgan_d_forward.5} parent=11 // pred_region
        _
      $region16: #{dcgan_d_forward.5} parent=11 // pred_fallthru
        _
      // Predicated region
      $region17: #{dcgan_d_forward.5} parent=11 // pred_check
        %p143 = pneg %p78
      $region18: #{dcgan_d_forward.5} parent=11 // pred_check_branch
        %145 = sbr.rel (%p143) target = $region20
      $region19: #{dcgan_d_forward.5} parent=11 // pred_region
        _
      $region20: #{dcgan_d_forward.5} parent=11 // pred_fallthru
        _
      // Predicated region
      $region21: #{dcgan_d_forward.5} parent=11 // pred_check
        %p146 = pneg %p99
      $region22: #{dcgan_d_forward.5} parent=11 // pred_check_branch
        %148 = sbr.rel (%p146) target = $region24
      $region23: #{dcgan_d_forward.5} parent=11 // pred_region
        _
      $region24: #{dcgan_d_forward.5} parent=11 // pred_fallthru
        _
    $region12: #{dcgan_d_forward.5} parent=5 // pred_fallthru
      _
    %p149 = scmp.lt.s32.totalorder %s10, 2
    // Predicated region
    $region25: #{dcgan_d_forward.5} parent=5 // pred_check
      %p150 = pneg %p149
    $region26: #{dcgan_d_forward.5} parent=5 // pred_check_branch
      %152 = sbr.rel (%p150) target = $region28
    $region27: #{dcgan_d_forward.5} parent=5 // pred_region
      // Predicated region
      $region29: #{dcgan_d_forward.5} parent=27 // pred_check
        %p153 = pneg %p30
      $region30: #{dcgan_d_forward.5} parent=27 // pred_check_branch
        %155 = sbr.rel (%p153) target = $region32
      $region31: #{dcgan_d_forward.5} parent=27 // pred_region
        %p156 = scmp.lt.s32.totalorder %s10, 1
        %s157 = scalar_select %p156, %s10, 1
        %s158 = smul.addr %s157, 4
        %s159 = smul.addr %s158, 4
        %s160 = scalar_lea.vmem %s0, %s159
      $region32: #{dcgan_d_forward.5} parent=27 // pred_fallthru
        _
    $region28: #{dcgan_d_forward.5} parent=5 // pred_fallthru
      _
    %p161 = scmp.le.s32.totalorder 1, %s10
    %p162 = scmp.lt.s32.totalorder %s10, 3
    %p163 = pnand %p161, %p162
    %p164 = pneg %p163
    // Predicated region
    $region33: #{dcgan_d_forward.5} parent=5 // pred_check
      _
    $region34: #{dcgan_d_forward.5} parent=5 // pred_check_branch
      %166 = sbr.rel (%p163) target = $region36
    $region35: #{dcgan_d_forward.5} parent=5 // pred_region
      %s167 = ssub.s32 %s10, 1
      %p168 = scmp.lt.s32.totalorder %s15, 1
      %s169 = scalar_select %p168, %s15, 1
      %s170 = smul.addr %s169, 4
      %s171 = smul.addr %s170, 4
      %s172 = scalar_lea.vmem %s0, %s171
      %p173 = pneg %p36
      %p174 = pneg %p33
      %p175 = pneg %p57
      %p176 = pneg %p54
      %p177 = pneg %p78
      %p178 = pneg %p75
      %p179 = pneg %p99
      %p180 = pneg %p96
      %p181 = pneg %p125
      %p182 = pneg %p122
      %p183 = scmp.lt.s32.totalorder %s15, 1
      %s184 = scalar_select %p183, %s15, 1
      %s185 = scalar_lea.vmem %s4, %s184
      %p186 = scmp.lt.s32.totalorder %s15, 1
      %s187 = scalar_select %p186, %s15, 1
      %s188 = smul.addr %s187, 4
      %s189 = smul.addr %s188, 4
      %s190 = scalar_lea.vmem %s0, %s189
      %p191 = scmp.lt.s32.totalorder %s15, 1
      %s192 = scalar_select %p191, %s15, 1
      %s193 = scalar_lea.vmem %s4, %s192
      %v194 = vld [vmem:[%s1] sm:$0x1]
      %v195 = vld [vmem:[%s2] sm:$0x1]
      %v196 = vld [vmem:[%s190] sm:$0x7]
      %v198 = vlaneseq
      %v199 = vshrl.u32 %v198, 7
      %v200 = vsub.s32 0, %v199
      %v201 = vrot.slane %v194, %v200
      %v203 = vmul.f32 %v196, %v201
      %v205 = vlaneseq
      %v206 = vshrl.u32 %v205, 7
      %v207 = vsub.s32 0, %v206
      %v208 = vrot.slane %v195, %v207
      %v210 = vadd.f32 %v203, %v208
      %vm211 = vcmp.ge.f32.partialorder %v210, 0.0
      %v212 = vmul.f32 %v210, 0.2
      %v213 = vsel %vm211, %v210, %v212
      %v214 = vld [vmem:[%s3] sm:$0x7]
      %v215 = vmul.f32 %v213, %v214
      %vm216 = vcmask 124928
      %v217 = vsel %vm216, %v215, 0.0
      %v218 = vrot.slane %v217, 4
      %v219 = vadd.f32 %v217, %v218
      %v220 = vrot.slane %v219, 2
      %v221 = vadd.f32 %v219, %v220
      %v222 = vrot.slane %v221, 1
      %v223 = vadd.f32 %v221, %v222
      %v224 = vadd.f32 %v223, 0.0
      %s225 = scalar_lea.vmem %s190, 4
      %v226 = vld [vmem:[%s225] sm:$0x7]
      %v227 = vmul.f32 %v226, %v201
      %v228 = vadd.f32 %v227, %v208
      %vm229 = vcmp.ge.f32.partialorder %v228, 0.0
      %v230 = vmul.f32 %v228, 0.2
      %v231 = vsel %vm229, %v228, %v230
      %s232 = scalar_lea.vmem %s3, 4
      %v233 = vld [vmem:[%s232] sm:$0x7]
      %v234 = vmul.f32 %v231, %v233
      %v235 = vsel %vm216, %v234, 0.0
      %v236 = vrot.slane %v235, 4
      %v237 = vadd.f32 %v235, %v236
      %v238 = vrot.slane %v237, 2
      %v239 = vadd.f32 %v237, %v238
      %v240 = vrot.slane %v239, 1
      %v241 = vadd.f32 %v239, %v240
      %v242 = vadd.f32 %v224, %v241
      %s243 = scalar_lea.vmem %s190, 8
      %v244 = vld [vmem:[%s243] sm:$0x7]
      %v245 = vmul.f32 %v244, %v201
      %v246 = vadd.f32 %v245, %v208
      %vm247 = vcmp.ge.f32.partialorder %v246, 0.0
      %v248 = vmul.f32 %v246, 0.2
      %v249 = vsel %vm247, %v246, %v248
      %s250 = scalar_lea.vmem %s3, 8
      %v251 = vld [vmem:[%s250] sm:$0x7]
      %v252 = vmul.f32 %v249, %v251
      %v253 = vsel %vm216, %v252, 0.0
      %v254 = vrot.slane %v253, 4
      %v255 = vadd.f32 %v253, %v254
      %v256 = vrot.slane %v255, 2
      %v257 = vadd.f32 %v255, %v256
      %v258 = vrot.slane %v257, 1
      %v259 = vadd.f32 %v257, %v258
      %v260 = vadd.f32 %v242, %v259
      %vm261 = vcmask 130048
      %v262 = vsel %vm261, %v260, 0.0
      %263 = vadd.xlane.f32.xlu0 %v262
      %v264 = vpop.xlane.xlu0 %263
      %vm265 = vcmask 0
      %266 = vst.msk [vmem:[%s193] sm:$0x1] %vm265, %v264
      %p267 = scmp.lt.s32.totalorder %s15, 1
      %s268 = scalar_select %p267, %s15, 1
      %s269 = scalar_lea.vmem %s4, %s268
      // Predicated region
      $region37: #{dcgan_d_forward.5} parent=35 // pred_check
        %p270 = pneg %p122
      $region38: #{dcgan_d_forward.5} parent=35 // pred_check_branch
        %272 = sbr.rel (%p270) target = $region40
      $region39: #{dcgan_d_forward.5} parent=35 // pred_region
        _
      $region40: #{dcgan_d_forward.5} parent=35 // pred_fallthru
        _
    $region36: #{dcgan_d_forward.5} parent=5 // pred_fallthru
      _
    %p273 = scmp.le.s32.totalorder 2, %s10
    // Predicated region
    $region41: #{dcgan_d_forward.5} parent=5 // pred_check
      %p274 = pneg %p273
    $region42: #{dcgan_d_forward.5} parent=5 // pred_check_branch
      %276 = sbr.rel (%p274) target = $region44
    $region43: #{dcgan_d_forward.5} parent=5 // pred_region
      %s277 = ssub.s32 %s10, 2
      // Predicated region
      $region45: #{dcgan_d_forward.5} parent=43 // pred_check
        %p278 = pneg %p128
      $region46: #{dcgan_d_forward.5} parent=43 // pred_check_branch
        %280 = sbr.rel (%p278) target = $region48
      $region47: #{dcgan_d_forward.5} parent=43 // pred_region
        %p281 = scmp.lt.s32.totalorder %s16, 1
        %s282 = scalar_select %p281, %s16, 1
        %s283 = scalar_lea.vmem %s4, %s282
      $region48: #{dcgan_d_forward.5} parent=43 // pred_fallthru
        _
    $region44: #{dcgan_d_forward.5} parent=5 // pred_fallthru
      _
  $region6: #{dcgan_d_forward.5} parent=0 // loop_footer
    %s14 = sadd.s32 1, %s10
  $region7: #{dcgan_d_forward.5} parent=0 // loop_footer_branch
    %9 = sbr.rel target = $region3
  $region8: #{dcgan_d_forward.5} parent=0 // loop_exit
    _

// kernel: dcgan_d_forward.4
$region0: #{dcgan_d_forward.4}
  #allocation0 [shape = 'u32[]', space=smem, size = 0x4, offset = 0x4, fixed_abs, tag = 'smem constant byte address 0x4 - core index']
  #allocation1 [shape = 'u32[144,128]{1,0:T(1,128)}', space=vmem, size = 0x12000, scoped, tag = 'internal scratch']
  %s0 = inlined_call_operand.vmem [shape: bf16[2,5,5,32], index: 0, kind: input, shape index: {}]
  %s1 = inlined_call_operand.vmem [shape: bf16[4,32,16], index: 1, kind: input, shape index: {}]
  %s2 = inlined_call_operand.vmem [shape: f32[2,4,4,16], index: 2, kind: output, shape index: {0}]
  %s3 = inlined_call_operand.vmem [shape: f32[2,2,16], index: 3, kind: output, shape index: {1}]
  %4 = xla_tuple %s2, %s3
  %s5 = sld [smem:[#allocation0]]
  $region49: #{dcgan_d_forward.4} parent=0
    _
  %s7 = ssub.s32 1, %s5
  %s8 = scalar_select 0, %s7, %s5
  loop: start=0, step=1, limit=4
  $region2: #{dcgan_d_forward.4} parent=0 // loop_pre_header
    _
  $region3: #{dcgan_d_forward.4} parent=0 // loop_header
    %s10 = sphi 0, %s14
    %p11 = scmp.ge.s32.totalorder %s10, 4
    %s20 = sphi 0, %s22
    %s23 = sphi 0, %s20
    %s24 = sphi 0, %s23
    %s40 = sphi 0, %s24
    %s44 = sphi 0, %s44
    %s46 = sphi 0, %s44
    %s47 = sphi 0, %s46
    %s61 = sphi 0, %s47
    %s67 = sphi 0, %s69
    %s70 = sphi 0, %s67
    %s71 = sphi 0, %s70
    %s87 = sphi 0, %s71
    %s93 = sphi 0, %s95
    %s96 = sphi 0, %s93
    %s97 = sphi 0, %s96
    %s113 = sphi 0, %s97
  $region4: #{dcgan_d_forward.4} parent=0 // loop_header_branch
    %13 = sbr.rel (%p11) target = $region8
  $region5: #{dcgan_d_forward.4} parent=0 // loop_body
    %s15 = ssub.s32 %s10, 1
    %s16 = ssub.s32 %s10, 2
    %s17 = sadd.s32 %s10, 1
    %s18 = ssub.s32 %s10, %s17
    %p19 = scmp.eq.s32.totalorder %s18, 0
    %s21 = sadd.s32 %s20, 1
    %s22 = scalar_select %p19, %s20, %s21
    %p25 = pneg %p19
    %p26 = scmp.eq.s32.totalorder %s10, 1
    %p27 = por %p25, %p26
    %p28 = scmp.ne.s32.totalorder %s20, %s23
    %p29 = scmp.eq.s32.totalorder %s10, 0
    %p30 = por %p28, %p29
    %p31 = scmp.ne.s32.totalorder %s20, %s23
    %p32 = scmp.eq.s32.totalorder %s15, 1
    %p33 = por %p31, %p32
    %p34 = scmp.ne.s32.totalorder %s23, %s24
    %p35 = scmp.eq.s32.totalorder %s15, 0
    %p36 = por %p34, %p35
    %p37 = scmp.ne.s32.totalorder %s23, %s24
    %p38 = scmp.eq.s32.totalorder %s16, 1
    %p39 = por %p37, %p38
    %p41 = scmp.ne.s32.totalorder %s24, %s40
    %p42 = scmp.eq.s32.totalorder %s16, 0
    %p43 = por %p41, %p42
    %s45 = sadd.s32 %s44, 1
    %p48 = scmp.eq.s32.totalorder %s10, 1
    %p49 = scmp.ne.s32.totalorder %s44, %s46
    %p50 = scmp.eq.s32.totalorder %s10, 0
    %p51 = por %p49, %p50
    %p52 = scmp.ne.s32.totalorder %s44, %s46
    %p53 = scmp.eq.s32.totalorder %s15, 1
    %p54 = por %p52, %p53
    %p55 = scmp.ne.s32.totalorder %s46, %s47
    %p56 = scmp.eq.s32.totalorder %s15, 0
    %p57 = por %p55, %p56
    %p58 = scmp.ne.s32.totalorder %s46, %s47
    %p59 = scmp.eq.s32.totalorder %s16, 1
    %p60 = por %p58, %p59
    %p62 = scmp.ne.s32.totalorder %s47, %s61
    %p63 = scmp.eq.s32.totalorder %s16, 0
    %p64 = por %p62, %p63
    %s65 = ssub.s32 %s10, %s17
    %p66 = scmp.eq.s32.totalorder %s65, 0
    %s68 = sadd.s32 %s67, 1
    %s69 = scalar_select %p66, %s67, %s68
    %p72 = pneg %p66
    %p73 = scmp.eq.s32.totalorder %s10, 1
    %p74 = por %p72, %p73
    %p75 = scmp.ne.s32.totalorder %s67, %s70
    %p76 = scmp.eq.s32.totalorder %s10, 0
    %p77 = por %p75, %p76
    %p78 = scmp.ne.s32.totalorder %s67, %s70
    %p79 = scmp.eq.s32.totalorder %s15, 1
    %p80 = por %p78, %p79
    %p81 = scmp.ne.s32.totalorder %s70, %s71
    %p82 = scmp.eq.s32.totalorder %s15, 0
    %p83 = por %p81, %p82
    %p84 = scmp.ne.s32.totalorder %s70, %s71
    %p85 = scmp.eq.s32.totalorder %s16, 1
    %p86 = por %p84, %p85
    %p88 = scmp.ne.s32.totalorder %s71, %s87
    %p89 = scmp.eq.s32.totalorder %s16, 0
    %p90 = por %p88, %p89
    %s91 = ssub.s32 %s10, %s17
    %p92 = scmp.eq.s32.totalorder %s91, 0
    %s94 = sadd.s32 %s93, 1
    %s95 = scalar_select %p92, %s93, %s94
    %p98 = pneg %p92
    %p99 = scmp.eq.s32.totalorder %s10, 1
    %p100 = por %p98, %p99
    %p101 = scmp.ne.s32.totalorder %s93, %s96
    %p102 = scmp.eq.s32.totalorder %s10, 0
    %p103 = por %p101, %p102
    %p104 = scmp.ne.s32.totalorder %s93, %s96
    %p105 = scmp.eq.s32.totalorder %s15, 1
    %p106 = por %p104, %p105
    %p107 = scmp.ne.s32.totalorder %s96, %s97
    %p108 = scmp.eq.s32.totalorder %s15, 0
    %p109 = por %p107, %p108
    %p110 = scmp.ne.s32.totalorder %s96, %s97
    %p111 = scmp.eq.s32.totalorder %s16, 1
    %p112 = por %p110, %p111
    %p114 = scmp.ne.s32.totalorder %s97, %s113
    %p115 = scmp.eq.s32.totalorder %s16, 0
    %p116 = por %p114, %p115
    %p117 = scmp.le.s32.totalorder 1, %s10
    %p118 = scmp.lt.s32.totalorder %s10, 3
    %p119 = pnand %p117, %p118
    %p120 = pneg %p119
    // Predicated region
    $region9: #{dcgan_d_forward.4} parent=5 // pred_check
      _
    $region10: #{dcgan_d_forward.4} parent=5 // pred_check_branch
      %122 = sbr.rel (%p119) target = $region12
    $region11: #{dcgan_d_forward.4} parent=5 // pred_region
      %s123 = ssub.s32 %s10, 1
      // Predicated region
      $region13: #{dcgan_d_forward.4} parent=11 // pred_check
        %p124 = pneg %p57
      $region14: #{dcgan_d_forward.4} parent=11 // pred_check_branch
        %126 = sbr.rel (%p124) target = $region16
      $region15: #{dcgan_d_forward.4} parent=11 // pred_region
        _
      $region16: #{dcgan_d_forward.4} parent=11 // pred_fallthru
        _
    $region12: #{dcgan_d_forward.4} parent=5 // pred_fallthru
      _
    %p127 = scmp.lt.s32.totalorder %s10, 2
    // Predicated region
    $region17: #{dcgan_d_forward.4} parent=5 // pred_check
      %p128 = pneg %p127
    $region18: #{dcgan_d_forward.4} parent=5 // pred_check_branch
      %130 = sbr.rel (%p128) target = $region20
    $region19: #{dcgan_d_forward.4} parent=5 // pred_region
      // Predicated region
      $region21: #{dcgan_d_forward.4} parent=19 // pred_check
        %p131 = pneg %p30
      $region22: #{dcgan_d_forward.4} parent=19 // pred_check_branch
        %133 = sbr.rel (%p131) target = $region24
      $region23: #{dcgan_d_forward.4} parent=19 // pred_region
        %p134 = scmp.lt.s32.totalorder %s10, 1
        %s135 = scalar_select %p134, %s10, 1
        %s136 = smul.addr %s135, 5
        %s137 = smul.addr %s136, 4
        %s138 = scalar_lea.vmem %s0, %s137
      $region24: #{dcgan_d_forward.4} parent=19 // pred_fallthru
        _
    $region20: #{dcgan_d_forward.4} parent=5 // pred_fallthru
      _
    %p139 = scmp.le.s32.totalorder 1, %s10
    %p140 = scmp.lt.s32.totalorder %s10, 3
    %p141 = pnand %p139, %p140
    %p142 = pneg %p141
    // Predicated region
    $region25: #{dcgan_d_forward.4} parent=5 // pred_check
      _
    $region26: #{dcgan_d_forward.4} parent=5 // pred_check_branch
      %144 = sbr.rel (%p141) target = $region28
    $region27: #{dcgan_d_forward.4} parent=5 // pred_region
      %s145 = ssub.s32 %s10, 1
      %p146 = scmp.lt.s32.totalorder %s15, 1
      %s147 = scalar_select %p146, %s15, 1
      %s148 = smul.addr %s147, 5
      %s149 = smul.addr %s148, 4
      %s150 = scalar_lea.vmem %s0, %s149
      %p151 = pneg %p36
      %p152 = pneg %p33
      %p153 = pneg %p57
      %p154 = pneg %p54
      %p155 = pneg %p83
      %p156 = pneg %p80
      %p157 = scmp.lt.s32.totalorder %s15, 1
      %s158 = scalar_select %p157, %s15, 1
      %s159 = smul.addr %s158, 4
      %s160 = smul.addr %s159, 4
      %s161 = scalar_lea.vmem %s2, %s160
      %p162 = pneg %p109
      %p163 = pneg %p106
      %p164 = scmp.lt.s32.totalorder %s15, 1
      %s165 = scalar_select %p164, %s15, 1
      %s166 = smul.addr %s165, 2
      %s167 = scalar_lea.vmem %s3, %s166
      %p168 = scmp.lt.s32.totalorder %s15, 1
      %s169 = scalar_select %p168, %s15, 1
      %s170 = smul.addr %s169, 5
      %s171 = smul.addr %s170, 4
      %s172 = scalar_lea.vmem %s0, %s171
      %p173 = scmp.lt.s32.totalorder %s15, 1
      %s174 = scalar_select %p173, %s15, 1
      %s175 = smul.addr %s174, 4
      %s176 = smul.addr %s175, 4
      %s177 = scalar_lea.vmem %s2, %s176
      %p178 = scmp.lt.s32.totalorder %s15, 1
      %s179 = scalar_select %p178, %s15, 1
      %s180 = smul.addr %s179, 2
      %s181 = scalar_lea.vmem %s3, %s180
      %v183 = vld [vmem:[%s172] sm:$0x3]
      %v184 = vld [vmem:[%s1] sm:$0xf]
      %v185 = vld [vmem:[%s1 + $0x4] sm:$0xf]
      %v186 = vld [vmem:[%s1 + $0x8] sm:$0xf]
      %v187 = vld [vmem:[%s1 + $0xc] sm:$0xf]
      %v188 = vld [vmem:[%s172] sm:$0x7]
      %s189 = scalar_lea.vmem %s1, 16
      %v190 = vld [vmem:[%s189] sm:$0xf]
      %v191 = vld [vmem:[%s189 + $0x4] sm:$0xf]
      %v192 = vld [vmem:[%s189 + $0x8] sm:$0xf]
      %v193 = vld [vmem:[%s189 + $0xc] sm:$0xf]
      %v195 = vunpack.c.l.b16 %v188
      %v196 = vpack.c.b16 %v195, %v195
      %v198 = vshrl.u32 %v196, 16
      %v200 = vshll.u32 %v196, 16
      %v202 = vrot.slane %v200, 1
      %v203 = vor.u32 %v198, %v202
      %v208 = vunpack.c.l.b16 %v190
      %v209 = vunpack.c.l.b16 %v191
      %v210 = vunpack.c.l.b16 %v192
      %v211 = vunpack.c.l.b16 %v193
      %v212 = vpack.c.b16 %v209, %v208
      %v213 = vpack.c.b16 %v211, %v210
      %vm216 = vcmask 261120
      %v218 = vsel %vm216, %v203, 0
      %220 = vmatprep.subr.bf16.mxu0 0
      %221 = vmatpush1.bf16.msra.mxu0 %v212
      %222 = vmatprep.subr.bf16.mxu0 0
      %223 = vmatpush1.bf16.msra.mxu0 %v213
      %224 = vmatprep.subr.bf16.mxu0 0
      %225 = vmatpush1.bf16.msra.mxu0 0
      %226 = vmatprep.subr.bf16.mxu0 0
      %227 = vmatpush1.bf16.msra.mxu0 0
      %228 = vmatprep.subr.bf16.mxu0 0
      %229 = vmatpush1.bf16.msra.mxu0 0
      %230 = vmatprep.subr.bf16.mxu0 0
      %231 = vmatpush1.bf16.msra.mxu0 0
      %232 = vmatprep.subr.bf16.mxu0 0
      %233 = vmatpush1.bf16.msra.mxu0 0
      %234 = vmatprep.subr.bf16.mxu0 0
      %235 = vmatpush1.bf16.msra.mxu0 0
      %236 = vmatprep.subr.bf16.mxu0 0
      %237 = vmatpush1.bf16.msra.mxu0 0
      %238 = vmatprep.subr.bf16.mxu0 0
      %239 = vmatpush1.bf16.msra.mxu0 0
      %240 = vmatprep.subr.bf16.mxu0 0
      %241 = vmatpush1.bf16.msra.mxu0 0
      %242 = vmatprep.subr.bf16.mxu0 0
      %243 = vmatpush1.bf16.msra.mxu0 0
      %244 = vmatprep.subr.bf16.mxu0 0
      %245 = vmatpush1.bf16.msra.mxu0 0
      %246 = vmatprep.subr.bf16.mxu0 0
      %247 = vmatpush1.bf16.msra.mxu0 0
      %248 = vmatprep.subr.bf16.mxu0 0
      %249 = vmatpush1.bf16.msra.mxu0 0
      %250 = vmatprep.subr.bf16.mxu0 0
      %251 = vmatpush1.bf16.msra.mxu0 0
      %252 = vmatprep.mubr.bf16.mxu0 0
      %253 = vmatmul.mubr.bf16.gmra.mrb[0].mxu0 %v218
      %v254 = vpop.f32.mrb[0].mxu0
      %v255 = vadd.f32 0.0, %v254
      %v256 = vpop.f32.mrb[0].mxu0
      %v257 = vpop.f32.mrb[0].mxu0
      %v258 = vpop.f32.mrb[0].mxu0
      %259 = vdwg.mxu0
      %v264 = vunpack.c.l.b16 %v184
      %v265 = vunpack.c.l.b16 %v185
      %v266 = vunpack.c.l.b16 %v186
      %v267 = vunpack.c.l.b16 %v187
      %v268 = vpack.c.b16 %v265, %v264
      %v269 = vpack.c.b16 %v267, %v266
      %v273 = vsel %vm216, %v183, 0
      %275 = vmatprep.subr.bf16.mxu0 0
      %276 = vmatpush1.bf16.msra.mxu0 %v268
      %277 = vmatprep.subr.bf16.mxu0 0
      %278 = vmatpush1.bf16.msra.mxu0 %v269
      %279 = vmatprep.subr.bf16.mxu0 0
      %280 = vmatpush1.bf16.msra.mxu0 0
      %281 = vmatprep.subr.bf16.mxu0 0
      %282 = vmatpush1.bf16.msra.mxu0 0
      %283 = vmatprep.subr.bf16.mxu0 0
      %284 = vmatpush1.bf16.msra.mxu0 0
      %285 = vmatprep.subr.bf16.mxu0 0
      %286 = vmatpush1.bf16.msra.mxu0 0
      %287 = vmatprep.subr.bf16.mxu0 0
      %288 = vmatpush1.bf16.msra.mxu0 0
      %289 = vmatprep.subr.bf16.mxu0 0
      %290 = vmatpush1.bf16.msra.mxu0 0
      %291 = vmatprep.subr.bf16.mxu0 0
      %292 = vmatpush1.bf16.msra.mxu0 0
      %293 = vmatprep.subr.bf16.mxu0 0
      %294 = vmatpush1.bf16.msra.mxu0 0
      %295 = vmatprep.subr.bf16.mxu0 0
      %296 = vmatpush1.bf16.msra.mxu0 0
      %297 = vmatprep.subr.bf16.mxu0 0
      %298 = vmatpush1.bf16.msra.mxu0 0
      %299 = vmatprep.subr.bf16.mxu0 0
      %300 = vmatpush1.bf16.msra.mxu0 0
      %301 = vmatprep.subr.bf16.mxu0 0
      %302 = vmatpush1.bf16.msra.mxu0 0
      %303 = vmatprep.subr.bf16.mxu0 0
      %304 = vmatpush1.bf16.msra.mxu0 0
      %305 = vmatprep.subr.bf16.mxu0 0
      %306 = vmatpush1.bf16.msra.mxu0 0
      %307 = vmatprep.mubr.bf16.mxu0 0
      %308 = vmatmul.mubr.bf16.gmra.mrb[0].mxu0 %v273
      %v309 = vpop.f32.mrb[0].mxu0
      %v310 = vadd.f32 %v255, %v309
      %v311 = vpop.f32.mrb[0].mxu0
      %v312 = vpop.f32.mrb[0].mxu0
      %v313 = vpop.f32.mrb[0].mxu0
      %314 = vdwg.mxu0
      %s315 = scalar_lea.vmem %s172, 4
      %v316 = vld [vmem:[%s315] sm:$0x3]
      %s317 = scalar_lea.vmem %s1, 32
      %v318 = vld [vmem:[%s317] sm:$0xf]
      %v319 = vld [vmem:[%s317 + $0x4] sm:$0xf]
      %v320 = vld [vmem:[%s317 + $0x8] sm:$0xf]
      %v321 = vld [vmem:[%s317 + $0xc] sm:$0xf]
      %v326 = vunpack.c.l.b16 %v318
      %v327 = vunpack.c.l.b16 %v319
      %v328 = vunpack.c.l.b16 %v320
      %v329 = vunpack.c.l.b16 %v321
      %v330 = vpack.c.b16 %v327, %v326
      %v331 = vpack.c.b16 %v329, %v328
      %v335 = vsel %vm216, %v316, 0
      %337 = vmatprep.subr.bf16.mxu0 0
      %338 = vmatpush1.bf16.msra.mxu0 %v330
      %339 = vmatprep.subr.bf16.mxu0 0
      %340 = vmatpush1.bf16.msra.mxu0 %v331
      %341 = vmatprep.subr.bf16.mxu0 0
      %342 = vmatpush1.bf16.msra.mxu0 0
      %343 = vmatprep.subr.bf16.mxu0 0
      %344 = vmatpush1.bf16.msra.mxu0 0
      %345 = vmatprep.subr.bf16.mxu0 0
      %346 = vmatpush1.bf16.msra.mxu0 0
      %347 = vmatprep.subr.bf16.mxu0 0
      %348 = vmatpush1.bf16.msra.mxu0 0
      %349 = vmatprep.subr.bf16.mxu0 0
      %350 = vmatpush1.bf16.msra.mxu0 0
      %351 = vmatprep.subr.bf16.mxu0 0
      %352 = vmatpush1.bf16.msra.mxu0 0
      %353 = vmatprep.subr.bf16.mxu0 0
      %354 = vmatpush1.bf16.msra.mxu0 0
      %355 = vmatprep.subr.bf16.mxu0 0
      %356 = vmatpush1.bf16.msra.mxu0 0
      %357 = vmatprep.subr.bf16.mxu0 0
      %358 = vmatpush1.bf16.msra.mxu0 0
      %359 = vmatprep.subr.bf16.mxu0 0
      %360 = vmatpush1.bf16.msra.mxu0 0
      %361 = vmatprep.subr.bf16.mxu0 0
      %362 = vmatpush1.bf16.msra.mxu0 0
      %363 = vmatprep.subr.bf16.mxu0 0
      %364 = vmatpush1.bf16.msra.mxu0 0
      %365 = vmatprep.subr.bf16.mxu0 0
      %366 = vmatpush1.bf16.msra.mxu0 0
      %367 = vmatprep.subr.bf16.mxu0 0
      %368 = vmatpush1.bf16.msra.mxu0 0
      %369 = vmatprep.mubr.bf16.mxu0 0
      %370 = vmatmul.mubr.bf16.gmra.mrb[0].mxu0 %v335
      %v371 = vpop.f32.mrb[0].mxu0
      %v372 = vadd.f32 0.0, %v371
      %v373 = vpop.f32.mrb[0].mxu0
      %v374 = vpop.f32.mrb[0].mxu0
      %v375 = vpop.f32.mrb[0].mxu0
      %376 = vdwg.mxu0
      %v377 = vadd.f32 %v310, %v372
      %v378 = vld [vmem:[%s315] sm:$0x7]
      %s379 = scalar_lea.vmem %s1, 48
      %v380 = vld [vmem:[%s379] sm:$0xf]
      %v381 = vld [vmem:[%s379 + $0x4] sm:$0xf]
      %v382 = vld [vmem:[%s379 + $0x8] sm:$0xf]
      %v383 = vld [vmem:[%s379 + $0xc] sm:$0xf]
      %v385 = vunpack.c.l.b16 %v378
      %v386 = vpack.c.b16 %v385, %v385
      %v388 = vshrl.u32 %v386, 16
      %v390 = vshll.u32 %v386, 16
      %v392 = vrot.slane %v390, 1
      %v393 = vor.u32 %v388, %v392
      %v398 = vunpack.c.l.b16 %v380
      %v399 = vunpack.c.l.b16 %v381
      %v400 = vunpack.c.l.b16 %v382
      %v401 = vunpack.c.l.b16 %v383
      %v402 = vpack.c.b16 %v399, %v398
      %v403 = vpack.c.b16 %v401, %v400
      %v407 = vsel %vm216, %v393, 0
      %409 = vmatprep.subr.bf16.mxu0 0
      %410 = vmatpush1.bf16.msra.mxu0 %v402
      %411 = vmatprep.subr.bf16.mxu0 0
      %412 = vmatpush1.bf16.msra.mxu0 %v403
      %413 = vmatprep.subr.bf16.mxu0 0
      %414 = vmatpush1.bf16.msra.mxu0 0
      %415 = vmatprep.subr.bf16.mxu0 0
      %416 = vmatpush1.bf16.msra.mxu0 0
      %417 = vmatprep.subr.bf16.mxu0 0
      %418 = vmatpush1.bf16.msra.mxu0 0
      %419 = vmatprep.subr.bf16.mxu0 0
      %420 = vmatpush1.bf16.msra.mxu0 0
      %421 = vmatprep.subr.bf16.mxu0 0
      %422 = vmatpush1.bf16.msra.mxu0 0
      %423 = vmatprep.subr.bf16.mxu0 0
      %424 = vmatpush1.bf16.msra.mxu0 0
      %425 = vmatprep.subr.bf16.mxu0 0
      %426 = vmatpush1.bf16.msra.mxu0 0
      %427 = vmatprep.subr.bf16.mxu0 0
      %428 = vmatpush1.bf16.msra.mxu0 0
      %429 = vmatprep.subr.bf16.mxu0 0
      %430 = vmatpush1.bf16.msra.mxu0 0
      %431 = vmatprep.subr.bf16.mxu0 0
      %432 = vmatpush1.bf16.msra.mxu0 0
      %433 = vmatprep.subr.bf16.mxu0 0
      %434 = vmatpush1.bf16.msra.mxu0 0
      %435 = vmatprep.subr.bf16.mxu0 0
      %436 = vmatpush1.bf16.msra.mxu0 0
      %437 = vmatprep.subr.bf16.mxu0 0
      %438 = vmatpush1.bf16.msra.mxu0 0
      %439 = vmatprep.subr.bf16.mxu0 0
      %440 = vmatpush1.bf16.msra.mxu0 0
      %441 = vmatprep.mubr.bf16.mxu0 0
      %442 = vmatmul.mubr.bf16.gmra.mrb[0].mxu0 %v407
      %v443 = vpop.f32.mrb[0].mxu0
      %v444 = vadd.f32 0.0, %v443
      %v445 = vpop.f32.mrb[0].mxu0
      %v446 = vpop.f32.mrb[0].mxu0
      %v447 = vpop.f32.mrb[0].mxu0
      %448 = vdwg.mxu0
      %v449 = vadd.f32 %v377, %v444
      %450 = vmatprep.subr.bf16.mxu0 0
      %451 = vmatpush1.bf16.msra.mxu0 %v212
      %452 = vmatprep.subr.bf16.mxu0 0
      %453 = vmatpush1.bf16.msra.mxu0 %v213
      %454 = vmatprep.subr.bf16.mxu0 0
      %455 = vmatpush1.bf16.msra.mxu0 0
      %456 = vmatprep.subr.bf16.mxu0 0
      %457 = vmatpush1.bf16.msra.mxu0 0
      %458 = vmatprep.subr.bf16.mxu0 0
      %459 = vmatpush1.bf16.msra.mxu0 0
      %460 = vmatprep.subr.bf16.mxu0 0
      %461 = vmatpush1.bf16.msra.mxu0 0
      %462 = vmatprep.subr.bf16.mxu0 0
      %463 = vmatpush1.bf16.msra.mxu0 0
      %464 = vmatprep.subr.bf16.mxu0 0
      %465 = vmatpush1.bf16.msra.mxu0 0
      %466 = vmatprep.subr.bf16.mxu0 0
      %467 = vmatpush1.bf16.msra.mxu0 0
      %468 = vmatprep.subr.bf16.mxu0 0
      %469 = vmatpush1.bf16.msra.mxu0 0
      %470 = vmatprep.subr.bf16.mxu0 0
      %471 = vmatpush1.bf16.msra.mxu0 0
      %472 = vmatprep.subr.bf16.mxu0 0
      %473 = vmatpush1.bf16.msra.mxu0 0
      %474 = vmatprep.subr.bf16.mxu0 0
      %475 = vmatpush1.bf16.msra.mxu0 0
      %476 = vmatprep.subr.bf16.mxu0 0
      %477 = vmatpush1.bf16.msra.mxu0 0
      %478 = vmatprep.subr.bf16.mxu0 0
      %479 = vmatpush1.bf16.msra.mxu0 0
      %480 = vmatprep.subr.bf16.mxu0 0
      %481 = vmatpush1.bf16.msra.mxu0 0
      %482 = vmatprep.mubr.bf16.mxu0 0
      %483 = vmatmul.mubr.bf16.gmra.mrb[0].mxu0 %v407
      %v484 = vpop.f32.mrb[0].mxu0
      %v485 = vadd.f32 0.0, %v484
      %v486 = vpop.f32.mrb[0].mxu0
      %v487 = vpop.f32.mrb[0].mxu0
      %v488 = vpop.f32.mrb[0].mxu0
      %489 = vdwg.mxu0
      %490 = vmatprep.subr.bf16.mxu0 0
      %491 = vmatpush1.bf16.msra.mxu0 %v268
      %492 = vmatprep.subr.bf16.mxu0 0
      %493 = vmatpush1.bf16.msra.mxu0 %v269
      %494 = vmatprep.subr.bf16.mxu0 0
      %495 = vmatpush1.bf16.msra.mxu0 0
      %496 = vmatprep.subr.bf16.mxu0 0
      %497 = vmatpush1.bf16.msra.mxu0 0
      %498 = vmatprep.subr.bf16.mxu0 0
      %499 = vmatpush1.bf16.msra.mxu0 0
      %500 = vmatprep.subr.bf16.mxu0 0
      %501 = vmatpush1.bf16.msra.mxu0 0
      %502 = vmatprep.subr.bf16.mxu0 0
      %503 = vmatpush1.bf16.msra.mxu0 0
      %504 = vmatprep.subr.bf16.mxu0 0
      %505 = vmatpush1.bf16.msra.mxu0 0
      %506 = vmatprep.subr.bf16.mxu0 0
      %507 = vmatpush1.bf16.msra.mxu0 0
      %508 = vmatprep.subr.bf16.mxu0 0
      %509 = vmatpush1.bf16.msra.mxu0 0
      %510 = vmatprep.subr.bf16.mxu0 0
      %511 = vmatpush1.bf16.msra.mxu0 0
      %512 = vmatprep.subr.bf16.mxu0 0
      %513 = vmatpush1.bf16.msra.mxu0 0
      %514 = vmatprep.subr.bf16.mxu0 0
      %515 = vmatpush1.bf16.msra.mxu0 0
      %516 = vmatprep.subr.bf16.mxu0 0
      %517 = vmatpush1.bf16.msra.mxu0 0
      %518 = vmatprep.subr.bf16.mxu0 0
      %519 = vmatpush1.bf16.msra.mxu0 0
      %520 = vmatprep.subr.bf16.mxu0 0
      %521 = vmatpush1.bf16.msra.mxu0 0
      %522 = vmatprep.mubr.bf16.mxu0 0
      %523 = vmatmul.mubr.bf16.gmra.mrb[0].mxu0 %v335
      %v524 = vpop.f32.mrb[0].mxu0
      %v525 = vadd.f32 %v485, %v524
      %v526 = vpop.f32.mrb[0].mxu0
      %v527 = vpop.f32.mrb[0].mxu0
      %v528 = vpop.f32.mrb[0].mxu0
      %529 = vdwg.mxu0
      %s530 = scalar_lea.vmem %s172, 8
      %v531 = vld [vmem:[%s530] sm:$0x3]
      %v533 = vsel %vm216, %v531, 0
      %535 = vmatprep.subr.bf16.mxu0 0
      %536 = vmatpush1.bf16.msra.mxu0 %v330
      %537 = vmatprep.subr.bf16.mxu0 0
      %538 = vmatpush1.bf16.msra.mxu0 %v331
      %539 = vmatprep.subr.bf16.mxu0 0
      %540 = vmatpush1.bf16.msra.mxu0 0
      %541 = vmatprep.subr.bf16.mxu0 0
      %542 = vmatpush1.bf16.msra.mxu0 0
      %543 = vmatprep.subr.bf16.mxu0 0
      %544 = vmatpush1.bf16.msra.mxu0 0
      %545 = vmatprep.subr.bf16.mxu0 0
      %546 = vmatpush1.bf16.msra.mxu0 0
      %547 = vmatprep.subr.bf16.mxu0 0
      %548 = vmatpush1.bf16.msra.mxu0 0
      %549 = vmatprep.subr.bf16.mxu0 0
      %550 = vmatpush1.bf16.msra.mxu0 0
      %551 = vmatprep.subr.bf16.mxu0 0
      %552 = vmatpush1.bf16.msra.mxu0 0
      %553 = vmatprep.subr.bf16.mxu0 0
      %554 = vmatpush1.bf16.msra.mxu0 0
      %555 = vmatprep.subr.bf16.mxu0 0
      %556 = vmatpush1.bf16.msra.mxu0 0
      %557 = vmatprep.subr.bf16.mxu0 0
      %558 = vmatpush1.bf16.msra.mxu0 0
      %559 = vmatprep.subr.bf16.mxu0 0
      %560 = vmatpush1.bf16.msra.mxu0 0
      %561 = vmatprep.subr.bf16.mxu0 0
      %562 = vmatpush1.bf16.msra.mxu0 0
      %563 = vmatprep.subr.bf16.mxu0 0
      %564 = vmatpush1.bf16.msra.mxu0 0
      %565 = vmatprep.subr.bf16.mxu0 0
      %566 = vmatpush1.bf16.msra.mxu0 0
      %567 = vmatprep.mubr.bf16.mxu0 0
      %568 = vmatmul.mubr.bf16.gmra.mrb[0].mxu0 %v533
      %v569 = vpop.f32.mrb[0].mxu0
      %v570 = vadd.f32 0.0, %v569
      %v571 = vpop.f32.mrb[0].mxu0
      %v572 = vpop.f32.mrb[0].mxu0
      %v573 = vpop.f32.mrb[0].mxu0
      %574 = vdwg.mxu0
      %v575 = vadd.f32 %v525, %v570
      %v576 = vld [vmem:[%s530] sm:$0x7]
      %v578 = vunpack.c.l.b16 %v576
      %v579 = vpack.c.b16 %v578, %v578
      %v581 = vshrl.u32 %v579, 16
      %v583 = vshll.u32 %v579, 16
      %v585 = vrot.slane %v583, 1
      %v586 = vor.u32 %v581, %v585
      %v588 = vsel %vm216, %v586, 0
      %590 = vmatprep.subr.bf16.mxu0 0
      %591 = vmatpush1.bf16.msra.mxu0 %v402
      %592 = vmatprep.subr.bf16.mxu0 0
      %593 = vmatpush1.bf16.msra.mxu0 %v403
      %594 = vmatprep.subr.bf16.mxu0 0
      %595 = vmatpush1.bf16.msra.mxu0 0
      %596 = vmatprep.subr.bf16.mxu0 0
      %597 = vmatpush1.bf16.msra.mxu0 0
      %598 = vmatprep.subr.bf16.mxu0 0
      %599 = vmatpush1.bf16.msra.mxu0 0
      %600 = vmatprep.subr.bf16.mxu0 0
      %601 = vmatpush1.bf16.msra.mxu0 0
      %602 = vmatprep.subr.bf16.mxu0 0
      %603 = vmatpush1.bf16.msra.mxu0 0
      %604 = vmatprep.subr.bf16.mxu0 0
      %605 = vmatpush1.bf16.msra.mxu0 0
      %606 = vmatprep.subr.bf16.mxu0 0
      %607 = vmatpush1.bf16.msra.mxu0 0
      %608 = vmatprep.subr.bf16.mxu0 0
      %609 = vmatpush1.bf16.msra.mxu0 0
      %610 = vmatprep.subr.bf16.mxu0 0
      %611 = vmatpush1.bf16.msra.mxu0 0
      %612 = vmatprep.subr.bf16.mxu0 0
      %613 = vmatpush1.bf16.msra.mxu0 0
      %614 = vmatprep.subr.bf16.mxu0 0
      %615 = vmatpush1.bf16.msra.mxu0 0
      %616 = vmatprep.subr.bf16.mxu0 0
      %617 = vmatpush1.bf16.msra.mxu0 0
      %618 = vmatprep.subr.bf16.mxu0 0
      %619 = vmatpush1.bf16.msra.mxu0 0
      %620 = vmatprep.subr.bf16.mxu0 0
      %621 = vmatpush1.bf16.msra.mxu0 0
      %622 = vmatprep.mubr.bf16.mxu0 0
      %623 = vmatmul.mubr.bf16.gmra.mrb[0].mxu0 %v588
      %v624 = vpop.f32.mrb[0].mxu0
      %v625 = vadd.f32 0.0, %v624
      %v626 = vpop.f32.mrb[0].mxu0
      %v627 = vpop.f32.mrb[0].mxu0
      %v628 = vpop.f32.mrb[0].mxu0
      %629 = vdwg.mxu0
      %v630 = vadd.f32 %v575, %v625
      %631 = vmatprep.subr.bf16.mxu0 0
      %632 = vmatpush1.bf16.msra.mxu0 %v212
      %633 = vmatprep.subr.bf16.mxu0 0
      %634 = vmatpush1.bf16.msra.mxu0 %v213
      %635 = vmatprep.subr.bf16.mxu0 0
      %636 = vmatpush1.bf16.msra.mxu0 0
      %637 = vmatprep.subr.bf16.mxu0 0
      %638 = vmatpush1.bf16.msra.mxu0 0
      %639 = vmatprep.subr.bf16.mxu0 0
      %640 = vmatpush1.bf16.msra.mxu0 0
      %641 = vmatprep.subr.bf16.mxu0 0
      %642 = vmatpush1.bf16.msra.mxu0 0
      %643 = vmatprep.subr.bf16.mxu0 0
      %644 = vmatpush1.bf16.msra.mxu0 0
      %645 = vmatprep.subr.bf16.mxu0 0
      %646 = vmatpush1.bf16.msra.mxu0 0
      %647 = vmatprep.subr.bf16.mxu0 0
      %648 = vmatpush1.bf16.msra.mxu0 0
      %649 = vmatprep.subr.bf16.mxu0 0
      %650 = vmatpush1.bf16.msra.mxu0 0
      %651 = vmatprep.subr.bf16.mxu0 0
      %652 = vmatpush1.bf16.msra.mxu0 0
      %653 = vmatprep.subr.bf16.mxu0 0
      %654 = vmatpush1.bf16.msra.mxu0 0
      %655 = vmatprep.subr.bf16.mxu0 0
      %656 = vmatpush1.bf16.msra.mxu0 0
      %657 = vmatprep.subr.bf16.mxu0 0
      %658 = vmatpush1.bf16.msra.mxu0 0
      %659 = vmatprep.subr.bf16.mxu0 0
      %660 = vmatpush1.bf16.msra.mxu0 0
      %661 = vmatprep.subr.bf16.mxu0 0
      %662 = vmatpush1.bf16.msra.mxu0 0
      %663 = vmatprep.mubr.bf16.mxu0 0
      %664 = vmatmul.mubr.bf16.gmra.mrb[0].mxu0 %v588
      %v665 = vpop.f32.mrb[0].mxu0
      %v666 = vadd.f32 0.0, %v665
      %v667 = vpop.f32.mrb[0].mxu0
      %v668 = vpop.f32.mrb[0].mxu0
      %v669 = vpop.f32.mrb[0].mxu0
      %670 = vdwg.mxu0
      %671 = vmatprep.subr.bf16.mxu0 0
      %672 = vmatpush1.bf16.msra.mxu0 %v268
      %673 = vmatprep.subr.bf16.mxu0 0
      %674 = vmatpush1.bf16.msra.mxu0 %v269
      %675 = vmatprep.subr.bf16.mxu0 0
      %676 = vmatpush1.bf16.msra.mxu0 0
      %677 = vmatprep.subr.bf16.mxu0 0
      %678 = vmatpush1.bf16.msra.mxu0 0
      %679 = vmatprep.subr.bf16.mxu0 0
      %680 = vmatpush1.bf16.msra.mxu0 0
      %681 = vmatprep.subr.bf16.mxu0 0
      %682 = vmatpush1.bf16.msra.mxu0 0
      %683 = vmatprep.subr.bf16.mxu0 0
      %684 = vmatpush1.bf16.msra.mxu0 0
      %685 = vmatprep.subr.bf16.mxu0 0
      %686 = vmatpush1.bf16.msra.mxu0 0
      %687 = vmatprep.subr.bf16.mxu0 0
      %688 = vmatpush1.bf16.msra.mxu0 0
      %689 = vmatprep.subr.bf16.mxu0 0
      %690 = vmatpush1.bf16.msra.mxu0 0
      %691 = vmatprep.subr.bf16.mxu0 0
      %692 = vmatpush1.bf16.msra.mxu0 0
      %693 = vmatprep.subr.bf16.mxu0 0
      %694 = vmatpush1.bf16.msra.mxu0 0
      %695 = vmatprep.subr.bf16.mxu0 0
      %696 = vmatpush1.bf16.msra.mxu0 0
      %697 = vmatprep.subr.bf16.mxu0 0
      %698 = vmatpush1.bf16.msra.mxu0 0
      %699 = vmatprep.subr.bf16.mxu0 0
      %700 = vmatpush1.bf16.msra.mxu0 0
      %701 = vmatprep.subr.bf16.mxu0 0
      %702 = vmatpush1.bf16.msra.mxu0 0
      %703 = vmatprep.mubr.bf16.mxu0 0
      %704 = vmatmul.mubr.bf16.gmra.mrb[0].mxu0 %v533
      %v705 = vpop.f32.mrb[0].mxu0
      %v706 = vadd.f32 %v666, %v705
      %v707 = vpop.f32.mrb[0].mxu0
      %v708 = vpop.f32.mrb[0].mxu0
      %v709 = vpop.f32.mrb[0].mxu0
      %710 = vdwg.mxu0
      %s711 = scalar_lea.vmem %s172, 12
      %v712 = vld [vmem:[%s711] sm:$0x3]
      %v714 = vsel %vm216, %v712, 0
      %716 = vmatprep.subr.bf16.mxu0 0
      %717 = vmatpush1.bf16.msra.mxu0 %v330
      %718 = vmatprep.subr.bf16.mxu0 0
      %719 = vmatpush1.bf16.msra.mxu0 %v331
      %720 = vmatprep.subr.bf16.mxu0 0
      %721 = vmatpush1.bf16.msra.mxu0 0
      %722 = vmatprep.subr.bf16.mxu0 0
      %723 = vmatpush1.bf16.msra.mxu0 0
      %724 = vmatprep.subr.bf16.mxu0 0
      %725 = vmatpush1.bf16.msra.mxu0 0
      %726 = vmatprep.subr.bf16.mxu0 0
      %727 = vmatpush1.bf16.msra.mxu0 0
      %728 = vmatprep.subr.bf16.mxu0 0
      %729 = vmatpush1.bf16.msra.mxu0 0
      %730 = vmatprep.subr.bf16.mxu0 0
      %731 = vmatpush1.bf16.msra.mxu0 0
      %732 = vmatprep.subr.bf16.mxu0 0
      %733 = vmatpush1.bf16.msra.mxu0 0
      %734 = vmatprep.subr.bf16.mxu0 0
      %735 = vmatpush1.bf16.msra.mxu0 0
      %736 = vmatprep.subr.bf16.mxu0 0
      %737 = vmatpush1.bf16.msra.mxu0 0
      %738 = vmatprep.subr.bf16.mxu0 0
      %739 = vmatpush1.bf16.msra.mxu0 0
      %740 = vmatprep.subr.bf16.mxu0 0
      %741 = vmatpush1.bf16.msra.mxu0 0
      %742 = vmatprep.subr.bf16.mxu0 0
      %743 = vmatpush1.bf16.msra.mxu0 0
      %744 = vmatprep.subr.bf16.mxu0 0
      %745 = vmatpush1.bf16.msra.mxu0 0
      %746 = vmatprep.subr.bf16.mxu0 0
      %747 = vmatpush1.bf16.msra.mxu0 0
      %748 = vmatprep.mubr.bf16.mxu0 0
      %749 = vmatmul.mubr.bf16.gmra.mrb[0].mxu0 %v714
      %v750 = vpop.f32.mrb[0].mxu0
      %v751 = vadd.f32 0.0, %v750
      %v752 = vpop.f32.mrb[0].mxu0
      %v753 = vpop.f32.mrb[0].mxu0
      %v754 = vpop.f32.mrb[0].mxu0
      %755 = vdwg.mxu0
      %v756 = vadd.f32 %v706, %v751
      %v757 = vld [vmem:[%s711] sm:$0x7]
      %v759 = vunpack.c.l.b16 %v757
      %v760 = vpack.c.b16 %v759, %v759
      %v762 = vshrl.u32 %v760, 16
      %v764 = vshll.u32 %v760, 16
      %v766 = vrot.slane %v764, 1
      %v767 = vor.u32 %v762, %v766
      %v769 = vsel %vm216, %v767, 0
      %771 = vmatprep.subr.bf16.mxu0 0
      %772 = vmatpush1.bf16.msra.mxu0 %v402
      %773 = vmatprep.subr.bf16.mxu0 0
      %774 = vmatpush1.bf16.msra.mxu0 %v403
      %775 = vmatprep.subr.bf16.mxu0 0
      %776 = vmatpush1.bf16.msra.mxu0 0
      %777 = vmatprep.subr.bf16.mxu0 0
      %778 = vmatpush1.bf16.msra.mxu0 0
      %779 = vmatprep.subr.bf16.mxu0 0
      %780 = vmatpush1.bf16.msra.mxu0 0
      %781 = vmatprep.subr.bf16.mxu0 0
      %782 = vmatpush1.bf16.msra.mxu0 0
      %783 = vmatprep.subr.bf16.mxu0 0
      %784 = vmatpush1.bf16.msra.mxu0 0
      %785 = vmatprep.subr.bf16.mxu0 0
      %786 = vmatpush1.bf16.msra.mxu0 0
      %787 = vmatprep.subr.bf16.mxu0 0
      %788 = vmatpush1.bf16.msra.mxu0 0
      %789 = vmatprep.subr.bf16.mxu0 0
      %790 = vmatpush1.bf16.msra.mxu0 0
      %791 = vmatprep.subr.bf16.mxu0 0
      %792 = vmatpush1.bf16.msra.mxu0 0
      %793 = vmatprep.subr.bf16.mxu0 0
      %794 = vmatpush1.bf16.msra.mxu0 0
      %795 = vmatprep.subr.bf16.mxu0 0
      %796 = vmatpush1.bf16.msra.mxu0 0
      %797 = vmatprep.subr.bf16.mxu0 0
      %798 = vmatpush1.bf16.msra.mxu0 0
      %799 = vmatprep.subr.bf16.mxu0 0
      %800 = vmatpush1.bf16.msra.mxu0 0
      %801 = vmatprep.subr.bf16.mxu0 0
      %802 = vmatpush1.bf16.msra.mxu0 0
      %803 = vmatprep.mubr.bf16.mxu0 0
      %804 = vmatmul.mubr.bf16.gmra.mrb[0].mxu0 %v769
      %v805 = vpop.f32.mrb[0].mxu0
      %v806 = vadd.f32 0.0, %v805
      %v807 = vpop.f32.mrb[0].mxu0
      %v808 = vpop.f32.mrb[0].mxu0
      %v809 = vpop.f32.mrb[0].mxu0
      %810 = vdwg.mxu0
      %v811 = vadd.f32 %v756, %v806
      %812 = vmatprep.subr.bf16.mxu0 0
      %813 = vmatpush1.bf16.msra.mxu0 %v212
      %814 = vmatprep.subr.bf16.mxu0 0
      %815 = vmatpush1.bf16.msra.mxu0 %v213
      %816 = vmatprep.subr.bf16.mxu0 0
      %817 = vmatpush1.bf16.msra.mxu0 0
      %818 = vmatprep.subr.bf16.mxu0 0
      %819 = vmatpush1.bf16.msra.mxu0 0
      %820 = vmatprep.subr.bf16.mxu0 0
      %821 = vmatpush1.bf16.msra.mxu0 0
      %822 = vmatprep.subr.bf16.mxu0 0
      %823 = vmatpush1.bf16.msra.mxu0 0
      %824 = vmatprep.subr.bf16.mxu0 0
      %825 = vmatpush1.bf16.msra.mxu0 0
      %826 = vmatprep.subr.bf16.mxu0 0
      %827 = vmatpush1.bf16.msra.mxu0 0
      %828 = vmatprep.subr.bf16.mxu0 0
      %829 = vmatpush1.bf16.msra.mxu0 0
      %830 = vmatprep.subr.bf16.mxu0 0
      %831 = vmatpush1.bf16.msra.mxu0 0
      %832 = vmatprep.subr.bf16.mxu0 0
      %833 = vmatpush1.bf16.msra.mxu0 0
      %834 = vmatprep.subr.bf16.mxu0 0
      %835 = vmatpush1.bf16.msra.mxu0 0
      %836 = vmatprep.subr.bf16.mxu0 0
      %837 = vmatpush1.bf16.msra.mxu0 0
      %838 = vmatprep.subr.bf16.mxu0 0
      %839 = vmatpush1.bf16.msra.mxu0 0
      %840 = vmatprep.subr.bf16.mxu0 0
      %841 = vmatpush1.bf16.msra.mxu0 0
      %842 = vmatprep.subr.bf16.mxu0 0
      %843 = vmatpush1.bf16.msra.mxu0 0
      %844 = vmatprep.mubr.bf16.mxu0 0
      %845 = vmatmul.mubr.bf16.gmra.mrb[0].mxu0 %v769
      %v846 = vpop.f32.mrb[0].mxu0
      %v847 = vadd.f32 0.0, %v846
      %v848 = vpop.f32.mrb[0].mxu0
      %v849 = vpop.f32.mrb[0].mxu0
      %v850 = vpop.f32.mrb[0].mxu0
      %851 = vdwg.mxu0
      %852 = vmatprep.subr.bf16.mxu0 0
      %853 = vmatpush1.bf16.msra.mxu0 %v268
      %854 = vmatprep.subr.bf16.mxu0 0
      %855 = vmatpush1.bf16.msra.mxu0 %v269
      %856 = vmatprep.subr.bf16.mxu0 0
      %857 = vmatpush1.bf16.msra.mxu0 0
      %858 = vmatprep.subr.bf16.mxu0 0
      %859 = vmatpush1.bf16.msra.mxu0 0
      %860 = vmatprep.subr.bf16.mxu0 0
      %861 = vmatpush1.bf16.msra.mxu0 0
      %862 = vmatprep.subr.bf16.mxu0 0
      %863 = vmatpush1.bf16.msra.mxu0 0
      %864 = vmatprep.subr.bf16.mxu0 0
      %865 = vmatpush1.bf16.msra.mxu0 0
      %866 = vmatprep.subr.bf16.mxu0 0
      %867 = vmatpush1.bf16.msra.mxu0 0
      %868 = vmatprep.subr.bf16.mxu0 0
      %869 = vmatpush1.bf16.msra.mxu0 0
      %870 = vmatprep.subr.bf16.mxu0 0
      %871 = vmatpush1.bf16.msra.mxu0 0
      %872 = vmatprep.subr.bf16.mxu0 0
      %873 = vmatpush1.bf16.msra.mxu0 0
      %874 = vmatprep.subr.bf16.mxu0 0
      %875 = vmatpush1.bf16.msra.mxu0 0
      %876 = vmatprep.subr.bf16.mxu0 0
      %877 = vmatpush1.bf16.msra.mxu0 0
      %878 = vmatprep.subr.bf16.mxu0 0
      %879 = vmatpush1.bf16.msra.mxu0 0
      %880 = vmatprep.subr.bf16.mxu0 0
      %881 = vmatpush1.bf16.msra.mxu0 0
      %882 = vmatprep.subr.bf16.mxu0 0
      %883 = vmatpush1.bf16.msra.mxu0 0
      %884 = vmatprep.mubr.bf16.mxu0 0
      %885 = vmatmul.mubr.bf16.gmra.mrb[0].mxu0 %v714
      %v886 = vpop.f32.mrb[0].mxu0
      %v887 = vadd.f32 %v847, %v886
      %v888 = vpop.f32.mrb[0].mxu0
      %v889 = vpop.f32.mrb[0].mxu0
      %v890 = vpop.f32.mrb[0].mxu0
      %891 = vdwg.mxu0
      %s892 = scalar_lea.vmem %s172, 16
      %v893 = vld [vmem:[%s892] sm:$0x3]
      %v895 = vsel %vm216, %v893, 0
      %897 = vmatprep.subr.bf16.mxu0 0
      %898 = vmatpush1.bf16.msra.mxu0 %v330
      %899 = vmatprep.subr.bf16.mxu0 0
      %900 = vmatpush1.bf16.msra.mxu0 %v331
      %901 = vmatprep.subr.bf16.mxu0 0
      %902 = vmatpush1.bf16.msra.mxu0 0
      %903 = vmatprep.subr.bf16.mxu0 0
      %904 = vmatpush1.bf16.msra.mxu0 0
      %905 = vmatprep.subr.bf16.mxu0 0
      %906 = vmatpush1.bf16.msra.mxu0 0
      %907 = vmatprep.subr.bf16.mxu0 0
      %908 = vmatpush1.bf16.msra.mxu0 0
      %909 = vmatprep.subr.bf16.mxu0 0
      %910 = vmatpush1.bf16.msra.mxu0 0
      %911 = vmatprep.subr.bf16.mxu0 0
      %912 = vmatpush1.bf16.msra.mxu0 0
      %913 = vmatprep.subr.bf16.mxu0 0
      %914 = vmatpush1.bf16.msra.mxu0 0
      %915 = vmatprep.subr.bf16.mxu0 0
      %916 = vmatpush1.bf16.msra.mxu0 0
      %917 = vmatprep.subr.bf16.mxu0 0
      %918 = vmatpush1.bf16.msra.mxu0 0
      %919 = vmatprep.subr.bf16.mxu0 0
      %920 = vmatpush1.bf16.msra.mxu0 0
      %921 = vmatprep.subr.bf16.mxu0 0
      %922 = vmatpush1.bf16.msra.mxu0 0
      %923 = vmatprep.subr.bf16.mxu0 0
      %924 = vmatpush1.bf16.msra.mxu0 0
      %925 = vmatprep.subr.bf16.mxu0 0
      %926 = vmatpush1.bf16.msra.mxu0 0
      %927 = vmatprep.subr.bf16.mxu0 0
      %928 = vmatpush1.bf16.msra.mxu0 0
      %929 = vmatprep.mubr.bf16.mxu0 0
      %930 = vmatmul.mubr.bf16.gmra.mrb[0].mxu0 %v895
      %v931 = vpop.f32.mrb[0].mxu0
      %v932 = vadd.f32 0.0, %v931
      %v933 = vpop.f32.mrb[0].mxu0
      %v934 = vpop.f32.mrb[0].mxu0
      %v935 = vpop.f32.mrb[0].mxu0
      %936 = vdwg.mxu0
      %v937 = vadd.f32 %v887, %v932
      %v938 = vld [vmem:[%s892] sm:$0x7]
      %v940 = vunpack.c.l.b16 %v938
      %v941 = vpack.c.b16 %v940, %v940
      %v943 = vshrl.u32 %v941, 16
      %v945 = vshll.u32 %v941, 16
      %v947 = vrot.slane %v945, 1
      %v948 = vor.u32 %v943, %v947
      %v950 = vsel %vm216, %v948, 0
      %952 = vmatprep.subr.bf16.mxu0 0
      %953 = vmatpush1.bf16.msra.mxu0 %v402
      %954 = vmatprep.subr.bf16.mxu0 0
      %955 = vmatpush1.bf16.msra.mxu0 %v403
      %956 = vmatprep.subr.bf16.mxu0 0
      %957 = vmatpush1.bf16.msra.mxu0 0
      %958 = vmatprep.subr.bf16.mxu0 0
      %959 = vmatpush1.bf16.msra.mxu0 0
      %960 = vmatprep.subr.bf16.mxu0 0
      %961 = vmatpush1.bf16.msra.mxu0 0
      %962 = vmatprep.subr.bf16.mxu0 0
      %963 = vmatpush1.bf16.msra.mxu0 0
      %964 = vmatprep.subr.bf16.mxu0 0
      %965 = vmatpush1.bf16.msra.mxu0 0
      %966 = vmatprep.subr.bf16.mxu0 0
      %967 = vmatpush1.bf16.msra.mxu0 0
      %968 = vmatprep.subr.bf16.mxu0 0
      %969 = vmatpush1.bf16.msra.mxu0 0
      %970 = vmatprep.subr.bf16.mxu0 0
      %971 = vmatpush1.bf16.msra.mxu0 0
      %972 = vmatprep.subr.bf16.mxu0 0
      %973 = vmatpush1.bf16.msra.mxu0 0
      %974 = vmatprep.subr.bf16.mxu0 0
      %975 = vmatpush1.bf16.msra.mxu0 0
      %976 = vmatprep.subr.bf16.mxu0 0
      %977 = vmatpush1.bf16.msra.mxu0 0
      %978 = vmatprep.subr.bf16.mxu0 0
      %979 = vmatpush1.bf16.msra.mxu0 0
      %980 = vmatprep.subr.bf16.mxu0 0
      %981 = vmatpush1.bf16.msra.mxu0 0
      %982 = vmatprep.subr.bf16.mxu0 0
      %983 = vmatpush1.bf16.msra.mxu0 0
      %984 = vmatprep.mubr.bf16.mxu0 0
      %985 = vmatmul.mubr.bf16.gmra.mrb[0].mxu0 %v950
      %v986 = vpop.f32.mrb[0].mxu0
      %v987 = vadd.f32 0.0, %v986
      %v988 = vpop.f32.mrb[0].mxu0
      %v989 = vpop.f32.mrb[0].mxu0
      %v990 = vpop.f32.mrb[0].mxu0
      %991 = vdwg.mxu0
      %v992 = vadd.f32 %v937, %v987
      %vm993 = vcmask 125952
      %994 = vst.msk [vmem:[%s177] sm:$0xf] %vm993, %v449
      %v995 = vmul.f32 %v449, %v449
      %s996 = scalar_lea.vmem %s177, 4
      %997 = vst.msk [vmem:[%s996] sm:$0xf] %vm993, %v630
      %v998 = vadd.f32 %v449, %v630
      %v999 = vmul.f32 %v630, %v630
      %v1000 = vadd.f32 %v995, %v999
      %s1001 = scalar_lea.vmem %s177, 8
      %1002 = vst.msk [vmem:[%s1001] sm:$0xf] %vm993, %v811
      %v1003 = vadd.f32 %v998, %v811
      %v1004 = vmul.f32 %v811, %v811
      %v1005 = vadd.f32 %v1000, %v1004
      %s1006 = scalar_lea.vmem %s177, 12
      %1007 = vst.msk [vmem:[%s1006] sm:$0xf] %vm993, %v992
      %v1008 = vadd.f32 %v1003, %v992
      %v1009 = vmul.f32 %v992, %v992
      %v1010 = vadd.f32 %v1005, %v1009
      %v1011 = vsel %vm993, %v1008, 0.0
      %v1012 = vrot.slane %v1011, 4
      %v1013 = vadd.f32 %v1011, %v1012
      %v1014 = vrot.slane %v1013, 2
      %v1015 = vadd.f32 %v1013, %v1014
      %v1016 = vrot.slane %v1015, 1
      %v1017 = vadd.f32 %v1015, %v1016
      %vm1018 = vcmask 122880
      %1019 = vst.msk [vmem:[%s181] sm:$0x1] %vm1018, %v1017
      %v1020 = vsel %vm993, %v1010, 0.0
      %v1021 = vrot.slane %v1020, 4
      %v1022 = vadd.f32 %v1020, %v1021
      %v1023 = vrot.slane %v1022, 2
      %v1024 = vadd.f32 %v1022, %v1023
      %v1025 = vrot.slane %v1024, 1
      %v1026 = vadd.f32 %v1024, %v1025
      %1027 = vst.msk [vmem:[%s181 + $0x1] sm:$0x1] %vm1018, %v1026
      %p1028 = scmp.lt.s32.totalorder %s15, 1
      %s1029 = scalar_select %p1028, %s15, 1
      %s1030 = smul.addr %s1029, 4
      %s1031 = smul.addr %s1030, 4
      %s1032 = scalar_lea.vmem %s2, %s1031
      %p1033 = scmp.lt.s32.totalorder %s15, 1
      %s1034 = scalar_select %p1033, %s15, 1
      %s1035 = smul.addr %s1034, 2
      %s1036 = scalar_lea.vmem %s3, %s1035
      // Predicated region
      $region29: #{dcgan_d_forward.4} parent=27 // pred_check
        %p1037 = pneg %p80
      $region30: #{dcgan_d_forward.4} parent=27 // pred_check_branch
        %1039 = sbr.rel (%p1037) target = $region32
      $region31: #{dcgan_d_forward.4} parent=27 // pred_region
        _
      $region32: #{dcgan_d_forward.4} parent=27 // pred_fallthru
        _
      // Predicated region
      $region33: #{dcgan_d_forward.4} parent=27 // pred_check
        %p1040 = pneg %p106
      $region34: #{dcgan_d_forward.4} parent=27 // pred_check_branch
        %1042 = sbr.rel (%p1040) target = $region36
      $region35: #{dcgan_d_forward.4} parent=27 // pred_region
        _
      $region36: #{dcgan_d_forward.4} parent=27 // pred_fallthru
        _
    $region28: #{dcgan_d_forward.4} parent=5 // pred_fallthru
      _
    %p1043 = scmp.le.s32.totalorder 2, %s10
    // Predicated region
    $region37: #{dcgan_d_forward.4} parent=5 // pred_check
      %p1044 = pneg %p1043
    $region38: #{dcgan_d_forward.4} parent=5 // pred_check_branch
      %1046 = sbr.rel (%p1044) target = $region40
    $region39: #{dcgan_d_forward.4} parent=5 // pred_region
      %s1047 = ssub.s32 %s10, 2
      // Predicated region
      $region41: #{dcgan_d_forward.4} parent=39 // pred_check
        %p1048 = pneg %p86
      $region42: #{dcgan_d_forward.4} parent=39 // pred_check_branch
        %1050 = sbr.rel (%p1048) target = $region44
      $region43: #{dcgan_d_forward.4} parent=39 // pred_region
        %p1051 = scmp.lt.s32.totalorder %s16, 1
        %s1052 = scalar_select %p1051, %s16, 1
        %s1053 = smul.addr %s1052, 4
        %s1054 = smul.addr %s1053, 4
        %s1055 = scalar_lea.vmem %s2, %s1054
      $region44: #{dcgan_d_forward.4} parent=39 // pred_fallthru
        _
      // Predicated region
      $region45: #{dcgan_d_forward.4} parent=39 // pred_check
        %p1056 = pneg %p112
      $region46: #{dcgan_d_forward.4} parent=39 // pred_check_branch
        %1058 = sbr.rel (%p1056) target = $region48
      $region47: #{dcgan_d_forward.4} parent=39 // pred_region
        %p1059 = scmp.lt.s32.totalorder %s16, 1
        %s1060 = scalar_select %p1059, %s16, 1
        %s1061 = smul.addr %s1060, 2
        %s1062 = scalar_lea.vmem %s3, %s1061
      $region48: #{dcgan_d_forward.4} parent=39 // pred_fallthru
        _
    $region40: #{dcgan_d_forward.4} parent=5 // pred_fallthru
      _
  $region6: #{dcgan_d_forward.4} parent=0 // loop_footer
    %s14 = sadd.s32 1, %s10
  $region7: #{dcgan_d_forward.4} parent=0 // loop_footer_branch
    %9 = sbr.rel target = $region3
  $region8: #{dcgan_d_forward.4} parent=0 // loop_exit
    _

// kernel: dcgan_d_forward.3
$region0: #{dcgan_d_forward.3}
  #allocation0 [shape = 'u32[]', space=smem, size = 0x4, offset = 0x4, fixed_abs, tag = 'smem constant byte address 0x4 - core index']
  #allocation1 [shape = 'u32[144,128]{1,0:T(1,128)}', space=vmem, size = 0x12000, scoped, tag = 'internal scratch']
  #allocation2 [shape = 'f32[1,5,10,16]{3,2,1,0:T(8,128)}', space=vmem, size = 0xa000, scoped, tag = 'scratch operand']
  %s0 = inlined_call_operand.vmem [shape: bf16[2,9,9,16], index: 0, kind: input, shape index: {}]
  %s1 = inlined_call_operand.vmem [shape: bf16[4,16,8], index: 1, kind: input, shape index: {}]
  %s2 = inlined_call_operand.vmem [shape: bf16[2,5,10,16], index: 2, kind: output, shape index: {}]
  %s3 = sld [smem:[#allocation0]]
  $region41: #{dcgan_d_forward.3} parent=0
    _
  %s5 = ssub.s32 1, %s3
  %s6 = scalar_select 0, %s5, %s3
  loop: start=0, step=1, limit=4
  $region2: #{dcgan_d_forward.3} parent=0 // loop_pre_header
    _
  $region3: #{dcgan_d_forward.3} parent=0 // loop_header
    %s8 = sphi 0, %s12
    %p9 = scmp.ge.s32.totalorder %s8, 4
    %s18 = sphi 0, %s20
    %s21 = sphi 0, %s18
    %s22 = sphi 0, %s21
    %s38 = sphi 0, %s22
    %s42 = sphi 0, %s42
    %s44 = sphi 0, %s42
    %s45 = sphi 0, %s44
    %s59 = sphi 0, %s45
    %s65 = sphi 0, %s67
    %s68 = sphi 0, %s65
    %s69 = sphi 0, %s68
    %s85 = sphi 0, %s69
  $region4: #{dcgan_d_forward.3} parent=0 // loop_header_branch
    %11 = sbr.rel (%p9) target = $region8
  $region5: #{dcgan_d_forward.3} parent=0 // loop_body
    %s13 = ssub.s32 %s8, 1
    %s14 = ssub.s32 %s8, 2
    %s15 = sadd.s32 %s8, 1
    %s16 = ssub.s32 %s8, %s15
    %p17 = scmp.eq.s32.totalorder %s16, 0
    %s19 = sadd.s32 %s18, 1
    %s20 = scalar_select %p17, %s18, %s19
    %p23 = pneg %p17
    %p24 = scmp.eq.s32.totalorder %s8, 1
    %p25 = por %p23, %p24
    %p26 = scmp.ne.s32.totalorder %s18, %s21
    %p27 = scmp.eq.s32.totalorder %s8, 0
    %p28 = por %p26, %p27
    %p29 = scmp.ne.s32.totalorder %s18, %s21
    %p30 = scmp.eq.s32.totalorder %s13, 1
    %p31 = por %p29, %p30
    %p32 = scmp.ne.s32.totalorder %s21, %s22
    %p33 = scmp.eq.s32.totalorder %s13, 0
    %p34 = por %p32, %p33
    %p35 = scmp.ne.s32.totalorder %s21, %s22
    %p36 = scmp.eq.s32.totalorder %s14, 1
    %p37 = por %p35, %p36
    %p39 = scmp.ne.s32.totalorder %s22, %s38
    %p40 = scmp.eq.s32.totalorder %s14, 0
    %p41 = por %p39, %p40
    %s43 = sadd.s32 %s42, 1
    %p46 = scmp.eq.s32.totalorder %s8, 1
    %p47 = scmp.ne.s32.totalorder %s42, %s44
    %p48 = scmp.eq.s32.totalorder %s8, 0
    %p49 = por %p47, %p48
    %p50 = scmp.ne.s32.totalorder %s42, %s44
    %p51 = scmp.eq.s32.totalorder %s13, 1
    %p52 = por %p50, %p51
    %p53 = scmp.ne.s32.totalorder %s44, %s45
    %p54 = scmp.eq.s32.totalorder %s13, 0
    %p55 = por %p53, %p54
    %p56 = scmp.ne.s32.totalorder %s44, %s45
    %p57 = scmp.eq.s32.totalorder %s14, 1
    %p58 = por %p56, %p57
    %p60 = scmp.ne.s32.totalorder %s45, %s59
    %p61 = scmp.eq.s32.totalorder %s14, 0
    %p62 = por %p60, %p61
    %s63 = ssub.s32 %s8, %s15
    %p64 = scmp.eq.s32.totalorder %s63, 0
    %s66 = sadd.s32 %s65, 1
    %s67 = scalar_select %p64, %s65, %s66
    %p70 = pneg %p64
    %p71 = scmp.eq.s32.totalorder %s8, 1
    %p72 = por %p70, %p71
    %p73 = scmp.ne.s32.totalorder %s65, %s68
    %p74 = scmp.eq.s32.totalorder %s8, 0
    %p75 = por %p73, %p74
    %p76 = scmp.ne.s32.totalorder %s65, %s68
    %p77 = scmp.eq.s32.totalorder %s13, 1
    %p78 = por %p76, %p77
    %p79 = scmp.ne.s32.totalorder %s68, %s69
    %p80 = scmp.eq.s32.totalorder %s13, 0
    %p81 = por %p79, %p80
    %p82 = scmp.ne.s32.totalorder %s68, %s69
    %p83 = scmp.eq.s32.totalorder %s14, 1
    %p84 = por %p82, %p83
    %p86 = scmp.ne.s32.totalorder %s69, %s85
    %p87 = scmp.eq.s32.totalorder %s14, 0
    %p88 = por %p86, %p87
    %p89 = scmp.le.s32.totalorder 1, %s8
    %p90 = scmp.lt.s32.totalorder %s8, 3
    %p91 = pnand %p89, %p90
    %p92 = pneg %p91
    // Predicated region
    $region9: #{dcgan_d_forward.3} parent=5 // pred_check
      _
    $region10: #{dcgan_d_forward.3} parent=5 // pred_check_branch
      %94 = sbr.rel (%p91) target = $region12
    $region11: #{dcgan_d_forward.3} parent=5 // pred_region
      %s95 = ssub.s32 %s8, 1
      // Predicated region
      $region13: #{dcgan_d_forward.3} parent=11 // pred_check
        %p96 = pneg %p55
      $region14: #{dcgan_d_forward.3} parent=11 // pred_check_branch
        %98 = sbr.rel (%p96) target = $region16
      $region15: #{dcgan_d_forward.3} parent=11 // pred_region
        _
      $region16: #{dcgan_d_forward.3} parent=11 // pred_fallthru
        _
    $region12: #{dcgan_d_forward.3} parent=5 // pred_fallthru
      _
    %p99 = scmp.lt.s32.totalorder %s8, 2
    // Predicated region
    $region17: #{dcgan_d_forward.3} parent=5 // pred_check
      %p100 = pneg %p99
    $region18: #{dcgan_d_forward.3} parent=5 // pred_check_branch
      %102 = sbr.rel (%p100) target = $region20
    $region19: #{dcgan_d_forward.3} parent=5 // pred_region
      // Predicated region
      $region21: #{dcgan_d_forward.3} parent=19 // pred_check
        %p103 = pneg %p28
      $region22: #{dcgan_d_forward.3} parent=19 // pred_check_branch
        %105 = sbr.rel (%p103) target = $region24
      $region23: #{dcgan_d_forward.3} parent=19 // pred_region
        %p106 = scmp.lt.s32.totalorder %s8, 1
        %s107 = scalar_select %p106, %s8, 1
        %s108 = smul.addr %s107, 18
        %s109 = smul.addr %s108, 4
        %s110 = scalar_lea.vmem %s0, %s109
      $region24: #{dcgan_d_forward.3} parent=19 // pred_fallthru
        _
    $region20: #{dcgan_d_forward.3} parent=5 // pred_fallthru
      _
    %p111 = scmp.le.s32.totalorder 1, %s8
    %p112 = scmp.lt.s32.totalorder %s8, 3
    %p113 = pnand %p111, %p112
    %p114 = pneg %p113
    // Predicated region
    $region25: #{dcgan_d_forward.3} parent=5 // pred_check
      _
    $region26: #{dcgan_d_forward.3} parent=5 // pred_check_branch
      %116 = sbr.rel (%p113) target = $region28
    $region27: #{dcgan_d_forward.3} parent=5 // pred_region
      %s117 = ssub.s32 %s8, 1
      %p118 = scmp.lt.s32.totalorder %s13, 1
      %s119 = scalar_select %p118, %s13, 1
      %s120 = smul.addr %s119, 18
      %s121 = smul.addr %s120, 4
      %s122 = scalar_lea.vmem %s0, %s121
      %p123 = pneg %p34
      %p124 = pneg %p31
      %p125 = pneg %p55
      %p126 = pneg %p52
      %p127 = pneg %p81
      %p128 = pneg %p78
      %p129 = scmp.lt.s32.totalorder %s13, 1
      %s130 = scalar_select %p129, %s13, 1
      %s131 = smul.addr %s130, 10
      %s132 = smul.addr %s131, 4
      %s133 = scalar_lea.vmem %s2, %s132
      %p134 = scmp.lt.s32.totalorder %s13, 1
      %s135 = scalar_select %p134, %s13, 1
      %s136 = smul.addr %s135, 18
      %s137 = smul.addr %s136, 4
      %s138 = scalar_lea.vmem %s0, %s137
      %p139 = scmp.lt.s32.totalorder %s13, 1
      %s140 = scalar_select %p139, %s13, 1
      %s141 = smul.addr %s140, 10
      %s142 = smul.addr %s141, 4
      %s143 = scalar_lea.vmem %s2, %s142
      %vm145 = vcmask 130048
      %146 = vst.msk [vmem:[#allocation2] sm:$0xff] %vm145, 0.0
      %vm147 = vcmask 123904
      %148 = vst.msk [vmem:[#allocation2 + $0x8] sm:$0x3] %vm147, 0.0
      %149 = vst.msk [vmem:[#allocation2 + $0x10] sm:$0xff] %vm145, 0.0
      %150 = vst.msk [vmem:[#allocation2 + $0x18] sm:$0x3] %vm147, 0.0
      %151 = vst.msk [vmem:[#allocation2 + $0x20] sm:$0xff] %vm145, 0.0
      %152 = vst.msk [vmem:[#allocation2 + $0x28] sm:$0x3] %vm147, 0.0
      %153 = vst.msk [vmem:[#allocation2 + $0x30] sm:$0xff] %vm145, 0.0
      %154 = vst.msk [vmem:[#allocation2 + $0x38] sm:$0x3] %vm147, 0.0
      %155 = vst.msk [vmem:[#allocation2 + $0x40] sm:$0xff] %vm145, 0.0
      %156 = vst.msk [vmem:[#allocation2 + $0x48] sm:$0x3] %vm147, 0.0
      %v157 = vld [vmem:[%s138] sm:$0xf]
      %v158 = vld [vmem:[%s1] sm:$0xf]
      %v159 = vld [vmem:[%s1 + $0x4] sm:$0xf]
      %v160 = vld [vmem:[%s138 + $0x4] sm:$0x1]
      %s161 = scalar_lea.vmem %s1, 8
      %v162 = vld [vmem:[%s161] sm:$0xf]
      %v163 = vld [vmem:[%s161 + $0x4] sm:$0xf]
      %v166 = vunpack.c.l.b16 %v157
      %v167 = vunpack.c.l.b16 %v160
      %v168 = vpack.c.b16 %v167, %v166
      %v170 = vshrl.u32 %v168, 16
      %v172 = vshll.u32 %v168, 16
      %v174 = vrot.slane %v172, 1
      %v175 = vor.u32 %v170, %v174
      %v178 = vunpack.c.l.b16 %v162
      %v179 = vunpack.c.l.b16 %v163
      %v180 = vpack.c.b16 %v179, %v178
      %v183 = vsel %vm145, %v175, 0
      %185 = vmatprep.subr.bf16.mxu0 0
      %186 = vmatpush1.bf16.msra.mxu0 %v180
      %187 = vmatprep.subr.bf16.mxu0 0
      %188 = vmatpush1.bf16.msra.mxu0 0
      %189 = vmatprep.subr.bf16.mxu0 0
      %190 = vmatpush1.bf16.msra.mxu0 0
      %191 = vmatprep.subr.bf16.mxu0 0
      %192 = vmatpush1.bf16.msra.mxu0 0
      %193 = vmatprep.subr.bf16.mxu0 0
      %194 = vmatpush1.bf16.msra.mxu0 0
      %195 = vmatprep.subr.bf16.mxu0 0
      %196 = vmatpush1.bf16.msra.mxu0 0
      %197 = vmatprep.subr.bf16.mxu0 0
      %198 = vmatpush1.bf16.msra.mxu0 0
      %199 = vmatprep.subr.bf16.mxu0 0
      %200 = vmatpush1.bf16.msra.mxu0 0
      %201 = vmatprep.subr.bf16.mxu0 0
      %202 = vmatpush1.bf16.msra.mxu0 0
      %203 = vmatprep.subr.bf16.mxu0 0
      %204 = vmatpush1.bf16.msra.mxu0 0
      %205 = vmatprep.subr.bf16.mxu0 0
      %206 = vmatpush1.bf16.msra.mxu0 0
      %207 = vmatprep.subr.bf16.mxu0 0
      %208 = vmatpush1.bf16.msra.mxu0 0
      %209 = vmatprep.subr.bf16.mxu0 0
      %210 = vmatpush1.bf16.msra.mxu0 0
      %211 = vmatprep.subr.bf16.mxu0 0
      %212 = vmatpush1.bf16.msra.mxu0 0
      %213 = vmatprep.subr.bf16.mxu0 0
      %214 = vmatpush1.bf16.msra.mxu0 0
      %215 = vmatprep.subr.bf16.mxu0 0
      %216 = vmatpush1.bf16.msra.mxu0 0
      %217 = vmatprep.mubr.bf16.mxu0 0
      %218 = vmatmul.mubr.bf16.gmra.mrb[0].mxu0 %v183
      %v219 = vpop.f32.mrb[0].mxu0
      %v220 = vadd.f32 0.0, %v219
      %v221 = vpop.f32.mrb[0].mxu0
      %v222 = vpop.f32.mrb[0].mxu0
      %v223 = vpop.f32.mrb[0].mxu0
      %224 = vdwg.mxu0
      %v227 = vunpack.c.l.b16 %v158
      %v228 = vunpack.c.l.b16 %v159
      %v229 = vpack.c.b16 %v228, %v227
      %v232 = vsel %vm145, %v157, 0
      %234 = vmatprep.subr.bf16.mxu0 0
      %235 = vmatpush1.bf16.msra.mxu0 %v229
      %236 = vmatprep.subr.bf16.mxu0 0
      %237 = vmatpush1.bf16.msra.mxu0 0
      %238 = vmatprep.subr.bf16.mxu0 0
      %239 = vmatpush1.bf16.msra.mxu0 0
      %240 = vmatprep.subr.bf16.mxu0 0
      %241 = vmatpush1.bf16.msra.mxu0 0
      %242 = vmatprep.subr.bf16.mxu0 0
      %243 = vmatpush1.bf16.msra.mxu0 0
      %244 = vmatprep.subr.bf16.mxu0 0
      %245 = vmatpush1.bf16.msra.mxu0 0
      %246 = vmatprep.subr.bf16.mxu0 0
      %247 = vmatpush1.bf16.msra.mxu0 0
      %248 = vmatprep.subr.bf16.mxu0 0
      %249 = vmatpush1.bf16.msra.mxu0 0
      %250 = vmatprep.subr.bf16.mxu0 0
      %251 = vmatpush1.bf16.msra.mxu0 0
      %252 = vmatprep.subr.bf16.mxu0 0
      %253 = vmatpush1.bf16.msra.mxu0 0
      %254 = vmatprep.subr.bf16.mxu0 0
      %255 = vmatpush1.bf16.msra.mxu0 0
      %256 = vmatprep.subr.bf16.mxu0 0
      %257 = vmatpush1.bf16.msra.mxu0 0
      %258 = vmatprep.subr.bf16.mxu0 0
      %259 = vmatpush1.bf16.msra.mxu0 0
      %260 = vmatprep.subr.bf16.mxu0 0
      %261 = vmatpush1.bf16.msra.mxu0 0
      %262 = vmatprep.subr.bf16.mxu0 0
      %263 = vmatpush1.bf16.msra.mxu0 0
      %264 = vmatprep.subr.bf16.mxu0 0
      %265 = vmatpush1.bf16.msra.mxu0 0
      %266 = vmatprep.mubr.bf16.mxu0 0
      %267 = vmatmul.mubr.bf16.gmra.mrb[0].mxu0 %v232
      %v268 = vpop.f32.mrb[0].mxu0
      %v269 = vadd.f32 %v220, %v268
      %v270 = vpop.f32.mrb[0].mxu0
      %v271 = vpop.f32.mrb[0].mxu0
      %v272 = vpop.f32.mrb[0].mxu0
      %273 = vdwg.mxu0
      %s274 = scalar_lea.vmem %s138, 8
      %v275 = vld [vmem:[%s274] sm:$0xf]
      %s276 = scalar_lea.vmem %s1, 16
      %v277 = vld [vmem:[%s276] sm:$0xf]
      %v278 = vld [vmem:[%s276 + $0x4] sm:$0xf]
      %v281 = vunpack.c.l.b16 %v277
      %v282 = vunpack.c.l.b16 %v278
      %v283 = vpack.c.b16 %v282, %v281
      %v286 = vsel %vm145, %v275, 0
      %288 = vmatprep.subr.bf16.mxu0 0
      %289 = vmatpush1.bf16.msra.mxu0 %v283
      %290 = vmatprep.subr.bf16.mxu0 0
      %291 = vmatpush1.bf16.msra.mxu0 0
      %292 = vmatprep.subr.bf16.mxu0 0
      %293 = vmatpush1.bf16.msra.mxu0 0
      %294 = vmatprep.subr.bf16.mxu0 0
      %295 = vmatpush1.bf16.msra.mxu0 0
      %296 = vmatprep.subr.bf16.mxu0 0
      %297 = vmatpush1.bf16.msra.mxu0 0
      %298 = vmatprep.subr.bf16.mxu0 0
      %299 = vmatpush1.bf16.msra.mxu0 0
      %300 = vmatprep.subr.bf16.mxu0 0
      %301 = vmatpush1.bf16.msra.mxu0 0
      %302 = vmatprep.subr.bf16.mxu0 0
      %303 = vmatpush1.bf16.msra.mxu0 0
      %304 = vmatprep.subr.bf16.mxu0 0
      %305 = vmatpush1.bf16.msra.mxu0 0
      %306 = vmatprep.subr.bf16.mxu0 0
      %307 = vmatpush1.bf16.msra.mxu0 0
      %308 = vmatprep.subr.bf16.mxu0 0
      %309 = vmatpush1.bf16.msra.mxu0 0
      %310 = vmatprep.subr.bf16.mxu0 0
      %311 = vmatpush1.bf16.msra.mxu0 0
      %312 = vmatprep.subr.bf16.mxu0 0
      %313 = vmatpush1.bf16.msra.mxu0 0
      %314 = vmatprep.subr.bf16.mxu0 0
      %315 = vmatpush1.bf16.msra.mxu0 0
      %316 = vmatprep.subr.bf16.mxu0 0
      %317 = vmatpush1.bf16.msra.mxu0 0
      %318 = vmatprep.subr.bf16.mxu0 0
      %319 = vmatpush1.bf16.msra.mxu0 0
      %320 = vmatprep.mubr.bf16.mxu0 0
      %321 = vmatmul.mubr.bf16.gmra.mrb[0].mxu0 %v286
      %v322 = vpop.f32.mrb[0].mxu0
      %v323 = vadd.f32 0.0, %v322
      %v324 = vpop.f32.mrb[0].mxu0
      %v325 = vpop.f32.mrb[0].mxu0
      %v326 = vpop.f32.mrb[0].mxu0
      %327 = vdwg.mxu0
      %v328 = vadd.f32 %v269, %v323
      %v329 = vld [vmem:[%s274] sm:$0xf]
      %v330 = vld [vmem:[%s274 + $0x4] sm:$0x1]
      %s331 = scalar_lea.vmem %s1, 24
      %v332 = vld [vmem:[%s331] sm:$0xf]
      %v333 = vld [vmem:[%s331 + $0x4] sm:$0xf]
      %v336 = vunpack.c.l.b16 %v329
      %v337 = vunpack.c.l.b16 %v330
      %v338 = vpack.c.b16 %v337, %v336
      %v340 = vshrl.u32 %v338, 16
      %v342 = vshll.u32 %v338, 16
      %v344 = vrot.slane %v342, 1
      %v345 = vor.u32 %v340, %v344
      %v348 = vunpack.c.l.b16 %v332
      %v349 = vunpack.c.l.b16 %v333
      %v350 = vpack.c.b16 %v349, %v348
      %v353 = vsel %vm145, %v345, 0
      %355 = vmatprep.subr.bf16.mxu0 0
      %356 = vmatpush1.bf16.msra.mxu0 %v350
      %357 = vmatprep.subr.bf16.mxu0 0
      %358 = vmatpush1.bf16.msra.mxu0 0
      %359 = vmatprep.subr.bf16.mxu0 0
      %360 = vmatpush1.bf16.msra.mxu0 0
      %361 = vmatprep.subr.bf16.mxu0 0
      %362 = vmatpush1.bf16.msra.mxu0 0
      %363 = vmatprep.subr.bf16.mxu0 0
      %364 = vmatpush1.bf16.msra.mxu0 0
      %365 = vmatprep.subr.bf16.mxu0 0
      %366 = vmatpush1.bf16.msra.mxu0 0
      %367 = vmatprep.subr.bf16.mxu0 0
      %368 = vmatpush1.bf16.msra.mxu0 0
      %369 = vmatprep.subr.bf16.mxu0 0
      %370 = vmatpush1.bf16.msra.mxu0 0
      %371 = vmatprep.subr.bf16.mxu0 0
      %372 = vmatpush1.bf16.msra.mxu0 0
      %373 = vmatprep.subr.bf16.mxu0 0
      %374 = vmatpush1.bf16.msra.mxu0 0
      %375 = vmatprep.subr.bf16.mxu0 0
      %376 = vmatpush1.bf16.msra.mxu0 0
      %377 = vmatprep.subr.bf16.mxu0 0
      %378 = vmatpush1.bf16.msra.mxu0 0
      %379 = vmatprep.subr.bf16.mxu0 0
      %380 = vmatpush1.bf16.msra.mxu0 0
      %381 = vmatprep.subr.bf16.mxu0 0
      %382 = vmatpush1.bf16.msra.mxu0 0
      %383 = vmatprep.subr.bf16.mxu0 0
      %384 = vmatpush1.bf16.msra.mxu0 0
      %385 = vmatprep.subr.bf16.mxu0 0
      %386 = vmatpush1.bf16.msra.mxu0 0
      %387 = vmatprep.mubr.bf16.mxu0 0
      %388 = vmatmul.mubr.bf16.gmra.mrb[0].mxu0 %v353
      %v389 = vpop.f32.mrb[0].mxu0
      %v390 = vadd.f32 0.0, %v389
      %v391 = vpop.f32.mrb[0].mxu0
      %v392 = vpop.f32.mrb[0].mxu0
      %v393 = vpop.f32.mrb[0].mxu0
      %394 = vdwg.mxu0
      %v395 = vadd.f32 %v328, %v390
      %396 = vmatprep.subr.bf16.mxu0 0
      %397 = vmatpush1.bf16.msra.mxu0 %v180
      %398 = vmatprep.subr.bf16.mxu0 0
      %399 = vmatpush1.bf16.msra.mxu0 0
      %400 = vmatprep.subr.bf16.mxu0 0
      %401 = vmatpush1.bf16.msra.mxu0 0
      %402 = vmatprep.subr.bf16.mxu0 0
      %403 = vmatpush1.bf16.msra.mxu0 0
      %404 = vmatprep.subr.bf16.mxu0 0
      %405 = vmatpush1.bf16.msra.mxu0 0
      %406 = vmatprep.subr.bf16.mxu0 0
      %407 = vmatpush1.bf16.msra.mxu0 0
      %408 = vmatprep.subr.bf16.mxu0 0
      %409 = vmatpush1.bf16.msra.mxu0 0
      %410 = vmatprep.subr.bf16.mxu0 0
      %411 = vmatpush1.bf16.msra.mxu0 0
      %412 = vmatprep.subr.bf16.mxu0 0
      %413 = vmatpush1.bf16.msra.mxu0 0
      %414 = vmatprep.subr.bf16.mxu0 0
      %415 = vmatpush1.bf16.msra.mxu0 0
      %416 = vmatprep.subr.bf16.mxu0 0
      %417 = vmatpush1.bf16.msra.mxu0 0
      %418 = vmatprep.subr.bf16.mxu0 0
      %419 = vmatpush1.bf16.msra.mxu0 0
      %420 = vmatprep.subr.bf16.mxu0 0
      %421 = vmatpush1.bf16.msra.mxu0 0
      %422 = vmatprep.subr.bf16.mxu0 0
      %423 = vmatpush1.bf16.msra.mxu0 0
      %424 = vmatprep.subr.bf16.mxu0 0
      %425 = vmatpush1.bf16.msra.mxu0 0
      %426 = vmatprep.subr.bf16.mxu0 0
      %427 = vmatpush1.bf16.msra.mxu0 0
      %428 = vmatprep.mubr.bf16.mxu0 0
      %429 = vmatmul.mubr.bf16.gmra.mrb[0].mxu0 %v353
      %v430 = vpop.f32.mrb[0].mxu0
      %v431 = vadd.f32 0.0, %v430
      %v432 = vpop.f32.mrb[0].mxu0
      %v433 = vpop.f32.mrb[0].mxu0
      %v434 = vpop.f32.mrb[0].mxu0
      %435 = vdwg.mxu0
      %436 = vmatprep.subr.bf16.mxu0 0
      %437 = vmatpush1.bf16.msra.mxu0 %v229
      %438 = vmatprep.subr.bf16.mxu0 0
      %439 = vmatpush1.bf16.msra.mxu0 0
      %440 = vmatprep.subr.bf16.mxu0 0
      %441 = vmatpush1.bf16.msra.mxu0 0
      %442 = vmatprep.subr.bf16.mxu0 0
      %443 = vmatpush1.bf16.msra.mxu0 0
      %444 = vmatprep.subr.bf16.mxu0 0
      %445 = vmatpush1.bf16.msra.mxu0 0
      %446 = vmatprep.subr.bf16.mxu0 0
      %447 = vmatpush1.bf16.msra.mxu0 0
      %448 = vmatprep.subr.bf16.mxu0 0
      %449 = vmatpush1.bf16.msra.mxu0 0
      %450 = vmatprep.subr.bf16.mxu0 0
      %451 = vmatpush1.bf16.msra.mxu0 0
      %452 = vmatprep.subr.bf16.mxu0 0
      %453 = vmatpush1.bf16.msra.mxu0 0
      %454 = vmatprep.subr.bf16.mxu0 0
      %455 = vmatpush1.bf16.msra.mxu0 0
      %456 = vmatprep.subr.bf16.mxu0 0
      %457 = vmatpush1.bf16.msra.mxu0 0
      %458 = vmatprep.subr.bf16.mxu0 0
      %459 = vmatpush1.bf16.msra.mxu0 0
      %460 = vmatprep.subr.bf16.mxu0 0
      %461 = vmatpush1.bf16.msra.mxu0 0
      %462 = vmatprep.subr.bf16.mxu0 0
      %463 = vmatpush1.bf16.msra.mxu0 0
      %464 = vmatprep.subr.bf16.mxu0 0
      %465 = vmatpush1.bf16.msra.mxu0 0
      %466 = vmatprep.subr.bf16.mxu0 0
      %467 = vmatpush1.bf16.msra.mxu0 0
      %468 = vmatprep.mubr.bf16.mxu0 0
      %469 = vmatmul.mubr.bf16.gmra.mrb[0].mxu0 %v286
      %v470 = vpop.f32.mrb[0].mxu0
      %v471 = vadd.f32 %v431, %v470
      %v472 = vpop.f32.mrb[0].mxu0
      %v473 = vpop.f32.mrb[0].mxu0
      %v474 = vpop.f32.mrb[0].mxu0
      %475 = vdwg.mxu0
      %s476 = scalar_lea.vmem %s138, 16
      %v477 = vld [vmem:[%s476] sm:$0xf]
      %v479 = vsel %vm145, %v477, 0
      %481 = vmatprep.subr.bf16.mxu0 0
      %482 = vmatpush1.bf16.msra.mxu0 %v283
      %483 = vmatprep.subr.bf16.mxu0 0
      %484 = vmatpush1.bf16.msra.mxu0 0
      %485 = vmatprep.subr.bf16.mxu0 0
      %486 = vmatpush1.bf16.msra.mxu0 0
      %487 = vmatprep.subr.bf16.mxu0 0
      %488 = vmatpush1.bf16.msra.mxu0 0
      %489 = vmatprep.subr.bf16.mxu0 0
      %490 = vmatpush1.bf16.msra.mxu0 0
      %491 = vmatprep.subr.bf16.mxu0 0
      %492 = vmatpush1.bf16.msra.mxu0 0
      %493 = vmatprep.subr.bf16.mxu0 0
      %494 = vmatpush1.bf16.msra.mxu0 0
      %495 = vmatprep.subr.bf16.mxu0 0
      %496 = vmatpush1.bf16.msra.mxu0 0
      %497 = vmatprep.subr.bf16.mxu0 0
      %498 = vmatpush1.bf16.msra.mxu0 0
      %499 = vmatprep.subr.bf16.mxu0 0
      %500 = vmatpush1.bf16.msra.mxu0 0
      %501 = vmatprep.subr.bf16.mxu0 0
      %502 = vmatpush1.bf16.msra.mxu0 0
      %503 = vmatprep.subr.bf16.mxu0 0
      %504 = vmatpush1.bf16.msra.mxu0 0
      %505 = vmatprep.subr.bf16.mxu0 0
      %506 = vmatpush1.bf16.msra.mxu0 0
      %507 = vmatprep.subr.bf16.mxu0 0
      %508 = vmatpush1.bf16.msra.mxu0 0
      %509 = vmatprep.subr.bf16.mxu0 0
      %510 = vmatpush1.bf16.msra.mxu0 0
      %511 = vmatprep.subr.bf16.mxu0 0
      %512 = vmatpush1.bf16.msra.mxu0 0
      %513 = vmatprep.mubr.bf16.mxu0 0
      %514 = vmatmul.mubr.bf16.gmra.mrb[0].mxu0 %v479
      %v515 = vpop.f32.mrb[0].mxu0
      %v516 = vadd.f32 0.0, %v515
      %v517 = vpop.f32.mrb[0].mxu0
      %v518 = vpop.f32.mrb[0].mxu0
      %v519 = vpop.f32.mrb[0].mxu0
      %520 = vdwg.mxu0
      %v521 = vadd.f32 %v471, %v516
      %v522 = vld [vmem:[%s476] sm:$0xf]
      %v523 = vld [vmem:[%s476 + $0x4] sm:$0x1]
      %v526 = vunpack.c.l.b16 %v522
      %v527 = vunpack.c.l.b16 %v523
      %v528 = vpack.c.b16 %v527, %v526
      %v530 = vshrl.u32 %v528, 16
      %v532 = vshll.u32 %v528, 16
      %v534 = vrot.slane %v532, 1
      %v535 = vor.u32 %v530, %v534
      %v537 = vsel %vm145, %v535, 0
      %539 = vmatprep.subr.bf16.mxu0 0
      %540 = vmatpush1.bf16.msra.mxu0 %v350
      %541 = vmatprep.subr.bf16.mxu0 0
      %542 = vmatpush1.bf16.msra.mxu0 0
      %543 = vmatprep.subr.bf16.mxu0 0
      %544 = vmatpush1.bf16.msra.mxu0 0
      %545 = vmatprep.subr.bf16.mxu0 0
      %546 = vmatpush1.bf16.msra.mxu0 0
      %547 = vmatprep.subr.bf16.mxu0 0
      %548 = vmatpush1.bf16.msra.mxu0 0
      %549 = vmatprep.subr.bf16.mxu0 0
      %550 = vmatpush1.bf16.msra.mxu0 0
      %551 = vmatprep.subr.bf16.mxu0 0
      %552 = vmatpush1.bf16.msra.mxu0 0
      %553 = vmatprep.subr.bf16.mxu0 0
      %554 = vmatpush1.bf16.msra.mxu0 0
      %555 = vmatprep.subr.bf16.mxu0 0
      %556 = vmatpush1.bf16.msra.mxu0 0
      %557 = vmatprep.subr.bf16.mxu0 0
      %558 = vmatpush1.bf16.msra.mxu0 0
      %559 = vmatprep.subr.bf16.mxu0 0
      %560 = vmatpush1.bf16.msra.mxu0 0
      %561 = vmatprep.subr.bf16.mxu0 0
      %562 = vmatpush1.bf16.msra.mxu0 0
      %563 = vmatprep.subr.bf16.mxu0 0
      %564 = vmatpush1.bf16.msra.mxu0 0
      %565 = vmatprep.subr.bf16.mxu0 0
      %566 = vmatpush1.bf16.msra.mxu0 0
      %567 = vmatprep.subr.bf16.mxu0 0
      %568 = vmatpush1.bf16.msra.mxu0 0
      %569 = vmatprep.subr.bf16.mxu0 0
      %570 = vmatpush1.bf16.msra.mxu0 0
      %571 = vmatprep.mubr.bf16.mxu0 0
      %572 = vmatmul.mubr.bf16.gmra.mrb[0].mxu0 %v537
      %v573 = vpop.f32.mrb[0].mxu0
      %v574 = vadd.f32 0.0, %v573
      %v575 = vpop.f32.mrb[0].mxu0
      %v576 = vpop.f32.mrb[0].mxu0
      %v577 = vpop.f32.mrb[0].mxu0
      %578 = vdwg.mxu0
      %v579 = vadd.f32 %v521, %v574
      %580 = vmatprep.subr.bf16.mxu0 0
      %581 = vmatpush1.bf16.msra.mxu0 %v180
      %582 = vmatprep.subr.bf16.mxu0 0
      %583 = vmatpush1.bf16.msra.mxu0 0
      %584 = vmatprep.subr.bf16.mxu0 0
      %585 = vmatpush1.bf16.msra.mxu0 0
      %586 = vmatprep.subr.bf16.mxu0 0
      %587 = vmatpush1.bf16.msra.mxu0 0
      %588 = vmatprep.subr.bf16.mxu0 0
      %589 = vmatpush1.bf16.msra.mxu0 0
      %590 = vmatprep.subr.bf16.mxu0 0
      %591 = vmatpush1.bf16.msra.mxu0 0
      %592 = vmatprep.subr.bf16.mxu0 0
      %593 = vmatpush1.bf16.msra.mxu0 0
      %594 = vmatprep.subr.bf16.mxu0 0
      %595 = vmatpush1.bf16.msra.mxu0 0
      %596 = vmatprep.subr.bf16.mxu0 0
      %597 = vmatpush1.bf16.msra.mxu0 0
      %598 = vmatprep.subr.bf16.mxu0 0
      %599 = vmatpush1.bf16.msra.mxu0 0
      %600 = vmatprep.subr.bf16.mxu0 0
      %601 = vmatpush1.bf16.msra.mxu0 0
      %602 = vmatprep.subr.bf16.mxu0 0
      %603 = vmatpush1.bf16.msra.mxu0 0
      %604 = vmatprep.subr.bf16.mxu0 0
      %605 = vmatpush1.bf16.msra.mxu0 0
      %606 = vmatprep.subr.bf16.mxu0 0
      %607 = vmatpush1.bf16.msra.mxu0 0
      %608 = vmatprep.subr.bf16.mxu0 0
      %609 = vmatpush1.bf16.msra.mxu0 0
      %610 = vmatprep.subr.bf16.mxu0 0
      %611 = vmatpush1.bf16.msra.mxu0 0
      %612 = vmatprep.mubr.bf16.mxu0 0
      %613 = vmatmul.mubr.bf16.gmra.mrb[0].mxu0 %v537
      %v614 = vpop.f32.mrb[0].mxu0
      %v615 = vadd.f32 0.0, %v614
      %v616 = vpop.f32.mrb[0].mxu0
      %v617 = vpop.f32.mrb[0].mxu0
      %v618 = vpop.f32.mrb[0].mxu0
      %619 = vdwg.mxu0
      %620 = vmatprep.subr.bf16.mxu0 0
      %621 = vmatpush1.bf16.msra.mxu0 %v229
      %622 = vmatprep.subr.bf16.mxu0 0
      %623 = vmatpush1.bf16.msra.mxu0 0
      %624 = vmatprep.subr.bf16.mxu0 0
      %625 = vmatpush1.bf16.msra.mxu0 0
      %626 = vmatprep.subr.bf16.mxu0 0
      %627 = vmatpush1.bf16.msra.mxu0 0
      %628 = vmatprep.subr.bf16.mxu0 0
      %629 = vmatpush1.bf16.msra.mxu0 0
      %630 = vmatprep.subr.bf16.mxu0 0
      %631 = vmatpush1.bf16.msra.mxu0 0
      %632 = vmatprep.subr.bf16.mxu0 0
      %633 = vmatpush1.bf16.msra.mxu0 0
      %634 = vmatprep.subr.bf16.mxu0 0
      %635 = vmatpush1.bf16.msra.mxu0 0
      %636 = vmatprep.subr.bf16.mxu0 0
      %637 = vmatpush1.bf16.msra.mxu0 0
      %638 = vmatprep.subr.bf16.mxu0 0
      %639 = vmatpush1.bf16.msra.mxu0 0
      %640 = vmatprep.subr.bf16.mxu0 0
      %641 = vmatpush1.bf16.msra.mxu0 0
      %642 = vmatprep.subr.bf16.mxu0 0
      %643 = vmatpush1.bf16.msra.mxu0 0
      %644 = vmatprep.subr.bf16.mxu0 0
      %645 = vmatpush1.bf16.msra.mxu0 0
      %646 = vmatprep.subr.bf16.mxu0 0
      %647 = vmatpush1.bf16.msra.mxu0 0
      %648 = vmatprep.subr.bf16.mxu0 0
      %649 = vmatpush1.bf16.msra.mxu0 0
      %650 = vmatprep.subr.bf16.mxu0 0
      %651 = vmatpush1.bf16.msra.mxu0 0
      %652 = vmatprep.mubr.bf16.mxu0 0
      %653 = vmatmul.mubr.bf16.gmra.mrb[0].mxu0 %v479
      %v654 = vpop.f32.mrb[0].mxu0
      %v655 = vadd.f32 %v615, %v654
      %v656 = vpop.f32.mrb[0].mxu0
      %v657 = vpop.f32.mrb[0].mxu0
      %v658 = vpop.f32.mrb[0].mxu0
      %659 = vdwg.mxu0
      %s660 = scalar_lea.vmem %s138, 24
      %v661 = vld [vmem:[%s660] sm:$0xf]
      %v663 = vsel %vm145, %v661, 0
      %665 = vmatprep.subr.bf16.mxu0 0
      %666 = vmatpush1.bf16.msra.mxu0 %v283
      %667 = vmatprep.subr.bf16.mxu0 0
      %668 = vmatpush1.bf16.msra.mxu0 0
      %669 = vmatprep.subr.bf16.mxu0 0
      %670 = vmatpush1.bf16.msra.mxu0 0
      %671 = vmatprep.subr.bf16.mxu0 0
      %672 = vmatpush1.bf16.msra.mxu0 0
      %673 = vmatprep.subr.bf16.mxu0 0
      %674 = vmatpush1.bf16.msra.mxu0 0
      %675 = vmatprep.subr.bf16.mxu0 0
      %676 = vmatpush1.bf16.msra.mxu0 0
      %677 = vmatprep.subr.bf16.mxu0 0
      %678 = vmatpush1.bf16.msra.mxu0 0
      %679 = vmatprep.subr.bf16.mxu0 0
      %680 = vmatpush1.bf16.msra.mxu0 0
      %681 = vmatprep.subr.bf16.mxu0 0
      %682 = vmatpush1.bf16.msra.mxu0 0
      %683 = vmatprep.subr.bf16.mxu0 0
      %684 = vmatpush1.bf16.msra.mxu0 0
      %685 = vmatprep.subr.bf16.mxu0 0
      %686 = vmatpush1.bf16.msra.mxu0 0
      %687 = vmatprep.subr.bf16.mxu0 0
      %688 = vmatpush1.bf16.msra.mxu0 0
      %689 = vmatprep.subr.bf16.mxu0 0
      %690 = vmatpush1.bf16.msra.mxu0 0
      %691 = vmatprep.subr.bf16.mxu0 0
      %692 = vmatpush1.bf16.msra.mxu0 0
      %693 = vmatprep.subr.bf16.mxu0 0
      %694 = vmatpush1.bf16.msra.mxu0 0
      %695 = vmatprep.subr.bf16.mxu0 0
      %696 = vmatpush1.bf16.msra.mxu0 0
      %697 = vmatprep.mubr.bf16.mxu0 0
      %698 = vmatmul.mubr.bf16.gmra.mrb[0].mxu0 %v663
      %v699 = vpop.f32.mrb[0].mxu0
      %v700 = vadd.f32 0.0, %v699
      %v701 = vpop.f32.mrb[0].mxu0
      %v702 = vpop.f32.mrb[0].mxu0
      %v703 = vpop.f32.mrb[0].mxu0
      %704 = vdwg.mxu0
      %v705 = vadd.f32 %v655, %v700
      %v706 = vld [vmem:[%s660] sm:$0xf]
      %v707 = vld [vmem:[%s660 + $0x4] sm:$0x1]
      %v710 = vunpack.c.l.b16 %v706
      %v711 = vunpack.c.l.b16 %v707
      %v712 = vpack.c.b16 %v711, %v710
      %v714 = vshrl.u32 %v712, 16
      %v716 = vshll.u32 %v712, 16
      %v718 = vrot.slane %v716, 1
      %v719 = vor.u32 %v714, %v718
      %v721 = vsel %vm145, %v719, 0
      %723 = vmatprep.subr.bf16.mxu0 0
      %724 = vmatpush1.bf16.msra.mxu0 %v350
      %725 = vmatprep.subr.bf16.mxu0 0
      %726 = vmatpush1.bf16.msra.mxu0 0
      %727 = vmatprep.subr.bf16.mxu0 0
      %728 = vmatpush1.bf16.msra.mxu0 0
      %729 = vmatprep.subr.bf16.mxu0 0
      %730 = vmatpush1.bf16.msra.mxu0 0
      %731 = vmatprep.subr.bf16.mxu0 0
      %732 = vmatpush1.bf16.msra.mxu0 0
      %733 = vmatprep.subr.bf16.mxu0 0
      %734 = vmatpush1.bf16.msra.mxu0 0
      %735 = vmatprep.subr.bf16.mxu0 0
      %736 = vmatpush1.bf16.msra.mxu0 0
      %737 = vmatprep.subr.bf16.mxu0 0
      %738 = vmatpush1.bf16.msra.mxu0 0
      %739 = vmatprep.subr.bf16.mxu0 0
      %740 = vmatpush1.bf16.msra.mxu0 0
      %741 = vmatprep.subr.bf16.mxu0 0
      %742 = vmatpush1.bf16.msra.mxu0 0
      %743 = vmatprep.subr.bf16.mxu0 0
      %744 = vmatpush1.bf16.msra.mxu0 0
      %745 = vmatprep.subr.bf16.mxu0 0
      %746 = vmatpush1.bf16.msra.mxu0 0
      %747 = vmatprep.subr.bf16.mxu0 0
      %748 = vmatpush1.bf16.msra.mxu0 0
      %749 = vmatprep.subr.bf16.mxu0 0
      %750 = vmatpush1.bf16.msra.mxu0 0
      %751 = vmatprep.subr.bf16.mxu0 0
      %752 = vmatpush1.bf16.msra.mxu0 0
      %753 = vmatprep.subr.bf16.mxu0 0
      %754 = vmatpush1.bf16.msra.mxu0 0
      %755 = vmatprep.mubr.bf16.mxu0 0
      %756 = vmatmul.mubr.bf16.gmra.mrb[0].mxu0 %v721
      %v757 = vpop.f32.mrb[0].mxu0
      %v758 = vadd.f32 0.0, %v757
      %v759 = vpop.f32.mrb[0].mxu0
      %v760 = vpop.f32.mrb[0].mxu0
      %v761 = vpop.f32.mrb[0].mxu0
      %762 = vdwg.mxu0
      %v763 = vadd.f32 %v705, %v758
      %764 = vmatprep.subr.bf16.mxu0 0
      %765 = vmatpush1.bf16.msra.mxu0 %v180
      %766 = vmatprep.subr.bf16.mxu0 0
      %767 = vmatpush1.bf16.msra.mxu0 0
      %768 = vmatprep.subr.bf16.mxu0 0
      %769 = vmatpush1.bf16.msra.mxu0 0
      %770 = vmatprep.subr.bf16.mxu0 0
      %771 = vmatpush1.bf16.msra.mxu0 0
      %772 = vmatprep.subr.bf16.mxu0 0
      %773 = vmatpush1.bf16.msra.mxu0 0
      %774 = vmatprep.subr.bf16.mxu0 0
      %775 = vmatpush1.bf16.msra.mxu0 0
      %776 = vmatprep.subr.bf16.mxu0 0
      %777 = vmatpush1.bf16.msra.mxu0 0
      %778 = vmatprep.subr.bf16.mxu0 0
      %779 = vmatpush1.bf16.msra.mxu0 0
      %780 = vmatprep.subr.bf16.mxu0 0
      %781 = vmatpush1.bf16.msra.mxu0 0
      %782 = vmatprep.subr.bf16.mxu0 0
      %783 = vmatpush1.bf16.msra.mxu0 0
      %784 = vmatprep.subr.bf16.mxu0 0
      %785 = vmatpush1.bf16.msra.mxu0 0
      %786 = vmatprep.subr.bf16.mxu0 0
      %787 = vmatpush1.bf16.msra.mxu0 0
      %788 = vmatprep.subr.bf16.mxu0 0
      %789 = vmatpush1.bf16.msra.mxu0 0
      %790 = vmatprep.subr.bf16.mxu0 0
      %791 = vmatpush1.bf16.msra.mxu0 0
      %792 = vmatprep.subr.bf16.mxu0 0
      %793 = vmatpush1.bf16.msra.mxu0 0
      %794 = vmatprep.subr.bf16.mxu0 0
      %795 = vmatpush1.bf16.msra.mxu0 0
      %796 = vmatprep.mubr.bf16.mxu0 0
      %797 = vmatmul.mubr.bf16.gmra.mrb[0].mxu0 %v721
      %v798 = vpop.f32.mrb[0].mxu0
      %v799 = vadd.f32 0.0, %v798
      %v800 = vpop.f32.mrb[0].mxu0
      %v801 = vpop.f32.mrb[0].mxu0
      %v802 = vpop.f32.mrb[0].mxu0
      %803 = vdwg.mxu0
      %804 = vmatprep.subr.bf16.mxu0 0
      %805 = vmatpush1.bf16.msra.mxu0 %v229
      %806 = vmatprep.subr.bf16.mxu0 0
      %807 = vmatpush1.bf16.msra.mxu0 0
      %808 = vmatprep.subr.bf16.mxu0 0
      %809 = vmatpush1.bf16.msra.mxu0 0
      %810 = vmatprep.subr.bf16.mxu0 0
      %811 = vmatpush1.bf16.msra.mxu0 0
      %812 = vmatprep.subr.bf16.mxu0 0
      %813 = vmatpush1.bf16.msra.mxu0 0
      %814 = vmatprep.subr.bf16.mxu0 0
      %815 = vmatpush1.bf16.msra.mxu0 0
      %816 = vmatprep.subr.bf16.mxu0 0
      %817 = vmatpush1.bf16.msra.mxu0 0
      %818 = vmatprep.subr.bf16.mxu0 0
      %819 = vmatpush1.bf16.msra.mxu0 0
      %820 = vmatprep.subr.bf16.mxu0 0
      %821 = vmatpush1.bf16.msra.mxu0 0
      %822 = vmatprep.subr.bf16.mxu0 0
      %823 = vmatpush1.bf16.msra.mxu0 0
      %824 = vmatprep.subr.bf16.mxu0 0
      %825 = vmatpush1.bf16.msra.mxu0 0
      %826 = vmatprep.subr.bf16.mxu0 0
      %827 = vmatpush1.bf16.msra.mxu0 0
      %828 = vmatprep.subr.bf16.mxu0 0
      %829 = vmatpush1.bf16.msra.mxu0 0
      %830 = vmatprep.subr.bf16.mxu0 0
      %831 = vmatpush1.bf16.msra.mxu0 0
      %832 = vmatprep.subr.bf16.mxu0 0
      %833 = vmatpush1.bf16.msra.mxu0 0
      %834 = vmatprep.subr.bf16.mxu0 0
      %835 = vmatpush1.bf16.msra.mxu0 0
      %836 = vmatprep.mubr.bf16.mxu0 0
      %837 = vmatmul.mubr.bf16.gmra.mrb[0].mxu0 %v663
      %v838 = vpop.f32.mrb[0].mxu0
      %v839 = vadd.f32 %v799, %v838
      %v840 = vpop.f32.mrb[0].mxu0
      %v841 = vpop.f32.mrb[0].mxu0
      %v842 = vpop.f32.mrb[0].mxu0
      %843 = vdwg.mxu0
      %s844 = scalar_lea.vmem %s138, 32
      %v845 = vld [vmem:[%s844] sm:$0xf]
      %v847 = vsel %vm145, %v845, 0
      %849 = vmatprep.subr.bf16.mxu0 0
      %850 = vmatpush1.bf16.msra.mxu0 %v283
      %851 = vmatprep.subr.bf16.mxu0 0
      %852 = vmatpush1.bf16.msra.mxu0 0
      %853 = vmatprep.subr.bf16.mxu0 0
      %854 = vmatpush1.bf16.msra.mxu0 0
      %855 = vmatprep.subr.bf16.mxu0 0
      %856 = vmatpush1.bf16.msra.mxu0 0
      %857 = vmatprep.subr.bf16.mxu0 0
      %858 = vmatpush1.bf16.msra.mxu0 0
      %859 = vmatprep.subr.bf16.mxu0 0
      %860 = vmatpush1.bf16.msra.mxu0 0
      %861 = vmatprep.subr.bf16.mxu0 0
      %862 = vmatpush1.bf16.msra.mxu0 0
      %863 = vmatprep.subr.bf16.mxu0 0
      %864 = vmatpush1.bf16.msra.mxu0 0
      %865 = vmatprep.subr.bf16.mxu0 0
      %866 = vmatpush1.bf16.msra.mxu0 0
      %867 = vmatprep.subr.bf16.mxu0 0
      %868 = vmatpush1.bf16.msra.mxu0 0
      %869 = vmatprep.subr.bf16.mxu0 0
      %870 = vmatpush1.bf16.msra.mxu0 0
      %871 = vmatprep.subr.bf16.mxu0 0
      %872 = vmatpush1.bf16.msra.mxu0 0
      %873 = vmatprep.subr.bf16.mxu0 0
      %874 = vmatpush1.bf16.msra.mxu0 0
      %875 = vmatprep.subr.bf16.mxu0 0
      %876 = vmatpush1.bf16.msra.mxu0 0
      %877 = vmatprep.subr.bf16.mxu0 0
      %878 = vmatpush1.bf16.msra.mxu0 0
      %879 = vmatprep.subr.bf16.mxu0 0
      %880 = vmatpush1.bf16.msra.mxu0 0
      %881 = vmatprep.mubr.bf16.mxu0 0
      %882 = vmatmul.mubr.bf16.gmra.mrb[0].mxu0 %v847
      %v883 = vpop.f32.mrb[0].mxu0
      %v884 = vadd.f32 0.0, %v883
      %v885 = vpop.f32.mrb[0].mxu0
      %v886 = vpop.f32.mrb[0].mxu0
      %v887 = vpop.f32.mrb[0].mxu0
      %888 = vdwg.mxu0
      %v889 = vadd.f32 %v839, %v884
      %v890 = vld [vmem:[%s844] sm:$0xf]
      %v891 = vld [vmem:[%s844 + $0x4] sm:$0x1]
      %v894 = vunpack.c.l.b16 %v890
      %v895 = vunpack.c.l.b16 %v891
      %v896 = vpack.c.b16 %v895, %v894
      %v898 = vshrl.u32 %v896, 16
      %v900 = vshll.u32 %v896, 16
      %v902 = vrot.slane %v900, 1
      %v903 = vor.u32 %v898, %v902
      %v905 = vsel %vm145, %v903, 0
      %907 = vmatprep.subr.bf16.mxu0 0
      %908 = vmatpush1.bf16.msra.mxu0 %v350
      %909 = vmatprep.subr.bf16.mxu0 0
      %910 = vmatpush1.bf16.msra.mxu0 0
      %911 = vmatprep.subr.bf16.mxu0 0
      %912 = vmatpush1.bf16.msra.mxu0 0
      %913 = vmatprep.subr.bf16.mxu0 0
      %914 = vmatpush1.bf16.msra.mxu0 0
      %915 = vmatprep.subr.bf16.mxu0 0
      %916 = vmatpush1.bf16.msra.mxu0 0
      %917 = vmatprep.subr.bf16.mxu0 0
      %918 = vmatpush1.bf16.msra.mxu0 0
      %919 = vmatprep.subr.bf16.mxu0 0
      %920 = vmatpush1.bf16.msra.mxu0 0
      %921 = vmatprep.subr.bf16.mxu0 0
      %922 = vmatpush1.bf16.msra.mxu0 0
      %923 = vmatprep.subr.bf16.mxu0 0
      %924 = vmatpush1.bf16.msra.mxu0 0
      %925 = vmatprep.subr.bf16.mxu0 0
      %926 = vmatpush1.bf16.msra.mxu0 0
      %927 = vmatprep.subr.bf16.mxu0 0
      %928 = vmatpush1.bf16.msra.mxu0 0
      %929 = vmatprep.subr.bf16.mxu0 0
      %930 = vmatpush1.bf16.msra.mxu0 0
      %931 = vmatprep.subr.bf16.mxu0 0
      %932 = vmatpush1.bf16.msra.mxu0 0
      %933 = vmatprep.subr.bf16.mxu0 0
      %934 = vmatpush1.bf16.msra.mxu0 0
      %935 = vmatprep.subr.bf16.mxu0 0
      %936 = vmatpush1.bf16.msra.mxu0 0
      %937 = vmatprep.subr.bf16.mxu0 0
      %938 = vmatpush1.bf16.msra.mxu0 0
      %939 = vmatprep.mubr.bf16.mxu0 0
      %940 = vmatmul.mubr.bf16.gmra.mrb[0].mxu0 %v905
      %v941 = vpop.f32.mrb[0].mxu0
      %v942 = vadd.f32 0.0, %v941
      %v943 = vpop.f32.mrb[0].mxu0
      %v944 = vpop.f32.mrb[0].mxu0
      %v945 = vpop.f32.mrb[0].mxu0
      %946 = vdwg.mxu0
      %v947 = vadd.f32 %v889, %v942
      %948 = vmatprep.subr.bf16.mxu0 0
      %949 = vmatpush1.bf16.msra.mxu0 %v180
      %950 = vmatprep.subr.bf16.mxu0 0
      %951 = vmatpush1.bf16.msra.mxu0 0
      %952 = vmatprep.subr.bf16.mxu0 0
      %953 = vmatpush1.bf16.msra.mxu0 0
      %954 = vmatprep.subr.bf16.mxu0 0
      %955 = vmatpush1.bf16.msra.mxu0 0
      %956 = vmatprep.subr.bf16.mxu0 0
      %957 = vmatpush1.bf16.msra.mxu0 0
      %958 = vmatprep.subr.bf16.mxu0 0
      %959 = vmatpush1.bf16.msra.mxu0 0
      %960 = vmatprep.subr.bf16.mxu0 0
      %961 = vmatpush1.bf16.msra.mxu0 0
      %962 = vmatprep.subr.bf16.mxu0 0
      %963 = vmatpush1.bf16.msra.mxu0 0
      %964 = vmatprep.subr.bf16.mxu0 0
      %965 = vmatpush1.bf16.msra.mxu0 0
      %966 = vmatprep.subr.bf16.mxu0 0
      %967 = vmatpush1.bf16.msra.mxu0 0
      %968 = vmatprep.subr.bf16.mxu0 0
      %969 = vmatpush1.bf16.msra.mxu0 0
      %970 = vmatprep.subr.bf16.mxu0 0
      %971 = vmatpush1.bf16.msra.mxu0 0
      %972 = vmatprep.subr.bf16.mxu0 0
      %973 = vmatpush1.bf16.msra.mxu0 0
      %974 = vmatprep.subr.bf16.mxu0 0
      %975 = vmatpush1.bf16.msra.mxu0 0
      %976 = vmatprep.subr.bf16.mxu0 0
      %977 = vmatpush1.bf16.msra.mxu0 0
      %978 = vmatprep.subr.bf16.mxu0 0
      %979 = vmatpush1.bf16.msra.mxu0 0
      %980 = vmatprep.mubr.bf16.mxu0 0
      %981 = vmatmul.mubr.bf16.gmra.mrb[0].mxu0 %v905
      %v982 = vpop.f32.mrb[0].mxu0
      %v983 = vadd.f32 0.0, %v982
      %v984 = vpop.f32.mrb[0].mxu0
      %v985 = vpop.f32.mrb[0].mxu0
      %v986 = vpop.f32.mrb[0].mxu0
      %987 = vdwg.mxu0
      %988 = vmatprep.subr.bf16.mxu0 0
      %989 = vmatpush1.bf16.msra.mxu0 %v229
      %990 = vmatprep.subr.bf16.mxu0 0
      %991 = vmatpush1.bf16.msra.mxu0 0
      %992 = vmatprep.subr.bf16.mxu0 0
      %993 = vmatpush1.bf16.msra.mxu0 0
      %994 = vmatprep.subr.bf16.mxu0 0
      %995 = vmatpush1.bf16.msra.mxu0 0
      %996 = vmatprep.subr.bf16.mxu0 0
      %997 = vmatpush1.bf16.msra.mxu0 0
      %998 = vmatprep.subr.bf16.mxu0 0
      %999 = vmatpush1.bf16.msra.mxu0 0
      %1000 = vmatprep.subr.bf16.mxu0 0
      %1001 = vmatpush1.bf16.msra.mxu0 0
      %1002 = vmatprep.subr.bf16.mxu0 0
      %1003 = vmatpush1.bf16.msra.mxu0 0
      %1004 = vmatprep.subr.bf16.mxu0 0
      %1005 = vmatpush1.bf16.msra.mxu0 0
      %1006 = vmatprep.subr.bf16.mxu0 0
      %1007 = vmatpush1.bf16.msra.mxu0 0
      %1008 = vmatprep.subr.bf16.mxu0 0
      %1009 = vmatpush1.bf16.msra.mxu0 0
      %1010 = vmatprep.subr.bf16.mxu0 0
      %1011 = vmatpush1.bf16.msra.mxu0 0
      %1012 = vmatprep.subr.bf16.mxu0 0
      %1013 = vmatpush1.bf16.msra.mxu0 0
      %1014 = vmatprep.subr.bf16.mxu0 0
      %1015 = vmatpush1.bf16.msra.mxu0 0
      %1016 = vmatprep.subr.bf16.mxu0 0
      %1017 = vmatpush1.bf16.msra.mxu0 0
      %1018 = vmatprep.subr.bf16.mxu0 0
      %1019 = vmatpush1.bf16.msra.mxu0 0
      %1020 = vmatprep.mubr.bf16.mxu0 0
      %1021 = vmatmul.mubr.bf16.gmra.mrb[0].mxu0 %v847
      %v1022 = vpop.f32.mrb[0].mxu0
      %v1023 = vadd.f32 %v983, %v1022
      %v1024 = vpop.f32.mrb[0].mxu0
      %v1025 = vpop.f32.mrb[0].mxu0
      %v1026 = vpop.f32.mrb[0].mxu0
      %1027 = vdwg.mxu0
      %s1028 = scalar_lea.vmem %s138, 40
      %v1029 = vld [vmem:[%s1028] sm:$0xf]
      %v1031 = vsel %vm145, %v1029, 0
      %1033 = vmatprep.subr.bf16.mxu0 0
      %1034 = vmatpush1.bf16.msra.mxu0 %v283
      %1035 = vmatprep.subr.bf16.mxu0 0
      %1036 = vmatpush1.bf16.msra.mxu0 0
      %1037 = vmatprep.subr.bf16.mxu0 0
      %1038 = vmatpush1.bf16.msra.mxu0 0
      %1039 = vmatprep.subr.bf16.mxu0 0
      %1040 = vmatpush1.bf16.msra.mxu0 0
      %1041 = vmatprep.subr.bf16.mxu0 0
      %1042 = vmatpush1.bf16.msra.mxu0 0
      %1043 = vmatprep.subr.bf16.mxu0 0
      %1044 = vmatpush1.bf16.msra.mxu0 0
      %1045 = vmatprep.subr.bf16.mxu0 0
      %1046 = vmatpush1.bf16.msra.mxu0 0
      %1047 = vmatprep.subr.bf16.mxu0 0
      %1048 = vmatpush1.bf16.msra.mxu0 0
      %1049 = vmatprep.subr.bf16.mxu0 0
      %1050 = vmatpush1.bf16.msra.mxu0 0
      %1051 = vmatprep.subr.bf16.mxu0 0
      %1052 = vmatpush1.bf16.msra.mxu0 0
      %1053 = vmatprep.subr.bf16.mxu0 0
      %1054 = vmatpush1.bf16.msra.mxu0 0
      %1055 = vmatprep.subr.bf16.mxu0 0
      %1056 = vmatpush1.bf16.msra.mxu0 0
      %1057 = vmatprep.subr.bf16.mxu0 0
      %1058 = vmatpush1.bf16.msra.mxu0 0
      %1059 = vmatprep.subr.bf16.mxu0 0
      %1060 = vmatpush1.bf16.msra.mxu0 0
      %1061 = vmatprep.subr.bf16.mxu0 0
      %1062 = vmatpush1.bf16.msra.mxu0 0
      %1063 = vmatprep.subr.bf16.mxu0 0
      %1064 = vmatpush1.bf16.msra.mxu0 0
      %1065 = vmatprep.mubr.bf16.mxu0 0
      %1066 = vmatmul.mubr.bf16.gmra.mrb[0].mxu0 %v1031
      %v1067 = vpop.f32.mrb[0].mxu0
      %v1068 = vadd.f32 0.0, %v1067
      %v1069 = vpop.f32.mrb[0].mxu0
      %v1070 = vpop.f32.mrb[0].mxu0
      %v1071 = vpop.f32.mrb[0].mxu0
      %1072 = vdwg.mxu0
      %v1073 = vadd.f32 %v1023, %v1068
      %v1074 = vld [vmem:[%s1028] sm:$0xf]
      %v1075 = vld [vmem:[%s1028 + $0x4] sm:$0x1]
      %v1078 = vunpack.c.l.b16 %v1074
      %v1079 = vunpack.c.l.b16 %v1075
      %v1080 = vpack.c.b16 %v1079, %v1078
      %v1082 = vshrl.u32 %v1080, 16
      %v1084 = vshll.u32 %v1080, 16
      %v1086 = vrot.slane %v1084, 1
      %v1087 = vor.u32 %v1082, %v1086
      %v1089 = vsel %vm145, %v1087, 0
      %1091 = vmatprep.subr.bf16.mxu0 0
      %1092 = vmatpush1.bf16.msra.mxu0 %v350
      %1093 = vmatprep.subr.bf16.mxu0 0
      %1094 = vmatpush1.bf16.msra.mxu0 0
      %1095 = vmatprep.subr.bf16.mxu0 0
      %1096 = vmatpush1.bf16.msra.mxu0 0
      %1097 = vmatprep.subr.bf16.mxu0 0
      %1098 = vmatpush1.bf16.msra.mxu0 0
      %1099 = vmatprep.subr.bf16.mxu0 0
      %1100 = vmatpush1.bf16.msra.mxu0 0
      %1101 = vmatprep.subr.bf16.mxu0 0
      %1102 = vmatpush1.bf16.msra.mxu0 0
      %1103 = vmatprep.subr.bf16.mxu0 0
      %1104 = vmatpush1.bf16.msra.mxu0 0
      %1105 = vmatprep.subr.bf16.mxu0 0
      %1106 = vmatpush1.bf16.msra.mxu0 0
      %1107 = vmatprep.subr.bf16.mxu0 0
      %1108 = vmatpush1.bf16.msra.mxu0 0
      %1109 = vmatprep.subr.bf16.mxu0 0
      %1110 = vmatpush1.bf16.msra.mxu0 0
      %1111 = vmatprep.subr.bf16.mxu0 0
      %1112 = vmatpush1.bf16.msra.mxu0 0
      %1113 = vmatprep.subr.bf16.mxu0 0
      %1114 = vmatpush1.bf16.msra.mxu0 0
      %1115 = vmatprep.subr.bf16.mxu0 0
      %1116 = vmatpush1.bf16.msra.mxu0 0
      %1117 = vmatprep.subr.bf16.mxu0 0
      %1118 = vmatpush1.bf16.msra.mxu0 0
      %1119 = vmatprep.subr.bf16.mxu0 0
      %1120 = vmatpush1.bf16.msra.mxu0 0
      %1121 = vmatprep.subr.bf16.mxu0 0
      %1122 = vmatpush1.bf16.msra.mxu0 0
      %1123 = vmatprep.mubr.bf16.mxu0 0
      %1124 = vmatmul.mubr.bf16.gmra.mrb[0].mxu0 %v1089
      %v1125 = vpop.f32.mrb[0].mxu0
      %v1126 = vadd.f32 0.0, %v1125
      %v1127 = vpop.f32.mrb[0].mxu0
      %v1128 = vpop.f32.mrb[0].mxu0
      %v1129 = vpop.f32.mrb[0].mxu0
      %1130 = vdwg.mxu0
      %v1131 = vadd.f32 %v1073, %v1126
      %1132 = vmatprep.subr.bf16.mxu0 0
      %1133 = vmatpush1.bf16.msra.mxu0 %v180
      %1134 = vmatprep.subr.bf16.mxu0 0
      %1135 = vmatpush1.bf16.msra.mxu0 0
      %1136 = vmatprep.subr.bf16.mxu0 0
      %1137 = vmatpush1.bf16.msra.mxu0 0
      %1138 = vmatprep.subr.bf16.mxu0 0
      %1139 = vmatpush1.bf16.msra.mxu0 0
      %1140 = vmatprep.subr.bf16.mxu0 0
      %1141 = vmatpush1.bf16.msra.mxu0 0
      %1142 = vmatprep.subr.bf16.mxu0 0
      %1143 = vmatpush1.bf16.msra.mxu0 0
      %1144 = vmatprep.subr.bf16.mxu0 0
      %1145 = vmatpush1.bf16.msra.mxu0 0
      %1146 = vmatprep.subr.bf16.mxu0 0
      %1147 = vmatpush1.bf16.msra.mxu0 0
      %1148 = vmatprep.subr.bf16.mxu0 0
      %1149 = vmatpush1.bf16.msra.mxu0 0
      %1150 = vmatprep.subr.bf16.mxu0 0
      %1151 = vmatpush1.bf16.msra.mxu0 0
      %1152 = vmatprep.subr.bf16.mxu0 0
      %1153 = vmatpush1.bf16.msra.mxu0 0
      %1154 = vmatprep.subr.bf16.mxu0 0
      %1155 = vmatpush1.bf16.msra.mxu0 0
      %1156 = vmatprep.subr.bf16.mxu0 0
      %1157 = vmatpush1.bf16.msra.mxu0 0
      %1158 = vmatprep.subr.bf16.mxu0 0
      %1159 = vmatpush1.bf16.msra.mxu0 0
      %1160 = vmatprep.subr.bf16.mxu0 0
      %1161 = vmatpush1.bf16.msra.mxu0 0
      %1162 = vmatprep.subr.bf16.mxu0 0
      %1163 = vmatpush1.bf16.msra.mxu0 0
      %1164 = vmatprep.mubr.bf16.mxu0 0
      %1165 = vmatmul.mubr.bf16.gmra.mrb[0].mxu0 %v1089
      %v1166 = vpop.f32.mrb[0].mxu0
      %v1167 = vadd.f32 0.0, %v1166
      %v1168 = vpop.f32.mrb[0].mxu0
      %v1169 = vpop.f32.mrb[0].mxu0
      %v1170 = vpop.f32.mrb[0].mxu0
      %1171 = vdwg.mxu0
      %1172 = vmatprep.subr.bf16.mxu0 0
      %1173 = vmatpush1.bf16.msra.mxu0 %v229
      %1174 = vmatprep.subr.bf16.mxu0 0
      %1175 = vmatpush1.bf16.msra.mxu0 0
      %1176 = vmatprep.subr.bf16.mxu0 0
      %1177 = vmatpush1.bf16.msra.mxu0 0
      %1178 = vmatprep.subr.bf16.mxu0 0
      %1179 = vmatpush1.bf16.msra.mxu0 0
      %1180 = vmatprep.subr.bf16.mxu0 0
      %1181 = vmatpush1.bf16.msra.mxu0 0
      %1182 = vmatprep.subr.bf16.mxu0 0
      %1183 = vmatpush1.bf16.msra.mxu0 0
      %1184 = vmatprep.subr.bf16.mxu0 0
      %1185 = vmatpush1.bf16.msra.mxu0 0
      %1186 = vmatprep.subr.bf16.mxu0 0
      %1187 = vmatpush1.bf16.msra.mxu0 0
      %1188 = vmatprep.subr.bf16.mxu0 0
      %1189 = vmatpush1.bf16.msra.mxu0 0
      %1190 = vmatprep.subr.bf16.mxu0 0
      %1191 = vmatpush1.bf16.msra.mxu0 0
      %1192 = vmatprep.subr.bf16.mxu0 0
      %1193 = vmatpush1.bf16.msra.mxu0 0
      %1194 = vmatprep.subr.bf16.mxu0 0
      %1195 = vmatpush1.bf16.msra.mxu0 0
      %1196 = vmatprep.subr.bf16.mxu0 0
      %1197 = vmatpush1.bf16.msra.mxu0 0
      %1198 = vmatprep.subr.bf16.mxu0 0
      %1199 = vmatpush1.bf16.msra.mxu0 0
      %1200 = vmatprep.subr.bf16.mxu0 0
      %1201 = vmatpush1.bf16.msra.mxu0 0
      %1202 = vmatprep.subr.bf16.mxu0 0
      %1203 = vmatpush1.bf16.msra.mxu0 0
      %1204 = vmatprep.mubr.bf16.mxu0 0
      %1205 = vmatmul.mubr.bf16.gmra.mrb[0].mxu0 %v1031
      %v1206 = vpop.f32.mrb[0].mxu0
      %v1207 = vadd.f32 %v1167, %v1206
      %v1208 = vpop.f32.mrb[0].mxu0
      %v1209 = vpop.f32.mrb[0].mxu0
      %v1210 = vpop.f32.mrb[0].mxu0
      %1211 = vdwg.mxu0
      %s1212 = scalar_lea.vmem %s138, 48
      %v1213 = vld [vmem:[%s1212] sm:$0xf]
      %v1215 = vsel %vm145, %v1213, 0
      %1217 = vmatprep.subr.bf16.mxu0 0
      %1218 = vmatpush1.bf16.msra.mxu0 %v283
      %1219 = vmatprep.subr.bf16.mxu0 0
      %1220 = vmatpush1.bf16.msra.mxu0 0
      %1221 = vmatprep.subr.bf16.mxu0 0
      %1222 = vmatpush1.bf16.msra.mxu0 0
      %1223 = vmatprep.subr.bf16.mxu0 0
      %1224 = vmatpush1.bf16.msra.mxu0 0
      %1225 = vmatprep.subr.bf16.mxu0 0
      %1226 = vmatpush1.bf16.msra.mxu0 0
      %1227 = vmatprep.subr.bf16.mxu0 0
      %1228 = vmatpush1.bf16.msra.mxu0 0
      %1229 = vmatprep.subr.bf16.mxu0 0
      %1230 = vmatpush1.bf16.msra.mxu0 0
      %1231 = vmatprep.subr.bf16.mxu0 0
      %1232 = vmatpush1.bf16.msra.mxu0 0
      %1233 = vmatprep.subr.bf16.mxu0 0
      %1234 = vmatpush1.bf16.msra.mxu0 0
      %1235 = vmatprep.subr.bf16.mxu0 0
      %1236 = vmatpush1.bf16.msra.mxu0 0
      %1237 = vmatprep.subr.bf16.mxu0 0
      %1238 = vmatpush1.bf16.msra.mxu0 0
      %1239 = vmatprep.subr.bf16.mxu0 0
      %1240 = vmatpush1.bf16.msra.mxu0 0
      %1241 = vmatprep.subr.bf16.mxu0 0
      %1242 = vmatpush1.bf16.msra.mxu0 0
      %1243 = vmatprep.subr.bf16.mxu0 0
      %1244 = vmatpush1.bf16.msra.mxu0 0
      %1245 = vmatprep.subr.bf16.mxu0 0
      %1246 = vmatpush1.bf16.msra.mxu0 0
      %1247 = vmatprep.subr.bf16.mxu0 0
      %1248 = vmatpush1.bf16.msra.mxu0 0
      %1249 = vmatprep.mubr.bf16.mxu0 0
      %1250 = vmatmul.mubr.bf16.gmra.mrb[0].mxu0 %v1215
      %v1251 = vpop.f32.mrb[0].mxu0
      %v1252 = vadd.f32 0.0, %v1251
      %v1253 = vpop.f32.mrb[0].mxu0
      %v1254 = vpop.f32.mrb[0].mxu0
      %v1255 = vpop.f32.mrb[0].mxu0
      %1256 = vdwg.mxu0
      %v1257 = vadd.f32 %v1207, %v1252
      %v1258 = vld [vmem:[%s1212] sm:$0xf]
      %v1259 = vld [vmem:[%s1212 + $0x4] sm:$0x1]
      %v1262 = vunpack.c.l.b16 %v1258
      %v1263 = vunpack.c.l.b16 %v1259
      %v1264 = vpack.c.b16 %v1263, %v1262
      %v1266 = vshrl.u32 %v1264, 16
      %v1268 = vshll.u32 %v1264, 16
      %v1270 = vrot.slane %v1268, 1
      %v1271 = vor.u32 %v1266, %v1270
      %v1273 = vsel %vm145, %v1271, 0
      %1275 = vmatprep.subr.bf16.mxu0 0
      %1276 = vmatpush1.bf16.msra.mxu0 %v350
      %1277 = vmatprep.subr.bf16.mxu0 0
      %1278 = vmatpush1.bf16.msra.mxu0 0
      %1279 = vmatprep.subr.bf16.mxu0 0
      %1280 = vmatpush1.bf16.msra.mxu0 0
      %1281 = vmatprep.subr.bf16.mxu0 0
      %1282 = vmatpush1.bf16.msra.mxu0 0
      %1283 = vmatprep.subr.bf16.mxu0 0
      %1284 = vmatpush1.bf16.msra.mxu0 0
      %1285 = vmatprep.subr.bf16.mxu0 0
      %1286 = vmatpush1.bf16.msra.mxu0 0
      %1287 = vmatprep.subr.bf16.mxu0 0
      %1288 = vmatpush1.bf16.msra.mxu0 0
      %1289 = vmatprep.subr.bf16.mxu0 0
      %1290 = vmatpush1.bf16.msra.mxu0 0
      %1291 = vmatprep.subr.bf16.mxu0 0
      %1292 = vmatpush1.bf16.msra.mxu0 0
      %1293 = vmatprep.subr.bf16.mxu0 0
      %1294 = vmatpush1.bf16.msra.mxu0 0
      %1295 = vmatprep.subr.bf16.mxu0 0
      %1296 = vmatpush1.bf16.msra.mxu0 0
      %1297 = vmatprep.subr.bf16.mxu0 0
      %1298 = vmatpush1.bf16.msra.mxu0 0
      %1299 = vmatprep.subr.bf16.mxu0 0
      %1300 = vmatpush1.bf16.msra.mxu0 0
      %1301 = vmatprep.subr.bf16.mxu0 0
      %1302 = vmatpush1.bf16.msra.mxu0 0
      %1303 = vmatprep.subr.bf16.mxu0 0
      %1304 = vmatpush1.bf16.msra.mxu0 0
      %1305 = vmatprep.subr.bf16.mxu0 0
      %1306 = vmatpush1.bf16.msra.mxu0 0
      %1307 = vmatprep.mubr.bf16.mxu0 0
      %1308 = vmatmul.mubr.bf16.gmra.mrb[0].mxu0 %v1273
      %v1309 = vpop.f32.mrb[0].mxu0
      %v1310 = vadd.f32 0.0, %v1309
      %v1311 = vpop.f32.mrb[0].mxu0
      %v1312 = vpop.f32.mrb[0].mxu0
      %v1313 = vpop.f32.mrb[0].mxu0
      %1314 = vdwg.mxu0
      %v1315 = vadd.f32 %v1257, %v1310
      %1316 = vmatprep.subr.bf16.mxu0 0
      %1317 = vmatpush1.bf16.msra.mxu0 %v180
      %1318 = vmatprep.subr.bf16.mxu0 0
      %1319 = vmatpush1.bf16.msra.mxu0 0
      %1320 = vmatprep.subr.bf16.mxu0 0
      %1321 = vmatpush1.bf16.msra.mxu0 0
      %1322 = vmatprep.subr.bf16.mxu0 0
      %1323 = vmatpush1.bf16.msra.mxu0 0
      %1324 = vmatprep.subr.bf16.mxu0 0
      %1325 = vmatpush1.bf16.msra.mxu0 0
      %1326 = vmatprep.subr.bf16.mxu0 0
      %1327 = vmatpush1.bf16.msra.mxu0 0
      %1328 = vmatprep.subr.bf16.mxu0 0
      %1329 = vmatpush1.bf16.msra.mxu0 0
      %1330 = vmatprep.subr.bf16.mxu0 0
      %1331 = vmatpush1.bf16.msra.mxu0 0
      %1332 = vmatprep.subr.bf16.mxu0 0
      %1333 = vmatpush1.bf16.msra.mxu0 0
      %1334 = vmatprep.subr.bf16.mxu0 0
      %1335 = vmatpush1.bf16.msra.mxu0 0
      %1336 = vmatprep.subr.bf16.mxu0 0
      %1337 = vmatpush1.bf16.msra.mxu0 0
      %1338 = vmatprep.subr.bf16.mxu0 0
      %1339 = vmatpush1.bf16.msra.mxu0 0
      %1340 = vmatprep.subr.bf16.mxu0 0
      %1341 = vmatpush1.bf16.msra.mxu0 0
      %1342 = vmatprep.subr.bf16.mxu0 0
      %1343 = vmatpush1.bf16.msra.mxu0 0
      %1344 = vmatprep.subr.bf16.mxu0 0
      %1345 = vmatpush1.bf16.msra.mxu0 0
      %1346 = vmatprep.subr.bf16.mxu0 0
      %1347 = vmatpush1.bf16.msra.mxu0 0
      %1348 = vmatprep.mubr.bf16.mxu0 0
      %1349 = vmatmul.mubr.bf16.gmra.mrb[0].mxu0 %v1273
      %v1350 = vpop.f32.mrb[0].mxu0
      %v1351 = vadd.f32 0.0, %v1350
      %v1352 = vpop.f32.mrb[0].mxu0
      %v1353 = vpop.f32.mrb[0].mxu0
      %v1354 = vpop.f32.mrb[0].mxu0
      %1355 = vdwg.mxu0
      %1356 = vmatprep.subr.bf16.mxu0 0
      %1357 = vmatpush1.bf16.msra.mxu0 %v229
      %1358 = vmatprep.subr.bf16.mxu0 0
      %1359 = vmatpush1.bf16.msra.mxu0 0
      %1360 = vmatprep.subr.bf16.mxu0 0
      %1361 = vmatpush1.bf16.msra.mxu0 0
      %1362 = vmatprep.subr.bf16.mxu0 0
      %1363 = vmatpush1.bf16.msra.mxu0 0
      %1364 = vmatprep.subr.bf16.mxu0 0
      %1365 = vmatpush1.bf16.msra.mxu0 0
      %1366 = vmatprep.subr.bf16.mxu0 0
      %1367 = vmatpush1.bf16.msra.mxu0 0
      %1368 = vmatprep.subr.bf16.mxu0 0
      %1369 = vmatpush1.bf16.msra.mxu0 0
      %1370 = vmatprep.subr.bf16.mxu0 0
      %1371 = vmatpush1.bf16.msra.mxu0 0
      %1372 = vmatprep.subr.bf16.mxu0 0
      %1373 = vmatpush1.bf16.msra.mxu0 0
      %1374 = vmatprep.subr.bf16.mxu0 0
      %1375 = vmatpush1.bf16.msra.mxu0 0
      %1376 = vmatprep.subr.bf16.mxu0 0
      %1377 = vmatpush1.bf16.msra.mxu0 0
      %1378 = vmatprep.subr.bf16.mxu0 0
      %1379 = vmatpush1.bf16.msra.mxu0 0
      %1380 = vmatprep.subr.bf16.mxu0 0
      %1381 = vmatpush1.bf16.msra.mxu0 0
      %1382 = vmatprep.subr.bf16.mxu0 0
      %1383 = vmatpush1.bf16.msra.mxu0 0
      %1384 = vmatprep.subr.bf16.mxu0 0
      %1385 = vmatpush1.bf16.msra.mxu0 0
      %1386 = vmatprep.subr.bf16.mxu0 0
      %1387 = vmatpush1.bf16.msra.mxu0 0
      %1388 = vmatprep.mubr.bf16.mxu0 0
      %1389 = vmatmul.mubr.bf16.gmra.mrb[0].mxu0 %v1215
      %v1390 = vpop.f32.mrb[0].mxu0
      %v1391 = vadd.f32 %v1351, %v1390
      %v1392 = vpop.f32.mrb[0].mxu0
      %v1393 = vpop.f32.mrb[0].mxu0
      %v1394 = vpop.f32.mrb[0].mxu0
      %1395 = vdwg.mxu0
      %s1396 = scalar_lea.vmem %s138, 56
      %v1397 = vld [vmem:[%s1396] sm:$0xf]
      %v1399 = vsel %vm145, %v1397, 0
      %1401 = vmatprep.subr.bf16.mxu0 0
      %1402 = vmatpush1.bf16.msra.mxu0 %v283
      %1403 = vmatprep.subr.bf16.mxu0 0
      %1404 = vmatpush1.bf16.msra.mxu0 0
      %1405 = vmatprep.subr.bf16.mxu0 0
      %1406 = vmatpush1.bf16.msra.mxu0 0
      %1407 = vmatprep.subr.bf16.mxu0 0
      %1408 = vmatpush1.bf16.msra.mxu0 0
      %1409 = vmatprep.subr.bf16.mxu0 0
      %1410 = vmatpush1.bf16.msra.mxu0 0
      %1411 = vmatprep.subr.bf16.mxu0 0
      %1412 = vmatpush1.bf16.msra.mxu0 0
      %1413 = vmatprep.subr.bf16.mxu0 0
      %1414 = vmatpush1.bf16.msra.mxu0 0
      %1415 = vmatprep.subr.bf16.mxu0 0
      %1416 = vmatpush1.bf16.msra.mxu0 0
      %1417 = vmatprep.subr.bf16.mxu0 0
      %1418 = vmatpush1.bf16.msra.mxu0 0
      %1419 = vmatprep.subr.bf16.mxu0 0
      %1420 = vmatpush1.bf16.msra.mxu0 0
      %1421 = vmatprep.subr.bf16.mxu0 0
      %1422 = vmatpush1.bf16.msra.mxu0 0
      %1423 = vmatprep.subr.bf16.mxu0 0
      %1424 = vmatpush1.bf16.msra.mxu0 0
      %1425 = vmatprep.subr.bf16.mxu0 0
      %1426 = vmatpush1.bf16.msra.mxu0 0
      %1427 = vmatprep.subr.bf16.mxu0 0
      %1428 = vmatpush1.bf16.msra.mxu0 0
      %1429 = vmatprep.subr.bf16.mxu0 0
      %1430 = vmatpush1.bf16.msra.mxu0 0
      %1431 = vmatprep.subr.bf16.mxu0 0
      %1432 = vmatpush1.bf16.msra.mxu0 0
      %1433 = vmatprep.mubr.bf16.mxu0 0
      %1434 = vmatmul.mubr.bf16.gmra.mrb[0].mxu0 %v1399
      %v1435 = vpop.f32.mrb[0].mxu0
      %v1436 = vadd.f32 0.0, %v1435
      %v1437 = vpop.f32.mrb[0].mxu0
      %v1438 = vpop.f32.mrb[0].mxu0
      %v1439 = vpop.f32.mrb[0].mxu0
      %1440 = vdwg.mxu0
      %v1441 = vadd.f32 %v1391, %v1436
      %v1442 = vld [vmem:[%s1396] sm:$0xf]
      %v1443 = vld [vmem:[%s1396 + $0x4] sm:$0x1]
      %v1446 = vunpack.c.l.b16 %v1442
      %v1447 = vunpack.c.l.b16 %v1443
      %v1448 = vpack.c.b16 %v1447, %v1446
      %v1450 = vshrl.u32 %v1448, 16
      %v1452 = vshll.u32 %v1448, 16
      %v1454 = vrot.slane %v1452, 1
      %v1455 = vor.u32 %v1450, %v1454
      %v1457 = vsel %vm145, %v1455, 0
      %1459 = vmatprep.subr.bf16.mxu0 0
      %1460 = vmatpush1.bf16.msra.mxu0 %v350
      %1461 = vmatprep.subr.bf16.mxu0 0
      %1462 = vmatpush1.bf16.msra.mxu0 0
      %1463 = vmatprep.subr.bf16.mxu0 0
      %1464 = vmatpush1.bf16.msra.mxu0 0
      %1465 = vmatprep.subr.bf16.mxu0 0
      %1466 = vmatpush1.bf16.msra.mxu0 0
      %1467 = vmatprep.subr.bf16.mxu0 0
      %1468 = vmatpush1.bf16.msra.mxu0 0
      %1469 = vmatprep.subr.bf16.mxu0 0
      %1470 = vmatpush1.bf16.msra.mxu0 0
      %1471 = vmatprep.subr.bf16.mxu0 0
      %1472 = vmatpush1.bf16.msra.mxu0 0
      %1473 = vmatprep.subr.bf16.mxu0 0
      %1474 = vmatpush1.bf16.msra.mxu0 0
      %1475 = vmatprep.subr.bf16.mxu0 0
      %1476 = vmatpush1.bf16.msra.mxu0 0
      %1477 = vmatprep.subr.bf16.mxu0 0
      %1478 = vmatpush1.bf16.msra.mxu0 0
      %1479 = vmatprep.subr.bf16.mxu0 0
      %1480 = vmatpush1.bf16.msra.mxu0 0
      %1481 = vmatprep.subr.bf16.mxu0 0
      %1482 = vmatpush1.bf16.msra.mxu0 0
      %1483 = vmatprep.subr.bf16.mxu0 0
      %1484 = vmatpush1.bf16.msra.mxu0 0
      %1485 = vmatprep.subr.bf16.mxu0 0
      %1486 = vmatpush1.bf16.msra.mxu0 0
      %1487 = vmatprep.subr.bf16.mxu0 0
      %1488 = vmatpush1.bf16.msra.mxu0 0
      %1489 = vmatprep.subr.bf16.mxu0 0
      %1490 = vmatpush1.bf16.msra.mxu0 0
      %1491 = vmatprep.mubr.bf16.mxu0 0
      %1492 = vmatmul.mubr.bf16.gmra.mrb[0].mxu0 %v1457
      %v1493 = vpop.f32.mrb[0].mxu0
      %v1494 = vadd.f32 0.0, %v1493
      %v1495 = vpop.f32.mrb[0].mxu0
      %v1496 = vpop.f32.mrb[0].mxu0
      %v1497 = vpop.f32.mrb[0].mxu0
      %1498 = vdwg.mxu0
      %v1499 = vadd.f32 %v1441, %v1494
      %1500 = vmatprep.subr.bf16.mxu0 0
      %1501 = vmatpush1.bf16.msra.mxu0 %v180
      %1502 = vmatprep.subr.bf16.mxu0 0
      %1503 = vmatpush1.bf16.msra.mxu0 0
      %1504 = vmatprep.subr.bf16.mxu0 0
      %1505 = vmatpush1.bf16.msra.mxu0 0
      %1506 = vmatprep.subr.bf16.mxu0 0
      %1507 = vmatpush1.bf16.msra.mxu0 0
      %1508 = vmatprep.subr.bf16.mxu0 0
      %1509 = vmatpush1.bf16.msra.mxu0 0
      %1510 = vmatprep.subr.bf16.mxu0 0
      %1511 = vmatpush1.bf16.msra.mxu0 0
      %1512 = vmatprep.subr.bf16.mxu0 0
      %1513 = vmatpush1.bf16.msra.mxu0 0
      %1514 = vmatprep.subr.bf16.mxu0 0
      %1515 = vmatpush1.bf16.msra.mxu0 0
      %1516 = vmatprep.subr.bf16.mxu0 0
      %1517 = vmatpush1.bf16.msra.mxu0 0
      %1518 = vmatprep.subr.bf16.mxu0 0
      %1519 = vmatpush1.bf16.msra.mxu0 0
      %1520 = vmatprep.subr.bf16.mxu0 0
      %1521 = vmatpush1.bf16.msra.mxu0 0
      %1522 = vmatprep.subr.bf16.mxu0 0
      %1523 = vmatpush1.bf16.msra.mxu0 0
      %1524 = vmatprep.subr.bf16.mxu0 0
      %1525 = vmatpush1.bf16.msra.mxu0 0
      %1526 = vmatprep.subr.bf16.mxu0 0
      %1527 = vmatpush1.bf16.msra.mxu0 0
      %1528 = vmatprep.subr.bf16.mxu0 0
      %1529 = vmatpush1.bf16.msra.mxu0 0
      %1530 = vmatprep.subr.bf16.mxu0 0
      %1531 = vmatpush1.bf16.msra.mxu0 0
      %1532 = vmatprep.mubr.bf16.mxu0 0
      %1533 = vmatmul.mubr.bf16.gmra.mrb[0].mxu0 %v1457
      %v1534 = vpop.f32.mrb[0].mxu0
      %v1535 = vadd.f32 0.0, %v1534
      %v1536 = vpop.f32.mrb[0].mxu0
      %v1537 = vpop.f32.mrb[0].mxu0
      %v1538 = vpop.f32.mrb[0].mxu0
      %1539 = vdwg.mxu0
      %1540 = vmatprep.subr.bf16.mxu0 0
      %1541 = vmatpush1.bf16.msra.mxu0 %v229
      %1542 = vmatprep.subr.bf16.mxu0 0
      %1543 = vmatpush1.bf16.msra.mxu0 0
      %1544 = vmatprep.subr.bf16.mxu0 0
      %1545 = vmatpush1.bf16.msra.mxu0 0
      %1546 = vmatprep.subr.bf16.mxu0 0
      %1547 = vmatpush1.bf16.msra.mxu0 0
      %1548 = vmatprep.subr.bf16.mxu0 0
      %1549 = vmatpush1.bf16.msra.mxu0 0
      %1550 = vmatprep.subr.bf16.mxu0 0
      %1551 = vmatpush1.bf16.msra.mxu0 0
      %1552 = vmatprep.subr.bf16.mxu0 0
      %1553 = vmatpush1.bf16.msra.mxu0 0
      %1554 = vmatprep.subr.bf16.mxu0 0
      %1555 = vmatpush1.bf16.msra.mxu0 0
      %1556 = vmatprep.subr.bf16.mxu0 0
      %1557 = vmatpush1.bf16.msra.mxu0 0
      %1558 = vmatprep.subr.bf16.mxu0 0
      %1559 = vmatpush1.bf16.msra.mxu0 0
      %1560 = vmatprep.subr.bf16.mxu0 0
      %1561 = vmatpush1.bf16.msra.mxu0 0
      %1562 = vmatprep.subr.bf16.mxu0 0
      %1563 = vmatpush1.bf16.msra.mxu0 0
      %1564 = vmatprep.subr.bf16.mxu0 0
      %1565 = vmatpush1.bf16.msra.mxu0 0
      %1566 = vmatprep.subr.bf16.mxu0 0
      %1567 = vmatpush1.bf16.msra.mxu0 0
      %1568 = vmatprep.subr.bf16.mxu0 0
      %1569 = vmatpush1.bf16.msra.mxu0 0
      %1570 = vmatprep.subr.bf16.mxu0 0
      %1571 = vmatpush1.bf16.msra.mxu0 0
      %1572 = vmatprep.mubr.bf16.mxu0 0
      %1573 = vmatmul.mubr.bf16.gmra.mrb[0].mxu0 %v1399
      %v1574 = vpop.f32.mrb[0].mxu0
      %v1575 = vadd.f32 %v1535, %v1574
      %v1576 = vpop.f32.mrb[0].mxu0
      %v1577 = vpop.f32.mrb[0].mxu0
      %v1578 = vpop.f32.mrb[0].mxu0
      %1579 = vdwg.mxu0
      %s1580 = scalar_lea.vmem %s138, 64
      %v1581 = vld [vmem:[%s1580] sm:$0xf]
      %v1583 = vsel %vm145, %v1581, 0
      %1585 = vmatprep.subr.bf16.mxu0 0
      %1586 = vmatpush1.bf16.msra.mxu0 %v283
      %1587 = vmatprep.subr.bf16.mxu0 0
      %1588 = vmatpush1.bf16.msra.mxu0 0
      %1589 = vmatprep.subr.bf16.mxu0 0
      %1590 = vmatpush1.bf16.msra.mxu0 0
      %1591 = vmatprep.subr.bf16.mxu0 0
      %1592 = vmatpush1.bf16.msra.mxu0 0
      %1593 = vmatprep.subr.bf16.mxu0 0
      %1594 = vmatpush1.bf16.msra.mxu0 0
      %1595 = vmatprep.subr.bf16.mxu0 0
      %1596 = vmatpush1.bf16.msra.mxu0 0
      %1597 = vmatprep.subr.bf16.mxu0 0
      %1598 = vmatpush1.bf16.msra.mxu0 0
      %1599 = vmatprep.subr.bf16.mxu0 0
      %1600 = vmatpush1.bf16.msra.mxu0 0
      %1601 = vmatprep.subr.bf16.mxu0 0
      %1602 = vmatpush1.bf16.msra.mxu0 0
      %1603 = vmatprep.subr.bf16.mxu0 0
      %1604 = vmatpush1.bf16.msra.mxu0 0
      %1605 = vmatprep.subr.bf16.mxu0 0
      %1606 = vmatpush1.bf16.msra.mxu0 0
      %1607 = vmatprep.subr.bf16.mxu0 0
      %1608 = vmatpush1.bf16.msra.mxu0 0
      %1609 = vmatprep.subr.bf16.mxu0 0
      %1610 = vmatpush1.bf16.msra.mxu0 0
      %1611 = vmatprep.subr.bf16.mxu0 0
      %1612 = vmatpush1.bf16.msra.mxu0 0
      %1613 = vmatprep.subr.bf16.mxu0 0
      %1614 = vmatpush1.bf16.msra.mxu0 0
      %1615 = vmatprep.subr.bf16.mxu0 0
      %1616 = vmatpush1.bf16.msra.mxu0 0
      %1617 = vmatprep.mubr.bf16.mxu0 0
      %1618 = vmatmul.mubr.bf16.gmra.mrb[0].mxu0 %v1583
      %v1619 = vpop.f32.mrb[0].mxu0
      %v1620 = vadd.f32 0.0, %v1619
      %v1621 = vpop.f32.mrb[0].mxu0
      %v1622 = vpop.f32.mrb[0].mxu0
      %v1623 = vpop.f32.mrb[0].mxu0
      %1624 = vdwg.mxu0
      %v1625 = vadd.f32 %v1575, %v1620
      %v1626 = vld [vmem:[%s1580] sm:$0xf]
      %v1627 = vld [vmem:[%s1580 + $0x4] sm:$0x1]
      %v1630 = vunpack.c.l.b16 %v1626
      %v1631 = vunpack.c.l.b16 %v1627
      %v1632 = vpack.c.b16 %v1631, %v1630
      %v1634 = vshrl.u32 %v1632, 16
      %v1636 = vshll.u32 %v1632, 16
      %v1638 = vrot.slane %v1636, 1
      %v1639 = vor.u32 %v1634, %v1638
      %v1641 = vsel %vm145, %v1639, 0
      %1643 = vmatprep.subr.bf16.mxu0 0
      %1644 = vmatpush1.bf16.msra.mxu0 %v350
      %1645 = vmatprep.subr.bf16.mxu0 0
      %1646 = vmatpush1.bf16.msra.mxu0 0
      %1647 = vmatprep.subr.bf16.mxu0 0
      %1648 = vmatpush1.bf16.msra.mxu0 0
      %1649 = vmatprep.subr.bf16.mxu0 0
      %1650 = vmatpush1.bf16.msra.mxu0 0
      %1651 = vmatprep.subr.bf16.mxu0 0
      %1652 = vmatpush1.bf16.msra.mxu0 0
      %1653 = vmatprep.subr.bf16.mxu0 0
      %1654 = vmatpush1.bf16.msra.mxu0 0
      %1655 = vmatprep.subr.bf16.mxu0 0
      %1656 = vmatpush1.bf16.msra.mxu0 0
      %1657 = vmatprep.subr.bf16.mxu0 0
      %1658 = vmatpush1.bf16.msra.mxu0 0
      %1659 = vmatprep.subr.bf16.mxu0 0
      %1660 = vmatpush1.bf16.msra.mxu0 0
      %1661 = vmatprep.subr.bf16.mxu0 0
      %1662 = vmatpush1.bf16.msra.mxu0 0
      %1663 = vmatprep.subr.bf16.mxu0 0
      %1664 = vmatpush1.bf16.msra.mxu0 0
      %1665 = vmatprep.subr.bf16.mxu0 0
      %1666 = vmatpush1.bf16.msra.mxu0 0
      %1667 = vmatprep.subr.bf16.mxu0 0
      %1668 = vmatpush1.bf16.msra.mxu0 0
      %1669 = vmatprep.subr.bf16.mxu0 0
      %1670 = vmatpush1.bf16.msra.mxu0 0
      %1671 = vmatprep.subr.bf16.mxu0 0
      %1672 = vmatpush1.bf16.msra.mxu0 0
      %1673 = vmatprep.subr.bf16.mxu0 0
      %1674 = vmatpush1.bf16.msra.mxu0 0
      %1675 = vmatprep.mubr.bf16.mxu0 0
      %1676 = vmatmul.mubr.bf16.gmra.mrb[0].mxu0 %v1641
      %v1677 = vpop.f32.mrb[0].mxu0
      %v1678 = vadd.f32 0.0, %v1677
      %v1679 = vpop.f32.mrb[0].mxu0
      %v1680 = vpop.f32.mrb[0].mxu0
      %v1681 = vpop.f32.mrb[0].mxu0
      %1682 = vdwg.mxu0
      %v1683 = vadd.f32 %v1625, %v1678
      %vm1684 = vcmp.ge.f32.partialorder %v395, 0.0
      %v1685 = vmul.f32 %v395, 0.2
      %v1686 = vsel %vm1684, %v395, %v1685
      %vm1687 = vcmp.ge.f32.partialorder %v579, 0.0
      %v1688 = vmul.f32 %v579, 0.2
      %v1689 = vsel %vm1687, %v579, %v1688
      %vm1690 = vcmp.ge.f32.partialorder %v763, 0.0
      %v1691 = vmul.f32 %v763, 0.2
      %v1692 = vsel %vm1690, %v763, %v1691
      %vm1693 = vcmp.ge.f32.partialorder %v947, 0.0
      %v1694 = vmul.f32 %v947, 0.2
      %v1695 = vsel %vm1693, %v947, %v1694
      %vm1696 = vcmp.ge.f32.partialorder %v1131, 0.0
      %v1697 = vmul.f32 %v1131, 0.2
      %v1698 = vsel %vm1696, %v1131, %v1697
      %vm1699 = vcmp.ge.f32.partialorder %v1315, 0.0
      %v1700 = vmul.f32 %v1315, 0.2
      %v1701 = vsel %vm1699, %v1315, %v1700
      %vm1702 = vcmp.ge.f32.partialorder %v1499, 0.0
      %v1703 = vmul.f32 %v1499, 0.2
      %v1704 = vsel %vm1702, %v1499, %v1703
      %vm1705 = vcmp.ge.f32.partialorder %v1683, 0.0
      %v1706 = vmul.f32 %v1683, 0.2
      %v1707 = vsel %vm1705, %v1683, %v1706
      %1709 = vrot.lane.b32.xlu0 %v1686, 8
      %v1710 = vpop.permute.xlu0 %1709
      %vm1712 = vcmask 130112
      %1713 = vst.msk [vmem:[#allocation2 + $0x1] sm:$0xff] %vm1712, %v1710
      %s1714 = scalar_lea.vmem [#allocation2], 16
      %vm1715 = vcmask 64512
      %1716 = vst.msk [vmem:[%s1714 + $0x1] sm:$0xff] %vm1715, %v1689
      %1718 = vrot.lane.b32.xlu0 %v1692, 8
      %v1719 = vpop.permute.xlu0 %1718
      %1721 = vst.msk [vmem:[%s1714 + $0x1] sm:$0xff] %vm1712, %v1719
      %s1722 = scalar_lea.vmem [#allocation2], 32
      %1723 = vst.msk [vmem:[%s1722 + $0x1] sm:$0xff] %vm1715, %v1695
      %1725 = vrot.lane.b32.xlu0 %v1698, 8
      %v1726 = vpop.permute.xlu0 %1725
      %1728 = vst.msk [vmem:[%s1722 + $0x1] sm:$0xff] %vm1712, %v1726
      %s1729 = scalar_lea.vmem [#allocation2], 48
      %1730 = vst.msk [vmem:[%s1729 + $0x1] sm:$0xff] %vm1715, %v1701
      %1732 = vrot.lane.b32.xlu0 %v1704, 8
      %v1733 = vpop.permute.xlu0 %1732
      %1735 = vst.msk [vmem:[%s1729 + $0x1] sm:$0xff] %vm1712, %v1733
      %s1736 = scalar_lea.vmem [#allocation2], 64
      %1737 = vst.msk [vmem:[%s1736 + $0x1] sm:$0xff] %vm1715, %v1707
      %v1738 = vld [vmem:[#allocation2] sm:$0xff]
      %v1739 = vld [vmem:[#allocation2 + $0x8] sm:$0x3]
      %v1740 = vld [vmem:[#allocation2 + $0x10] sm:$0xff]
      %v1741 = vld [vmem:[#allocation2 + $0x18] sm:$0x3]
      %v1742 = vld [vmem:[#allocation2 + $0x20] sm:$0xff]
      %v1743 = vld [vmem:[#allocation2 + $0x28] sm:$0x3]
      %v1744 = vld [vmem:[#allocation2 + $0x30] sm:$0xff]
      %v1745 = vld [vmem:[#allocation2 + $0x38] sm:$0x3]
      %v1746 = vld [vmem:[#allocation2 + $0x40] sm:$0xff]
      %v1747 = vld [vmem:[#allocation2 + $0x48] sm:$0x3]
      %v1748 = vpack.c.bf16 %v1739, %v1738
      %v1749 = vpack.c.bf16 %v1741, %v1740
      %v1750 = vpack.c.bf16 %v1743, %v1742
      %v1751 = vpack.c.bf16 %v1745, %v1744
      %v1752 = vpack.c.bf16 %v1747, %v1746
      %v1758 = vunpack.c.l.b16 %v1748
      %v1759 = vunpack.c.h.b16 %v1748
      %v1760 = vunpack.c.l.b16 %v1749
      %v1761 = vunpack.c.h.b16 %v1749
      %v1762 = vunpack.c.l.b16 %v1750
      %v1763 = vunpack.c.h.b16 %v1750
      %v1764 = vunpack.c.l.b16 %v1751
      %v1765 = vunpack.c.h.b16 %v1751
      %v1766 = vunpack.c.l.b16 %v1752
      %v1767 = vunpack.c.h.b16 %v1752
      %v1768 = vpack.c.b16 %v1758, %v1758
      %v1769 = vpack.c.b16 %v1759, %v1759
      %v1770 = vpack.c.b16 %v1760, %v1760
      %v1771 = vpack.c.b16 %v1761, %v1761
      %v1772 = vpack.c.b16 %v1762, %v1762
      %v1773 = vpack.c.b16 %v1763, %v1763
      %v1774 = vpack.c.b16 %v1764, %v1764
      %v1775 = vpack.c.b16 %v1765, %v1765
      %v1776 = vpack.c.b16 %v1766, %v1766
      %v1777 = vpack.c.b16 %v1767, %v1767
      %vm1788 = vcmask 125952
      %1789 = vst.msk [vmem:[%s143] sm:$0xf] %vm1788, %v1768
      %vm1790 = vcmask 122880
      %1791 = vst.msk [vmem:[%s143 + $0x4] sm:$0x1] %vm1790, %v1769
      %1792 = vst.msk [vmem:[%s143 + $0x8] sm:$0xf] %vm1788, %v1770
      %1793 = vst.msk [vmem:[%s143 + $0xc] sm:$0x1] %vm1790, %v1771
      %1794 = vst.msk [vmem:[%s143 + $0x10] sm:$0xf] %vm1788, %v1772
      %1795 = vst.msk [vmem:[%s143 + $0x14] sm:$0x1] %vm1790, %v1773
      %1796 = vst.msk [vmem:[%s143 + $0x18] sm:$0xf] %vm1788, %v1774
      %1797 = vst.msk [vmem:[%s143 + $0x1c] sm:$0x1] %vm1790, %v1775
      %1798 = vst.msk [vmem:[%s143 + $0x20] sm:$0xf] %vm1788, %v1776
      %1799 = vst.msk [vmem:[%s143 + $0x24] sm:$0x1] %vm1790, %v1777
      %p1800 = scmp.lt.s32.totalorder %s13, 1
      %s1801 = scalar_select %p1800, %s13, 1
      %s1802 = smul.addr %s1801, 10
      %s1803 = smul.addr %s1802, 4
      %s1804 = scalar_lea.vmem %s2, %s1803
      // Predicated region
      $region29: #{dcgan_d_forward.3} parent=27 // pred_check
        %p1805 = pneg %p78
      $region30: #{dcgan_d_forward.3} parent=27 // pred_check_branch
        %1807 = sbr.rel (%p1805) target = $region32
      $region31: #{dcgan_d_forward.3} parent=27 // pred_region
        _
      $region32: #{dcgan_d_forward.3} parent=27 // pred_fallthru
        _
    $region28: #{dcgan_d_forward.3} parent=5 // pred_fallthru
      _
    %p1808 = scmp.le.s32.totalorder 2, %s8
    // Predicated region
    $region33: #{dcgan_d_forward.3} parent=5 // pred_check
      %p1809 = pneg %p1808
    $region34: #{dcgan_d_forward.3} parent=5 // pred_check_branch
      %1811 = sbr.rel (%p1809) target = $region36
    $region35: #{dcgan_d_forward.3} parent=5 // pred_region
      %s1812 = ssub.s32 %s8, 2
      // Predicated region
      $region37: #{dcgan_d_forward.3} parent=35 // pred_check
        %p1813 = pneg %p84
      $region38: #{dcgan_d_forward.3} parent=35 // pred_check_branch
        %1815 = sbr.rel (%p1813) target = $region40
      $region39: #{dcgan_d_forward.3} parent=35 // pred_region
        %p1816 = scmp.lt.s32.totalorder %s14, 1
        %s1817 = scalar_select %p1816, %s14, 1
        %s1818 = smul.addr %s1817, 10
        %s1819 = smul.addr %s1818, 4
        %s1820 = scalar_lea.vmem %s2, %s1819
      $region40: #{dcgan_d_forward.3} parent=35 // pred_fallthru
        _
    $region36: #{dcgan_d_forward.3} parent=5 // pred_fallthru
      _
  $region6: #{dcgan_d_forward.3} parent=0 // loop_footer
    %s12 = sadd.s32 1, %s8
  $region7: #{dcgan_d_forward.3} parent=0 // loop_footer_branch
    %7 = sbr.rel target = $region3
  $region8: #{dcgan_d_forward.3} parent=0 // loop_exit
    _

</llo_original>
